<compile_context>
chip_gen: v7x
topology: tpu7x:2x2x1
jax: 0.10.0
libtpu: 0.0.40
codegen_flags: <defaults>
</compile_context>

<pallas_src>
import functools

import jax
import jax.numpy as jnp
import numpy as np
from jax import lax
from jax.experimental import pallas as pl
from jax.experimental.pallas import tpu as pltpu


def _pcen_kernel(x_ref, alpha_ref, delta_ref, r_ref, o_ref,
                 xt_ref, m_ref, carry_ref, *, s, eps, t_tile):
    """One (batch*channel) slice x one time tile.

    x_ref     : (F, T_TILE)  input tile in the array's native (B*C, F, T) layout
    alpha_ref, delta_ref, r_ref : (1, F)  log-domain parameters
    o_ref     : (T_TILE, F)  output tile in (B*C, T, F) layout (== PyTorch permute)
    xt_ref    : (T_TILE, F)  VMEM scratch — transposed input tile
    m_ref     : (T_TILE, F)  VMEM scratch — smoother values for this tile
    carry_ref : (1, F)       VMEM scratch — IIR carry across time tiles
    """
    t_idx = pl.program_id(1)

    # ---- Phase 0: layout transpose (F, T_TILE) -> (T_TILE, F) on the idle XLU.
    xt_ref[...] = jnp.transpose(x_ref[...], (1, 0))

    # First time tile: seed the carry with frame 0 so that applying the uniform
    # recurrence at step 0 reproduces m[0] = x[0] exactly
    # ((1-s)*x0 + s*x0 == x0), i.e. no special-cased first step is needed.
    @pl.when(t_idx == 0)
    def _():
        carry_ref[...] = xt_ref[0:1, :]

    # ---- Phase 1: sequential IIR only (cheap), fully unrolled over the tile.
    one_minus_s = jnp.float32(1.0 - s)
    s_f = jnp.float32(s)
    m = carry_ref[...]                                   # (1, F)
    for t in range(t_tile):                              # static -> unrolled
        m = one_minus_s * m + s_f * xt_ref[t:t + 1, :]
        m_ref[t:t + 1, :] = m
    carry_ref[...] = m                                   # carry to next time tile

    # ---- Phase 2: transcendental-heavy emit, vectorized over the whole slab.
    alpha = jnp.exp(alpha_ref[...])                      # (1, F)
    delta = jnp.exp(delta_ref[...])                      # (1, F)
    r = jnp.exp(r_ref[...])                              # (1, F)
    delta_r = delta ** r

    xt = xt_ref[...]                                     # (T_TILE, F)
    m_all = m_ref[...]                                   # (T_TILE, F)
    # log(eps) + log1p(m/eps) == log(m + eps)
    smooth = jnp.exp(-alpha * jnp.log(m_all + jnp.float32(eps)))
    o_ref[...] = ((xt * smooth + delta) ** r - delta_r).astype(o_ref.dtype)


def pcen_forward(x, alpha_log, delta_log, r_log, *,
                 t_val=2.0 ** 8, eps=1e-5, t_tile=128):
    """x: (B, C, F, T) float32 -> (B, C, T, F) float32 (matches PyTorch PCEN)."""
    B, C, F, T = x.shape
    s = float((np.sqrt(1.0 + 4.0 * t_val ** 2) - 1.0) / (2.0 * t_val ** 2))

    t_tile = int(min(t_tile, T))
    num_t = pl.cdiv(T, t_tile)
    # Note: if T is not a multiple of t_tile, the padded trailing frames of the
    # last tile only influence padded (masked-on-write) output rows, since the
    # IIR is causal and the next grid step re-seeds the carry.

    # Free reshape — no HBM transpose pass; the layout change happens in-kernel.
    x_bc = x.reshape(B * C, F, T)
    a2 = alpha_log.reshape(1, F)
    d2 = delta_log.reshape(1, F)
    r2 = r_log.reshape(1, F)

    kernel = functools.partial(_pcen_kernel, s=s, eps=float(eps), t_tile=t_tile)

    out = pl.pallas_call(
        kernel,
        out_shape=jax.ShapeDtypeStruct((B * C, T, F), x.dtype),
        grid_spec=pltpu.PrefetchScalarGridSpec(
            num_scalar_prefetch=0,
            grid=(B * C, num_t),
            in_specs=[
                pl.BlockSpec((None, F, t_tile), lambda i, t: (i, 0, t)),  # x tile
                pl.BlockSpec((1, F), lambda i, t: (0, 0)),                # log alpha
                pl.BlockSpec((1, F), lambda i, t: (0, 0)),                # log delta
                pl.BlockSpec((1, F), lambda i, t: (0, 0)),                # log r
            ],
            out_specs=pl.BlockSpec((None, t_tile, F), lambda i, t: (i, t, 0)),
            scratch_shapes=[
                pltpu.VMEM((t_tile, F), jnp.float32),   # transposed input tile
                pltpu.VMEM((t_tile, F), jnp.float32),   # smoother tile
                pltpu.VMEM((1, F), jnp.float32),        # IIR carry across T tiles
            ],
        ),
        compiler_params=pltpu.CompilerParams(
            dimension_semantics=("parallel", "arbitrary"),
        ),
    )(x_bc, a2, d2, r2)

    return out.reshape(B, C, T, F)


def pcen_reference(x, alpha_log, delta_log, r_log, *, t_val=2.0 ** 8, eps=1e-5):
    """Pure-JAX reference mirroring the PyTorch forward pass exactly."""
    s = (np.sqrt(1.0 + 4.0 * t_val ** 2) - 1.0) / (2.0 * t_val ** 2)
    alpha = jnp.exp(alpha_log)[:, None]        # (F, 1)
    delta = jnp.exp(delta_log)[:, None]
    r = jnp.exp(r_log)[:, None]

    x_t = jnp.moveaxis(x, -1, 0)               # (T, B, C, F)

    def step(m, xt):
        m = (1 - s) * m + s * xt
        return m, m

    _, ms = lax.scan(step, x_t[0], x_t[1:])
    smoother = jnp.concatenate([x_t[0:1], ms], axis=0)
    smoother = jnp.moveaxis(smoother, 0, -1)   # (B, C, F, T)

    smooth = jnp.exp(-alpha * (jnp.log(eps) + jnp.log1p(smoother / eps)))
    pcen = (x * smooth + delta) ** r - delta ** r
    return jnp.transpose(pcen, (0, 1, 3, 2))   # (B, C, T, F)


if __name__ == "__main__":
    key = jax.random.PRNGKey(0)
    B, C, F, T = 2, 3, 128, 256                # n_bands=128 (module default)
    # PCEN operates on non-negative energies (mel spectrogram magnitudes).
    x = jax.random.uniform(key, (B, C, F, T), dtype=jnp.float32, minval=0.0, maxval=4.0)

    # Deterministic parameter init, exactly as in PCEN.__init__ (log-domain fills).
    alpha_log = jnp.full((F,), float(np.log(0.8)), dtype=jnp.float32)
    delta_log = jnp.full((F,), float(np.log(10.0)), dtype=jnp.float32)
    r_log = jnp.full((F,), float(np.log(0.25)), dtype=jnp.float32)

    out = pcen_forward(x, alpha_log, delta_log, r_log)
    out = jax.block_until_ready(out)

    ref = pcen_reference(x, alpha_log, delta_log, r_log)
    np.testing.assert_allclose(np.asarray(out), np.asarray(ref), rtol=1e-5, atol=1e-5)
    assert out.shape == (B, C, T, F)

    print("KERNEL_OK")
</pallas_src>

<mosaic_0001>
module attributes {stable_mosaic.version = 11 : i64} {
  func.func @_pcen_kernel(%arg0: i32, %arg1: i32, %arg2: memref<1x128x128xf32, #tpu.memory_space<vmem>>, %arg3: memref<1x128xf32, #tpu.memory_space<vmem>>, %arg4: memref<1x128xf32, #tpu.memory_space<vmem>>, %arg5: memref<1x128xf32, #tpu.memory_space<vmem>>, %arg6: memref<1x128x128xf32, #tpu.memory_space<vmem>>, %arg7: memref<128x128xf32, #tpu.memory_space<vmem>>, %arg8: memref<128x128xf32, #tpu.memory_space<vmem>>, %arg9: memref<1x128xf32, #tpu.memory_space<vmem>>) attributes {dimension_semantics = [#tpu.dimension_semantics<parallel>, #tpu.dimension_semantics<arbitrary>], iteration_bounds = array<i64: 6, 2>, scalar_prefetch = 0 : i64, scratch_operands = 3 : i64, tpu.core_type = #tpu.core_type<tc>, window_params = [{transform_indices = @transform_0, window_bounds = array<i64: 1, 128, 128>}, {pipeline_mode = #tpu.pipeline_mode<synchronous>, transform_indices = @transform_1, window_bounds = array<i64: 1, 128>}, {pipeline_mode = #tpu.pipeline_mode<synchronous>, transform_indices = @transform_2, window_bounds = array<i64: 1, 128>}, {pipeline_mode = #tpu.pipeline_mode<synchronous>, transform_indices = @transform_3, window_bounds = array<i64: 1, 128>}, {transform_indices = @transform_4, window_bounds = array<i64: 1, 128, 128>}]} {
    %c0 = arith.constant 0 : index
    %c0_0 = arith.constant 0 : index
    %c0_1 = arith.constant 0 : index
    %0 = vector.load %arg2[%c0, %c0_0, %c0_1] : memref<1x128x128xf32, #tpu.memory_space<vmem>>, vector<1x128x128xf32>
    %1 = vector.shape_cast %0 : vector<1x128x128xf32> to vector<128x128xf32>
    %2 = tpu.transpose %1, [1, 0] : vector<128x128xf32> -> vector<128x128xf32>
    %c0_2 = arith.constant 0 : index
    %c0_3 = arith.constant 0 : index
    %3 = vector.load %arg7[%c0_2, %c0_3] : memref<128x128xf32, #tpu.memory_space<vmem>>, vector<128x128xf32>
    tpu.vector_store %arg7[%c0_2, %c0_3], %2 {strides = array<i32>} : memref<128x128xf32, #tpu.memory_space<vmem>>, vector<128x128xf32>,
    %c0_i32 = arith.constant 0 : i32
    %4 = arith.cmpi eq, %arg1, %c0_i32 : i32
    %5 = arith.extui %4 : i1 to i32
    %c0_i32_4 = arith.constant 0 : i32
    %6 = arith.cmpi ne, %5, %c0_i32_4 : i32
    scf.if %6 {
      %c0_664 = arith.constant 0 : index
      %c0_665 = arith.constant 0 : index
      %932 = vector.load %arg7[%c0_664, %c0_665] : memref<128x128xf32, #tpu.memory_space<vmem>>, vector<1x128xf32>
      %c0_666 = arith.constant 0 : index
      %c0_667 = arith.constant 0 : index
      %933 = vector.load %arg9[%c0_666, %c0_667] : memref<1x128xf32, #tpu.memory_space<vmem>>, vector<1x128xf32>
      tpu.vector_store %arg9[%c0_666, %c0_667], %932 {strides = array<i32>} : memref<1x128xf32, #tpu.memory_space<vmem>>, vector<1x128xf32>,
    } else {
    }
    %c0_5 = arith.constant 0 : index
    %c0_6 = arith.constant 0 : index
    %7 = vector.load %arg9[%c0_5, %c0_6] : memref<1x128xf32, #tpu.memory_space<vmem>>, vector<1x128xf32>
    %cst = arith.constant 0.996101379 : f32
    %8 = vector.broadcast %cst : f32 to vector<1x128xf32>
    %9 = arith.mulf %8, %7 : vector<1x128xf32>
    %c0_7 = arith.constant 0 : index
    %c0_8 = arith.constant 0 : index
    %10 = vector.load %arg7[%c0_7, %c0_8] : memref<128x128xf32, #tpu.memory_space<vmem>>, vector<1x128xf32>
    %cst_9 = arith.constant 0.00389862806 : f32
    %11 = vector.broadcast %cst_9 : f32 to vector<1x128xf32>
    %12 = arith.mulf %11, %10 : vector<1x128xf32>
    %13 = arith.addf %9, %12 : vector<1x128xf32>
    %c0_10 = arith.constant 0 : index
    %c0_11 = arith.constant 0 : index
    %14 = vector.load %arg8[%c0_10, %c0_11] : memref<128x128xf32, #tpu.memory_space<vmem>>, vector<1x128xf32>
    tpu.vector_store %arg8[%c0_10, %c0_11], %13 {strides = array<i32>} : memref<128x128xf32, #tpu.memory_space<vmem>>, vector<1x128xf32>,
    %cst_12 = arith.constant 0.996101379 : f32
    %15 = vector.broadcast %cst_12 : f32 to vector<1x128xf32>
    %16 = arith.mulf %15, %13 : vector<1x128xf32>
    %c1 = arith.constant 1 : index
    %c0_13 = arith.constant 0 : index
    %17 = vector.load %arg7[%c1, %c0_13] : memref<128x128xf32, #tpu.memory_space<vmem>>, vector<1x128xf32>
    %cst_14 = arith.constant 0.00389862806 : f32
    %18 = vector.broadcast %cst_14 : f32 to vector<1x128xf32>
    %19 = arith.mulf %18, %17 : vector<1x128xf32>
    %20 = arith.addf %16, %19 : vector<1x128xf32>
    %c1_15 = arith.constant 1 : index
    %c0_16 = arith.constant 0 : index
    %21 = vector.load %arg8[%c1_15, %c0_16] : memref<128x128xf32, #tpu.memory_space<vmem>>, vector<1x128xf32>
    tpu.vector_store %arg8[%c1_15, %c0_16], %20 {strides = array<i32>} : memref<128x128xf32, #tpu.memory_space<vmem>>, vector<1x128xf32>,
    %cst_17 = arith.constant 0.996101379 : f32
    %22 = vector.broadcast %cst_17 : f32 to vector<1x128xf32>
    %23 = arith.mulf %22, %20 : vector<1x128xf32>
    %c2 = arith.constant 2 : index
    %c0_18 = arith.constant 0 : index
    %24 = vector.load %arg7[%c2, %c0_18] : memref<128x128xf32, #tpu.memory_space<vmem>>, vector<1x128xf32>
    %cst_19 = arith.constant 0.00389862806 : f32
    %25 = vector.broadcast %cst_19 : f32 to vector<1x128xf32>
    %26 = arith.mulf %25, %24 : vector<1x128xf32>
    %27 = arith.addf %23, %26 : vector<1x128xf32>
    %c2_20 = arith.constant 2 : index
    %c0_21 = arith.constant 0 : index
    %28 = vector.load %arg8[%c2_20, %c0_21] : memref<128x128xf32, #tpu.memory_space<vmem>>, vector<1x128xf32>
    tpu.vector_store %arg8[%c2_20, %c0_21], %27 {strides = array<i32>} : memref<128x128xf32, #tpu.memory_space<vmem>>, vector<1x128xf32>,
    %cst_22 = arith.constant 0.996101379 : f32
    %29 = vector.broadcast %cst_22 : f32 to vector<1x128xf32>
    %30 = arith.mulf %29, %27 : vector<1x128xf32>
    %c3 = arith.constant 3 : index
    %c0_23 = arith.constant 0 : index
    %31 = vector.load %arg7[%c3, %c0_23] : memref<128x128xf32, #tpu.memory_space<vmem>>, vector<1x128xf32>
    %cst_24 = arith.constant 0.00389862806 : f32
    %32 = vector.broadcast %cst_24 : f32 to vector<1x128xf32>
    %33 = arith.mulf %32, %31 : vector<1x128xf32>
    %34 = arith.addf %30, %33 : vector<1x128xf32>
    %c3_25 = arith.constant 3 : index
    %c0_26 = arith.constant 0 : index
    %35 = vector.load %arg8[%c3_25, %c0_26] : memref<128x128xf32, #tpu.memory_space<vmem>>, vector<1x128xf32>
    tpu.vector_store %arg8[%c3_25, %c0_26], %34 {strides = array<i32>} : memref<128x128xf32, #tpu.memory_space<vmem>>, vector<1x128xf32>,
    %cst_27 = arith.constant 0.996101379 : f32
    %36 = vector.broadcast %cst_27 : f32 to vector<1x128xf32>
    %37 = arith.mulf %36, %34 : vector<1x128xf32>
    %c4 = arith.constant 4 : index
    %c0_28 = arith.constant 0 : index
    %38 = vector.load %arg7[%c4, %c0_28] : memref<128x128xf32, #tpu.memory_space<vmem>>, vector<1x128xf32>
    %cst_29 = arith.constant 0.00389862806 : f32
    %39 = vector.broadcast %cst_29 : f32 to vector<1x128xf32>
    %40 = arith.mulf %39, %38 : vector<1x128xf32>
    %41 = arith.addf %37, %40 : vector<1x128xf32>
    %c4_30 = arith.constant 4 : index
    %c0_31 = arith.constant 0 : index
    %42 = vector.load %arg8[%c4_30, %c0_31] : memref<128x128xf32, #tpu.memory_space<vmem>>, vector<1x128xf32>
    tpu.vector_store %arg8[%c4_30, %c0_31], %41 {strides = array<i32>} : memref<128x128xf32, #tpu.memory_space<vmem>>, vector<1x128xf32>,
    %cst_32 = arith.constant 0.996101379 : f32
    %43 = vector.broadcast %cst_32 : f32 to vector<1x128xf32>
    %44 = arith.mulf %43, %41 : vector<1x128xf32>
    %c5 = arith.constant 5 : index
    %c0_33 = arith.constant 0 : index
    %45 = vector.load %arg7[%c5, %c0_33] : memref<128x128xf32, #tpu.memory_space<vmem>>, vector<1x128xf32>
    %cst_34 = arith.constant 0.00389862806 : f32
    %46 = vector.broadcast %cst_34 : f32 to vector<1x128xf32>
    %47 = arith.mulf %46, %45 : vector<1x128xf32>
    %48 = arith.addf %44, %47 : vector<1x128xf32>
    %c5_35 = arith.constant 5 : index
    %c0_36 = arith.constant 0 : index
    %49 = vector.load %arg8[%c5_35, %c0_36] : memref<128x128xf32, #tpu.memory_space<vmem>>, vector<1x128xf32>
    tpu.vector_store %arg8[%c5_35, %c0_36], %48 {strides = array<i32>} : memref<128x128xf32, #tpu.memory_space<vmem>>, vector<1x128xf32>,
    %cst_37 = arith.constant 0.996101379 : f32
    %50 = vector.broadcast %cst_37 : f32 to vector<1x128xf32>
    %51 = arith.mulf %50, %48 : vector<1x128xf32>
    %c6 = arith.constant 6 : index
    %c0_38 = arith.constant 0 : index
    %52 = vector.load %arg7[%c6, %c0_38] : memref<128x128xf32, #tpu.memory_space<vmem>>, vector<1x128xf32>
    %cst_39 = arith.constant 0.00389862806 : f32
    %53 = vector.broadcast %cst_39 : f32 to vector<1x128xf32>
    %54 = arith.mulf %53, %52 : vector<1x128xf32>
    %55 = arith.addf %51, %54 : vector<1x128xf32>
    %c6_40 = arith.constant 6 : index
    %c0_41 = arith.constant 0 : index
    %56 = vector.load %arg8[%c6_40, %c0_41] : memref<128x128xf32, #tpu.memory_space<vmem>>, vector<1x128xf32>
    tpu.vector_store %arg8[%c6_40, %c0_41], %55 {strides = array<i32>} : memref<128x128xf32, #tpu.memory_space<vmem>>, vector<1x128xf32>,
    %cst_42 = arith.constant 0.996101379 : f32
    %57 = vector.broadcast %cst_42 : f32 to vector<1x128xf32>
    %58 = arith.mulf %57, %55 : vector<1x128xf32>
    %c7 = arith.constant 7 : index
    %c0_43 = arith.constant 0 : index
    %59 = vector.load %arg7[%c7, %c0_43] : memref<128x128xf32, #tpu.memory_space<vmem>>, vector<1x128xf32>
    %cst_44 = arith.constant 0.00389862806 : f32
    %60 = vector.broadcast %cst_44 : f32 to vector<1x128xf32>
    %61 = arith.mulf %60, %59 : vector<1x128xf32>
    %62 = arith.addf %58, %61 : vector<1x128xf32>
    %c7_45 = arith.constant 7 : index
    %c0_46 = arith.constant 0 : index
    %63 = vector.load %arg8[%c7_45, %c0_46] : memref<128x128xf32, #tpu.memory_space<vmem>>, vector<1x128xf32>
    tpu.vector_store %arg8[%c7_45, %c0_46], %62 {strides = array<i32>} : memref<128x128xf32, #tpu.memory_space<vmem>>, vector<1x128xf32>,
    %cst_47 = arith.constant 0.996101379 : f32
    %64 = vector.broadcast %cst_47 : f32 to vector<1x128xf32>
    %65 = arith.mulf %64, %62 : vector<1x128xf32>
    %c8 = arith.constant 8 : index
    %c0_48 = arith.constant 0 : index
    %66 = vector.load %arg7[%c8, %c0_48] : memref<128x128xf32, #tpu.memory_space<vmem>>, vector<1x128xf32>
    %cst_49 = arith.constant 0.00389862806 : f32
    %67 = vector.broadcast %cst_49 : f32 to vector<1x128xf32>
    %68 = arith.mulf %67, %66 : vector<1x128xf32>
    %69 = arith.addf %65, %68 : vector<1x128xf32>
    %c8_50 = arith.constant 8 : index
    %c0_51 = arith.constant 0 : index
    %70 = vector.load %arg8[%c8_50, %c0_51] : memref<128x128xf32, #tpu.memory_space<vmem>>, vector<1x128xf32>
    tpu.vector_store %arg8[%c8_50, %c0_51], %69 {strides = array<i32>} : memref<128x128xf32, #tpu.memory_space<vmem>>, vector<1x128xf32>,
    %cst_52 = arith.constant 0.996101379 : f32
    %71 = vector.broadcast %cst_52 : f32 to vector<1x128xf32>
    %72 = arith.mulf %71, %69 : vector<1x128xf32>
    %c9 = arith.constant 9 : index
    %c0_53 = arith.constant 0 : index
    %73 = vector.load %arg7[%c9, %c0_53] : memref<128x128xf32, #tpu.memory_space<vmem>>, vector<1x128xf32>
    %cst_54 = arith.constant 0.00389862806 : f32
    %74 = vector.broadcast %cst_54 : f32 to vector<1x128xf32>
    %75 = arith.mulf %74, %73 : vector<1x128xf32>
    %76 = arith.addf %72, %75 : vector<1x128xf32>
    %c9_55 = arith.constant 9 : index
    %c0_56 = arith.constant 0 : index
    %77 = vector.load %arg8[%c9_55, %c0_56] : memref<128x128xf32, #tpu.memory_space<vmem>>, vector<1x128xf32>
    tpu.vector_store %arg8[%c9_55, %c0_56], %76 {strides = array<i32>} : memref<128x128xf32, #tpu.memory_space<vmem>>, vector<1x128xf32>,
    %cst_57 = arith.constant 0.996101379 : f32
    %78 = vector.broadcast %cst_57 : f32 to vector<1x128xf32>
    %79 = arith.mulf %78, %76 : vector<1x128xf32>
    %c10 = arith.constant 10 : index
    %c0_58 = arith.constant 0 : index
    %80 = vector.load %arg7[%c10, %c0_58] : memref<128x128xf32, #tpu.memory_space<vmem>>, vector<1x128xf32>
    %cst_59 = arith.constant 0.00389862806 : f32
    %81 = vector.broadcast %cst_59 : f32 to vector<1x128xf32>
    %82 = arith.mulf %81, %80 : vector<1x128xf32>
    %83 = arith.addf %79, %82 : vector<1x128xf32>
    %c10_60 = arith.constant 10 : index
    %c0_61 = arith.constant 0 : index
    %84 = vector.load %arg8[%c10_60, %c0_61] : memref<128x128xf32, #tpu.memory_space<vmem>>, vector<1x128xf32>
    tpu.vector_store %arg8[%c10_60, %c0_61], %83 {strides = array<i32>} : memref<128x128xf32, #tpu.memory_space<vmem>>, vector<1x128xf32>,
    %cst_62 = arith.constant 0.996101379 : f32
    %85 = vector.broadcast %cst_62 : f32 to vector<1x128xf32>
    %86 = arith.mulf %85, %83 : vector<1x128xf32>
    %c11 = arith.constant 11 : index
    %c0_63 = arith.constant 0 : index
    %87 = vector.load %arg7[%c11, %c0_63] : memref<128x128xf32, #tpu.memory_space<vmem>>, vector<1x128xf32>
    %cst_64 = arith.constant 0.00389862806 : f32
    %88 = vector.broadcast %cst_64 : f32 to vector<1x128xf32>
    %89 = arith.mulf %88, %87 : vector<1x128xf32>
    %90 = arith.addf %86, %89 : vector<1x128xf32>
    %c11_65 = arith.constant 11 : index
    %c0_66 = arith.constant 0 : index
    %91 = vector.load %arg8[%c11_65, %c0_66] : memref<128x128xf32, #tpu.memory_space<vmem>>, vector<1x128xf32>
    tpu.vector_store %arg8[%c11_65, %c0_66], %90 {strides = array<i32>} : memref<128x128xf32, #tpu.memory_space<vmem>>, vector<1x128xf32>,
    %cst_67 = arith.constant 0.996101379 : f32
    %92 = vector.broadcast %cst_67 : f32 to vector<1x128xf32>
    %93 = arith.mulf %92, %90 : vector<1x128xf32>
    %c12 = arith.constant 12 : index
    %c0_68 = arith.constant 0 : index
    %94 = vector.load %arg7[%c12, %c0_68] : memref<128x128xf32, #tpu.memory_space<vmem>>, vector<1x128xf32>
    %cst_69 = arith.constant 0.00389862806 : f32
    %95 = vector.broadcast %cst_69 : f32 to vector<1x128xf32>
    %96 = arith.mulf %95, %94 : vector<1x128xf32>
    %97 = arith.addf %93, %96 : vector<1x128xf32>
    %c12_70 = arith.constant 12 : index
    %c0_71 = arith.constant 0 : index
    %98 = vector.load %arg8[%c12_70, %c0_71] : memref<128x128xf32, #tpu.memory_space<vmem>>, vector<1x128xf32>
    tpu.vector_store %arg8[%c12_70, %c0_71], %97 {strides = array<i32>} : memref<128x128xf32, #tpu.memory_space<vmem>>, vector<1x128xf32>,
    %cst_72 = arith.constant 0.996101379 : f32
    %99 = vector.broadcast %cst_72 : f32 to vector<1x128xf32>
    %100 = arith.mulf %99, %97 : vector<1x128xf32>
    %c13 = arith.constant 13 : index
    %c0_73 = arith.constant 0 : index
    %101 = vector.load %arg7[%c13, %c0_73] : memref<128x128xf32, #tpu.memory_space<vmem>>, vector<1x128xf32>
    %cst_74 = arith.constant 0.00389862806 : f32
    %102 = vector.broadcast %cst_74 : f32 to vector<1x128xf32>
    %103 = arith.mulf %102, %101 : vector<1x128xf32>
    %104 = arith.addf %100, %103 : vector<1x128xf32>
    %c13_75 = arith.constant 13 : index
    %c0_76 = arith.constant 0 : index
    %105 = vector.load %arg8[%c13_75, %c0_76] : memref<128x128xf32, #tpu.memory_space<vmem>>, vector<1x128xf32>
    tpu.vector_store %arg8[%c13_75, %c0_76], %104 {strides = array<i32>} : memref<128x128xf32, #tpu.memory_space<vmem>>, vector<1x128xf32>,
    %cst_77 = arith.constant 0.996101379 : f32
    %106 = vector.broadcast %cst_77 : f32 to vector<1x128xf32>
    %107 = arith.mulf %106, %104 : vector<1x128xf32>
    %c14 = arith.constant 14 : index
    %c0_78 = arith.constant 0 : index
    %108 = vector.load %arg7[%c14, %c0_78] : memref<128x128xf32, #tpu.memory_space<vmem>>, vector<1x128xf32>
    %cst_79 = arith.constant 0.00389862806 : f32
    %109 = vector.broadcast %cst_79 : f32 to vector<1x128xf32>
    %110 = arith.mulf %109, %108 : vector<1x128xf32>
    %111 = arith.addf %107, %110 : vector<1x128xf32>
    %c14_80 = arith.constant 14 : index
    %c0_81 = arith.constant 0 : index
    %112 = vector.load %arg8[%c14_80, %c0_81] : memref<128x128xf32, #tpu.memory_space<vmem>>, vector<1x128xf32>
    tpu.vector_store %arg8[%c14_80, %c0_81], %111 {strides = array<i32>} : memref<128x128xf32, #tpu.memory_space<vmem>>, vector<1x128xf32>,
    %cst_82 = arith.constant 0.996101379 : f32
    %113 = vector.broadcast %cst_82 : f32 to vector<1x128xf32>
    %114 = arith.mulf %113, %111 : vector<1x128xf32>
    %c15 = arith.constant 15 : index
    %c0_83 = arith.constant 0 : index
    %115 = vector.load %arg7[%c15, %c0_83] : memref<128x128xf32, #tpu.memory_space<vmem>>, vector<1x128xf32>
    %cst_84 = arith.constant 0.00389862806 : f32
    %116 = vector.broadcast %cst_84 : f32 to vector<1x128xf32>
    %117 = arith.mulf %116, %115 : vector<1x128xf32>
    %118 = arith.addf %114, %117 : vector<1x128xf32>
    %c15_85 = arith.constant 15 : index
    %c0_86 = arith.constant 0 : index
    %119 = vector.load %arg8[%c15_85, %c0_86] : memref<128x128xf32, #tpu.memory_space<vmem>>, vector<1x128xf32>
    tpu.vector_store %arg8[%c15_85, %c0_86], %118 {strides = array<i32>} : memref<128x128xf32, #tpu.memory_space<vmem>>, vector<1x128xf32>,
    %cst_87 = arith.constant 0.996101379 : f32
    %120 = vector.broadcast %cst_87 : f32 to vector<1x128xf32>
    %121 = arith.mulf %120, %118 : vector<1x128xf32>
    %c16 = arith.constant 16 : index
    %c0_88 = arith.constant 0 : index
    %122 = vector.load %arg7[%c16, %c0_88] : memref<128x128xf32, #tpu.memory_space<vmem>>, vector<1x128xf32>
    %cst_89 = arith.constant 0.00389862806 : f32
    %123 = vector.broadcast %cst_89 : f32 to vector<1x128xf32>
    %124 = arith.mulf %123, %122 : vector<1x128xf32>
    %125 = arith.addf %121, %124 : vector<1x128xf32>
    %c16_90 = arith.constant 16 : index
    %c0_91 = arith.constant 0 : index
    %126 = vector.load %arg8[%c16_90, %c0_91] : memref<128x128xf32, #tpu.memory_space<vmem>>, vector<1x128xf32>
    tpu.vector_store %arg8[%c16_90, %c0_91], %125 {strides = array<i32>} : memref<128x128xf32, #tpu.memory_space<vmem>>, vector<1x128xf32>,
    %cst_92 = arith.constant 0.996101379 : f32
    %127 = vector.broadcast %cst_92 : f32 to vector<1x128xf32>
    %128 = arith.mulf %127, %125 : vector<1x128xf32>
    %c17 = arith.constant 17 : index
    %c0_93 = arith.constant 0 : index
    %129 = vector.load %arg7[%c17, %c0_93] : memref<128x128xf32, #tpu.memory_space<vmem>>, vector<1x128xf32>
    %cst_94 = arith.constant 0.00389862806 : f32
    %130 = vector.broadcast %cst_94 : f32 to vector<1x128xf32>
    %131 = arith.mulf %130, %129 : vector<1x128xf32>
    %132 = arith.addf %128, %131 : vector<1x128xf32>
    %c17_95 = arith.constant 17 : index
    %c0_96 = arith.constant 0 : index
    %133 = vector.load %arg8[%c17_95, %c0_96] : memref<128x128xf32, #tpu.memory_space<vmem>>, vector<1x128xf32>
    tpu.vector_store %arg8[%c17_95, %c0_96], %132 {strides = array<i32>} : memref<128x128xf32, #tpu.memory_space<vmem>>, vector<1x128xf32>,
    %cst_97 = arith.constant 0.996101379 : f32
    %134 = vector.broadcast %cst_97 : f32 to vector<1x128xf32>
    %135 = arith.mulf %134, %132 : vector<1x128xf32>
    %c18 = arith.constant 18 : index
    %c0_98 = arith.constant 0 : index
    %136 = vector.load %arg7[%c18, %c0_98] : memref<128x128xf32, #tpu.memory_space<vmem>>, vector<1x128xf32>
    %cst_99 = arith.constant 0.00389862806 : f32
    %137 = vector.broadcast %cst_99 : f32 to vector<1x128xf32>
    %138 = arith.mulf %137, %136 : vector<1x128xf32>
    %139 = arith.addf %135, %138 : vector<1x128xf32>
    %c18_100 = arith.constant 18 : index
    %c0_101 = arith.constant 0 : index
    %140 = vector.load %arg8[%c18_100, %c0_101] : memref<128x128xf32, #tpu.memory_space<vmem>>, vector<1x128xf32>
    tpu.vector_store %arg8[%c18_100, %c0_101], %139 {strides = array<i32>} : memref<128x128xf32, #tpu.memory_space<vmem>>, vector<1x128xf32>,
    %cst_102 = arith.constant 0.996101379 : f32
    %141 = vector.broadcast %cst_102 : f32 to vector<1x128xf32>
    %142 = arith.mulf %141, %139 : vector<1x128xf32>
    %c19 = arith.constant 19 : index
    %c0_103 = arith.constant 0 : index
    %143 = vector.load %arg7[%c19, %c0_103] : memref<128x128xf32, #tpu.memory_space<vmem>>, vector<1x128xf32>
    %cst_104 = arith.constant 0.00389862806 : f32
    %144 = vector.broadcast %cst_104 : f32 to vector<1x128xf32>
    %145 = arith.mulf %144, %143 : vector<1x128xf32>
    %146 = arith.addf %142, %145 : vector<1x128xf32>
    %c19_105 = arith.constant 19 : index
    %c0_106 = arith.constant 0 : index
    %147 = vector.load %arg8[%c19_105, %c0_106] : memref<128x128xf32, #tpu.memory_space<vmem>>, vector<1x128xf32>
    tpu.vector_store %arg8[%c19_105, %c0_106], %146 {strides = array<i32>} : memref<128x128xf32, #tpu.memory_space<vmem>>, vector<1x128xf32>,
    %cst_107 = arith.constant 0.996101379 : f32
    %148 = vector.broadcast %cst_107 : f32 to vector<1x128xf32>
    %149 = arith.mulf %148, %146 : vector<1x128xf32>
    %c20 = arith.constant 20 : index
    %c0_108 = arith.constant 0 : index
    %150 = vector.load %arg7[%c20, %c0_108] : memref<128x128xf32, #tpu.memory_space<vmem>>, vector<1x128xf32>
    %cst_109 = arith.constant 0.00389862806 : f32
    %151 = vector.broadcast %cst_109 : f32 to vector<1x128xf32>
    %152 = arith.mulf %151, %150 : vector<1x128xf32>
    %153 = arith.addf %149, %152 : vector<1x128xf32>
    %c20_110 = arith.constant 20 : index
    %c0_111 = arith.constant 0 : index
    %154 = vector.load %arg8[%c20_110, %c0_111] : memref<128x128xf32, #tpu.memory_space<vmem>>, vector<1x128xf32>
    tpu.vector_store %arg8[%c20_110, %c0_111], %153 {strides = array<i32>} : memref<128x128xf32, #tpu.memory_space<vmem>>, vector<1x128xf32>,
    %cst_112 = arith.constant 0.996101379 : f32
    %155 = vector.broadcast %cst_112 : f32 to vector<1x128xf32>
    %156 = arith.mulf %155, %153 : vector<1x128xf32>
    %c21 = arith.constant 21 : index
    %c0_113 = arith.constant 0 : index
    %157 = vector.load %arg7[%c21, %c0_113] : memref<128x128xf32, #tpu.memory_space<vmem>>, vector<1x128xf32>
    %cst_114 = arith.constant 0.00389862806 : f32
    %158 = vector.broadcast %cst_114 : f32 to vector<1x128xf32>
    %159 = arith.mulf %158, %157 : vector<1x128xf32>
    %160 = arith.addf %156, %159 : vector<1x128xf32>
    %c21_115 = arith.constant 21 : index
    %c0_116 = arith.constant 0 : index
    %161 = vector.load %arg8[%c21_115, %c0_116] : memref<128x128xf32, #tpu.memory_space<vmem>>, vector<1x128xf32>
    tpu.vector_store %arg8[%c21_115, %c0_116], %160 {strides = array<i32>} : memref<128x128xf32, #tpu.memory_space<vmem>>, vector<1x128xf32>,
    %cst_117 = arith.constant 0.996101379 : f32
    %162 = vector.broadcast %cst_117 : f32 to vector<1x128xf32>
    %163 = arith.mulf %162, %160 : vector<1x128xf32>
    %c22 = arith.constant 22 : index
    %c0_118 = arith.constant 0 : index
    %164 = vector.load %arg7[%c22, %c0_118] : memref<128x128xf32, #tpu.memory_space<vmem>>, vector<1x128xf32>
    %cst_119 = arith.constant 0.00389862806 : f32
    %165 = vector.broadcast %cst_119 : f32 to vector<1x128xf32>
    %166 = arith.mulf %165, %164 : vector<1x128xf32>
    %167 = arith.addf %163, %166 : vector<1x128xf32>
    %c22_120 = arith.constant 22 : index
    %c0_121 = arith.constant 0 : index
    %168 = vector.load %arg8[%c22_120, %c0_121] : memref<128x128xf32, #tpu.memory_space<vmem>>, vector<1x128xf32>
    tpu.vector_store %arg8[%c22_120, %c0_121], %167 {strides = array<i32>} : memref<128x128xf32, #tpu.memory_space<vmem>>, vector<1x128xf32>,
    %cst_122 = arith.constant 0.996101379 : f32
    %169 = vector.broadcast %cst_122 : f32 to vector<1x128xf32>
    %170 = arith.mulf %169, %167 : vector<1x128xf32>
    %c23 = arith.constant 23 : index
    %c0_123 = arith.constant 0 : index
    %171 = vector.load %arg7[%c23, %c0_123] : memref<128x128xf32, #tpu.memory_space<vmem>>, vector<1x128xf32>
    %cst_124 = arith.constant 0.00389862806 : f32
    %172 = vector.broadcast %cst_124 : f32 to vector<1x128xf32>
    %173 = arith.mulf %172, %171 : vector<1x128xf32>
    %174 = arith.addf %170, %173 : vector<1x128xf32>
    %c23_125 = arith.constant 23 : index
    %c0_126 = arith.constant 0 : index
    %175 = vector.load %arg8[%c23_125, %c0_126] : memref<128x128xf32, #tpu.memory_space<vmem>>, vector<1x128xf32>
    tpu.vector_store %arg8[%c23_125, %c0_126], %174 {strides = array<i32>} : memref<128x128xf32, #tpu.memory_space<vmem>>, vector<1x128xf32>,
    %cst_127 = arith.constant 0.996101379 : f32
    %176 = vector.broadcast %cst_127 : f32 to vector<1x128xf32>
    %177 = arith.mulf %176, %174 : vector<1x128xf32>
    %c24 = arith.constant 24 : index
    %c0_128 = arith.constant 0 : index
    %178 = vector.load %arg7[%c24, %c0_128] : memref<128x128xf32, #tpu.memory_space<vmem>>, vector<1x128xf32>
    %cst_129 = arith.constant 0.00389862806 : f32
    %179 = vector.broadcast %cst_129 : f32 to vector<1x128xf32>
    %180 = arith.mulf %179, %178 : vector<1x128xf32>
    %181 = arith.addf %177, %180 : vector<1x128xf32>
    %c24_130 = arith.constant 24 : index
    %c0_131 = arith.constant 0 : index
    %182 = vector.load %arg8[%c24_130, %c0_131] : memref<128x128xf32, #tpu.memory_space<vmem>>, vector<1x128xf32>
    tpu.vector_store %arg8[%c24_130, %c0_131], %181 {strides = array<i32>} : memref<128x128xf32, #tpu.memory_space<vmem>>, vector<1x128xf32>,
    %cst_132 = arith.constant 0.996101379 : f32
    %183 = vector.broadcast %cst_132 : f32 to vector<1x128xf32>
    %184 = arith.mulf %183, %181 : vector<1x128xf32>
    %c25 = arith.constant 25 : index
    %c0_133 = arith.constant 0 : index
    %185 = vector.load %arg7[%c25, %c0_133] : memref<128x128xf32, #tpu.memory_space<vmem>>, vector<1x128xf32>
    %cst_134 = arith.constant 0.00389862806 : f32
    %186 = vector.broadcast %cst_134 : f32 to vector<1x128xf32>
    %187 = arith.mulf %186, %185 : vector<1x128xf32>
    %188 = arith.addf %184, %187 : vector<1x128xf32>
    %c25_135 = arith.constant 25 : index
    %c0_136 = arith.constant 0 : index
    %189 = vector.load %arg8[%c25_135, %c0_136] : memref<128x128xf32, #tpu.memory_space<vmem>>, vector<1x128xf32>
    tpu.vector_store %arg8[%c25_135, %c0_136], %188 {strides = array<i32>} : memref<128x128xf32, #tpu.memory_space<vmem>>, vector<1x128xf32>,
    %cst_137 = arith.constant 0.996101379 : f32
    %190 = vector.broadcast %cst_137 : f32 to vector<1x128xf32>
    %191 = arith.mulf %190, %188 : vector<1x128xf32>
    %c26 = arith.constant 26 : index
    %c0_138 = arith.constant 0 : index
    %192 = vector.load %arg7[%c26, %c0_138] : memref<128x128xf32, #tpu.memory_space<vmem>>, vector<1x128xf32>
    %cst_139 = arith.constant 0.00389862806 : f32
    %193 = vector.broadcast %cst_139 : f32 to vector<1x128xf32>
    %194 = arith.mulf %193, %192 : vector<1x128xf32>
    %195 = arith.addf %191, %194 : vector<1x128xf32>
    %c26_140 = arith.constant 26 : index
    %c0_141 = arith.constant 0 : index
    %196 = vector.load %arg8[%c26_140, %c0_141] : memref<128x128xf32, #tpu.memory_space<vmem>>, vector<1x128xf32>
    tpu.vector_store %arg8[%c26_140, %c0_141], %195 {strides = array<i32>} : memref<128x128xf32, #tpu.memory_space<vmem>>, vector<1x128xf32>,
    %cst_142 = arith.constant 0.996101379 : f32
    %197 = vector.broadcast %cst_142 : f32 to vector<1x128xf32>
    %198 = arith.mulf %197, %195 : vector<1x128xf32>
    %c27 = arith.constant 27 : index
    %c0_143 = arith.constant 0 : index
    %199 = vector.load %arg7[%c27, %c0_143] : memref<128x128xf32, #tpu.memory_space<vmem>>, vector<1x128xf32>
    %cst_144 = arith.constant 0.00389862806 : f32
    %200 = vector.broadcast %cst_144 : f32 to vector<1x128xf32>
    %201 = arith.mulf %200, %199 : vector<1x128xf32>
    %202 = arith.addf %198, %201 : vector<1x128xf32>
    %c27_145 = arith.constant 27 : index
    %c0_146 = arith.constant 0 : index
    %203 = vector.load %arg8[%c27_145, %c0_146] : memref<128x128xf32, #tpu.memory_space<vmem>>, vector<1x128xf32>
    tpu.vector_store %arg8[%c27_145, %c0_146], %202 {strides = array<i32>} : memref<128x128xf32, #tpu.memory_space<vmem>>, vector<1x128xf32>,
    %cst_147 = arith.constant 0.996101379 : f32
    %204 = vector.broadcast %cst_147 : f32 to vector<1x128xf32>
    %205 = arith.mulf %204, %202 : vector<1x128xf32>
    %c28 = arith.constant 28 : index
    %c0_148 = arith.constant 0 : index
    %206 = vector.load %arg7[%c28, %c0_148] : memref<128x128xf32, #tpu.memory_space<vmem>>, vector<1x128xf32>
    %cst_149 = arith.constant 0.00389862806 : f32
    %207 = vector.broadcast %cst_149 : f32 to vector<1x128xf32>
    %208 = arith.mulf %207, %206 : vector<1x128xf32>
    %209 = arith.addf %205, %208 : vector<1x128xf32>
    %c28_150 = arith.constant 28 : index
    %c0_151 = arith.constant 0 : index
    %210 = vector.load %arg8[%c28_150, %c0_151] : memref<128x128xf32, #tpu.memory_space<vmem>>, vector<1x128xf32>
    tpu.vector_store %arg8[%c28_150, %c0_151], %209 {strides = array<i32>} : memref<128x128xf32, #tpu.memory_space<vmem>>, vector<1x128xf32>,
    %cst_152 = arith.constant 0.996101379 : f32
    %211 = vector.broadcast %cst_152 : f32 to vector<1x128xf32>
    %212 = arith.mulf %211, %209 : vector<1x128xf32>
    %c29 = arith.constant 29 : index
    %c0_153 = arith.constant 0 : index
    %213 = vector.load %arg7[%c29, %c0_153] : memref<128x128xf32, #tpu.memory_space<vmem>>, vector<1x128xf32>
    %cst_154 = arith.constant 0.00389862806 : f32
    %214 = vector.broadcast %cst_154 : f32 to vector<1x128xf32>
    %215 = arith.mulf %214, %213 : vector<1x128xf32>
    %216 = arith.addf %212, %215 : vector<1x128xf32>
    %c29_155 = arith.constant 29 : index
    %c0_156 = arith.constant 0 : index
    %217 = vector.load %arg8[%c29_155, %c0_156] : memref<128x128xf32, #tpu.memory_space<vmem>>, vector<1x128xf32>
    tpu.vector_store %arg8[%c29_155, %c0_156], %216 {strides = array<i32>} : memref<128x128xf32, #tpu.memory_space<vmem>>, vector<1x128xf32>,
    %cst_157 = arith.constant 0.996101379 : f32
    %218 = vector.broadcast %cst_157 : f32 to vector<1x128xf32>
    %219 = arith.mulf %218, %216 : vector<1x128xf32>
    %c30 = arith.constant 30 : index
    %c0_158 = arith.constant 0 : index
    %220 = vector.load %arg7[%c30, %c0_158] : memref<128x128xf32, #tpu.memory_space<vmem>>, vector<1x128xf32>
    %cst_159 = arith.constant 0.00389862806 : f32
    %221 = vector.broadcast %cst_159 : f32 to vector<1x128xf32>
    %222 = arith.mulf %221, %220 : vector<1x128xf32>
    %223 = arith.addf %219, %222 : vector<1x128xf32>
    %c30_160 = arith.constant 30 : index
    %c0_161 = arith.constant 0 : index
    %224 = vector.load %arg8[%c30_160, %c0_161] : memref<128x128xf32, #tpu.memory_space<vmem>>, vector<1x128xf32>
    tpu.vector_store %arg8[%c30_160, %c0_161], %223 {strides = array<i32>} : memref<128x128xf32, #tpu.memory_space<vmem>>, vector<1x128xf32>,
    %cst_162 = arith.constant 0.996101379 : f32
    %225 = vector.broadcast %cst_162 : f32 to vector<1x128xf32>
    %226 = arith.mulf %225, %223 : vector<1x128xf32>
    %c31 = arith.constant 31 : index
    %c0_163 = arith.constant 0 : index
    %227 = vector.load %arg7[%c31, %c0_163] : memref<128x128xf32, #tpu.memory_space<vmem>>, vector<1x128xf32>
    %cst_164 = arith.constant 0.00389862806 : f32
    %228 = vector.broadcast %cst_164 : f32 to vector<1x128xf32>
    %229 = arith.mulf %228, %227 : vector<1x128xf32>
    %230 = arith.addf %226, %229 : vector<1x128xf32>
    %c31_165 = arith.constant 31 : index
    %c0_166 = arith.constant 0 : index
    %231 = vector.load %arg8[%c31_165, %c0_166] : memref<128x128xf32, #tpu.memory_space<vmem>>, vector<1x128xf32>
    tpu.vector_store %arg8[%c31_165, %c0_166], %230 {strides = array<i32>} : memref<128x128xf32, #tpu.memory_space<vmem>>, vector<1x128xf32>,
    %cst_167 = arith.constant 0.996101379 : f32
    %232 = vector.broadcast %cst_167 : f32 to vector<1x128xf32>
    %233 = arith.mulf %232, %230 : vector<1x128xf32>
    %c32 = arith.constant 32 : index
    %c0_168 = arith.constant 0 : index
    %234 = vector.load %arg7[%c32, %c0_168] : memref<128x128xf32, #tpu.memory_space<vmem>>, vector<1x128xf32>
    %cst_169 = arith.constant 0.00389862806 : f32
    %235 = vector.broadcast %cst_169 : f32 to vector<1x128xf32>
    %236 = arith.mulf %235, %234 : vector<1x128xf32>
    %237 = arith.addf %233, %236 : vector<1x128xf32>
    %c32_170 = arith.constant 32 : index
    %c0_171 = arith.constant 0 : index
    %238 = vector.load %arg8[%c32_170, %c0_171] : memref<128x128xf32, #tpu.memory_space<vmem>>, vector<1x128xf32>
    tpu.vector_store %arg8[%c32_170, %c0_171], %237 {strides = array<i32>} : memref<128x128xf32, #tpu.memory_space<vmem>>, vector<1x128xf32>,
    %cst_172 = arith.constant 0.996101379 : f32
    %239 = vector.broadcast %cst_172 : f32 to vector<1x128xf32>
    %240 = arith.mulf %239, %237 : vector<1x128xf32>
    %c33 = arith.constant 33 : index
    %c0_173 = arith.constant 0 : index
    %241 = vector.load %arg7[%c33, %c0_173] : memref<128x128xf32, #tpu.memory_space<vmem>>, vector<1x128xf32>
    %cst_174 = arith.constant 0.00389862806 : f32
    %242 = vector.broadcast %cst_174 : f32 to vector<1x128xf32>
    %243 = arith.mulf %242, %241 : vector<1x128xf32>
    %244 = arith.addf %240, %243 : vector<1x128xf32>
    %c33_175 = arith.constant 33 : index
    %c0_176 = arith.constant 0 : index
    %245 = vector.load %arg8[%c33_175, %c0_176] : memref<128x128xf32, #tpu.memory_space<vmem>>, vector<1x128xf32>
    tpu.vector_store %arg8[%c33_175, %c0_176], %244 {strides = array<i32>} : memref<128x128xf32, #tpu.memory_space<vmem>>, vector<1x128xf32>,
    %cst_177 = arith.constant 0.996101379 : f32
    %246 = vector.broadcast %cst_177 : f32 to vector<1x128xf32>
    %247 = arith.mulf %246, %244 : vector<1x128xf32>
    %c34 = arith.constant 34 : index
    %c0_178 = arith.constant 0 : index
    %248 = vector.load %arg7[%c34, %c0_178] : memref<128x128xf32, #tpu.memory_space<vmem>>, vector<1x128xf32>
    %cst_179 = arith.constant 0.00389862806 : f32
    %249 = vector.broadcast %cst_179 : f32 to vector<1x128xf32>
    %250 = arith.mulf %249, %248 : vector<1x128xf32>
    %251 = arith.addf %247, %250 : vector<1x128xf32>
    %c34_180 = arith.constant 34 : index
    %c0_181 = arith.constant 0 : index
    %252 = vector.load %arg8[%c34_180, %c0_181] : memref<128x128xf32, #tpu.memory_space<vmem>>, vector<1x128xf32>
    tpu.vector_store %arg8[%c34_180, %c0_181], %251 {strides = array<i32>} : memref<128x128xf32, #tpu.memory_space<vmem>>, vector<1x128xf32>,
    %cst_182 = arith.constant 0.996101379 : f32
    %253 = vector.broadcast %cst_182 : f32 to vector<1x128xf32>
    %254 = arith.mulf %253, %251 : vector<1x128xf32>
    %c35 = arith.constant 35 : index
    %c0_183 = arith.constant 0 : index
    %255 = vector.load %arg7[%c35, %c0_183] : memref<128x128xf32, #tpu.memory_space<vmem>>, vector<1x128xf32>
    %cst_184 = arith.constant 0.00389862806 : f32
    %256 = vector.broadcast %cst_184 : f32 to vector<1x128xf32>
    %257 = arith.mulf %256, %255 : vector<1x128xf32>
    %258 = arith.addf %254, %257 : vector<1x128xf32>
    %c35_185 = arith.constant 35 : index
    %c0_186 = arith.constant 0 : index
    %259 = vector.load %arg8[%c35_185, %c0_186] : memref<128x128xf32, #tpu.memory_space<vmem>>, vector<1x128xf32>
    tpu.vector_store %arg8[%c35_185, %c0_186], %258 {strides = array<i32>} : memref<128x128xf32, #tpu.memory_space<vmem>>, vector<1x128xf32>,
    %cst_187 = arith.constant 0.996101379 : f32
    %260 = vector.broadcast %cst_187 : f32 to vector<1x128xf32>
    %261 = arith.mulf %260, %258 : vector<1x128xf32>
    %c36 = arith.constant 36 : index
    %c0_188 = arith.constant 0 : index
    %262 = vector.load %arg7[%c36, %c0_188] : memref<128x128xf32, #tpu.memory_space<vmem>>, vector<1x128xf32>
    %cst_189 = arith.constant 0.00389862806 : f32
    %263 = vector.broadcast %cst_189 : f32 to vector<1x128xf32>
    %264 = arith.mulf %263, %262 : vector<1x128xf32>
    %265 = arith.addf %261, %264 : vector<1x128xf32>
    %c36_190 = arith.constant 36 : index
    %c0_191 = arith.constant 0 : index
    %266 = vector.load %arg8[%c36_190, %c0_191] : memref<128x128xf32, #tpu.memory_space<vmem>>, vector<1x128xf32>
    tpu.vector_store %arg8[%c36_190, %c0_191], %265 {strides = array<i32>} : memref<128x128xf32, #tpu.memory_space<vmem>>, vector<1x128xf32>,
    %cst_192 = arith.constant 0.996101379 : f32
    %267 = vector.broadcast %cst_192 : f32 to vector<1x128xf32>
    %268 = arith.mulf %267, %265 : vector<1x128xf32>
    %c37 = arith.constant 37 : index
    %c0_193 = arith.constant 0 : index
    %269 = vector.load %arg7[%c37, %c0_193] : memref<128x128xf32, #tpu.memory_space<vmem>>, vector<1x128xf32>
    %cst_194 = arith.constant 0.00389862806 : f32
    %270 = vector.broadcast %cst_194 : f32 to vector<1x128xf32>
    %271 = arith.mulf %270, %269 : vector<1x128xf32>
    %272 = arith.addf %268, %271 : vector<1x128xf32>
    %c37_195 = arith.constant 37 : index
    %c0_196 = arith.constant 0 : index
    %273 = vector.load %arg8[%c37_195, %c0_196] : memref<128x128xf32, #tpu.memory_space<vmem>>, vector<1x128xf32>
    tpu.vector_store %arg8[%c37_195, %c0_196], %272 {strides = array<i32>} : memref<128x128xf32, #tpu.memory_space<vmem>>, vector<1x128xf32>,
    %cst_197 = arith.constant 0.996101379 : f32
    %274 = vector.broadcast %cst_197 : f32 to vector<1x128xf32>
    %275 = arith.mulf %274, %272 : vector<1x128xf32>
    %c38 = arith.constant 38 : index
    %c0_198 = arith.constant 0 : index
    %276 = vector.load %arg7[%c38, %c0_198] : memref<128x128xf32, #tpu.memory_space<vmem>>, vector<1x128xf32>
    %cst_199 = arith.constant 0.00389862806 : f32
    %277 = vector.broadcast %cst_199 : f32 to vector<1x128xf32>
    %278 = arith.mulf %277, %276 : vector<1x128xf32>
    %279 = arith.addf %275, %278 : vector<1x128xf32>
    %c38_200 = arith.constant 38 : index
    %c0_201 = arith.constant 0 : index
    %280 = vector.load %arg8[%c38_200, %c0_201] : memref<128x128xf32, #tpu.memory_space<vmem>>, vector<1x128xf32>
    tpu.vector_store %arg8[%c38_200, %c0_201], %279 {strides = array<i32>} : memref<128x128xf32, #tpu.memory_space<vmem>>, vector<1x128xf32>,
    %cst_202 = arith.constant 0.996101379 : f32
    %281 = vector.broadcast %cst_202 : f32 to vector<1x128xf32>
    %282 = arith.mulf %281, %279 : vector<1x128xf32>
    %c39 = arith.constant 39 : index
    %c0_203 = arith.constant 0 : index
    %283 = vector.load %arg7[%c39, %c0_203] : memref<128x128xf32, #tpu.memory_space<vmem>>, vector<1x128xf32>
    %cst_204 = arith.constant 0.00389862806 : f32
    %284 = vector.broadcast %cst_204 : f32 to vector<1x128xf32>
    %285 = arith.mulf %284, %283 : vector<1x128xf32>
    %286 = arith.addf %282, %285 : vector<1x128xf32>
    %c39_205 = arith.constant 39 : index
    %c0_206 = arith.constant 0 : index
    %287 = vector.load %arg8[%c39_205, %c0_206] : memref<128x128xf32, #tpu.memory_space<vmem>>, vector<1x128xf32>
    tpu.vector_store %arg8[%c39_205, %c0_206], %286 {strides = array<i32>} : memref<128x128xf32, #tpu.memory_space<vmem>>, vector<1x128xf32>,
    %cst_207 = arith.constant 0.996101379 : f32
    %288 = vector.broadcast %cst_207 : f32 to vector<1x128xf32>
    %289 = arith.mulf %288, %286 : vector<1x128xf32>
    %c40 = arith.constant 40 : index
    %c0_208 = arith.constant 0 : index
    %290 = vector.load %arg7[%c40, %c0_208] : memref<128x128xf32, #tpu.memory_space<vmem>>, vector<1x128xf32>
    %cst_209 = arith.constant 0.00389862806 : f32
    %291 = vector.broadcast %cst_209 : f32 to vector<1x128xf32>
    %292 = arith.mulf %291, %290 : vector<1x128xf32>
    %293 = arith.addf %289, %292 : vector<1x128xf32>
    %c40_210 = arith.constant 40 : index
    %c0_211 = arith.constant 0 : index
    %294 = vector.load %arg8[%c40_210, %c0_211] : memref<128x128xf32, #tpu.memory_space<vmem>>, vector<1x128xf32>
    tpu.vector_store %arg8[%c40_210, %c0_211], %293 {strides = array<i32>} : memref<128x128xf32, #tpu.memory_space<vmem>>, vector<1x128xf32>,
    %cst_212 = arith.constant 0.996101379 : f32
    %295 = vector.broadcast %cst_212 : f32 to vector<1x128xf32>
    %296 = arith.mulf %295, %293 : vector<1x128xf32>
    %c41 = arith.constant 41 : index
    %c0_213 = arith.constant 0 : index
    %297 = vector.load %arg7[%c41, %c0_213] : memref<128x128xf32, #tpu.memory_space<vmem>>, vector<1x128xf32>
    %cst_214 = arith.constant 0.00389862806 : f32
    %298 = vector.broadcast %cst_214 : f32 to vector<1x128xf32>
    %299 = arith.mulf %298, %297 : vector<1x128xf32>
    %300 = arith.addf %296, %299 : vector<1x128xf32>
    %c41_215 = arith.constant 41 : index
    %c0_216 = arith.constant 0 : index
    %301 = vector.load %arg8[%c41_215, %c0_216] : memref<128x128xf32, #tpu.memory_space<vmem>>, vector<1x128xf32>
    tpu.vector_store %arg8[%c41_215, %c0_216], %300 {strides = array<i32>} : memref<128x128xf32, #tpu.memory_space<vmem>>, vector<1x128xf32>,
    %cst_217 = arith.constant 0.996101379 : f32
    %302 = vector.broadcast %cst_217 : f32 to vector<1x128xf32>
    %303 = arith.mulf %302, %300 : vector<1x128xf32>
    %c42 = arith.constant 42 : index
    %c0_218 = arith.constant 0 : index
    %304 = vector.load %arg7[%c42, %c0_218] : memref<128x128xf32, #tpu.memory_space<vmem>>, vector<1x128xf32>
    %cst_219 = arith.constant 0.00389862806 : f32
    %305 = vector.broadcast %cst_219 : f32 to vector<1x128xf32>
    %306 = arith.mulf %305, %304 : vector<1x128xf32>
    %307 = arith.addf %303, %306 : vector<1x128xf32>
    %c42_220 = arith.constant 42 : index
    %c0_221 = arith.constant 0 : index
    %308 = vector.load %arg8[%c42_220, %c0_221] : memref<128x128xf32, #tpu.memory_space<vmem>>, vector<1x128xf32>
    tpu.vector_store %arg8[%c42_220, %c0_221], %307 {strides = array<i32>} : memref<128x128xf32, #tpu.memory_space<vmem>>, vector<1x128xf32>,
    %cst_222 = arith.constant 0.996101379 : f32
    %309 = vector.broadcast %cst_222 : f32 to vector<1x128xf32>
    %310 = arith.mulf %309, %307 : vector<1x128xf32>
    %c43 = arith.constant 43 : index
    %c0_223 = arith.constant 0 : index
    %311 = vector.load %arg7[%c43, %c0_223] : memref<128x128xf32, #tpu.memory_space<vmem>>, vector<1x128xf32>
    %cst_224 = arith.constant 0.00389862806 : f32
    %312 = vector.broadcast %cst_224 : f32 to vector<1x128xf32>
    %313 = arith.mulf %312, %311 : vector<1x128xf32>
    %314 = arith.addf %310, %313 : vector<1x128xf32>
    %c43_225 = arith.constant 43 : index
    %c0_226 = arith.constant 0 : index
    %315 = vector.load %arg8[%c43_225, %c0_226] : memref<128x128xf32, #tpu.memory_space<vmem>>, vector<1x128xf32>
    tpu.vector_store %arg8[%c43_225, %c0_226], %314 {strides = array<i32>} : memref<128x128xf32, #tpu.memory_space<vmem>>, vector<1x128xf32>,
    %cst_227 = arith.constant 0.996101379 : f32
    %316 = vector.broadcast %cst_227 : f32 to vector<1x128xf32>
    %317 = arith.mulf %316, %314 : vector<1x128xf32>
    %c44 = arith.constant 44 : index
    %c0_228 = arith.constant 0 : index
    %318 = vector.load %arg7[%c44, %c0_228] : memref<128x128xf32, #tpu.memory_space<vmem>>, vector<1x128xf32>
    %cst_229 = arith.constant 0.00389862806 : f32
    %319 = vector.broadcast %cst_229 : f32 to vector<1x128xf32>
    %320 = arith.mulf %319, %318 : vector<1x128xf32>
    %321 = arith.addf %317, %320 : vector<1x128xf32>
    %c44_230 = arith.constant 44 : index
    %c0_231 = arith.constant 0 : index
    %322 = vector.load %arg8[%c44_230, %c0_231] : memref<128x128xf32, #tpu.memory_space<vmem>>, vector<1x128xf32>
    tpu.vector_store %arg8[%c44_230, %c0_231], %321 {strides = array<i32>} : memref<128x128xf32, #tpu.memory_space<vmem>>, vector<1x128xf32>,
    %cst_232 = arith.constant 0.996101379 : f32
    %323 = vector.broadcast %cst_232 : f32 to vector<1x128xf32>
    %324 = arith.mulf %323, %321 : vector<1x128xf32>
    %c45 = arith.constant 45 : index
    %c0_233 = arith.constant 0 : index
    %325 = vector.load %arg7[%c45, %c0_233] : memref<128x128xf32, #tpu.memory_space<vmem>>, vector<1x128xf32>
    %cst_234 = arith.constant 0.00389862806 : f32
    %326 = vector.broadcast %cst_234 : f32 to vector<1x128xf32>
    %327 = arith.mulf %326, %325 : vector<1x128xf32>
    %328 = arith.addf %324, %327 : vector<1x128xf32>
    %c45_235 = arith.constant 45 : index
    %c0_236 = arith.constant 0 : index
    %329 = vector.load %arg8[%c45_235, %c0_236] : memref<128x128xf32, #tpu.memory_space<vmem>>, vector<1x128xf32>
    tpu.vector_store %arg8[%c45_235, %c0_236], %328 {strides = array<i32>} : memref<128x128xf32, #tpu.memory_space<vmem>>, vector<1x128xf32>,
    %cst_237 = arith.constant 0.996101379 : f32
    %330 = vector.broadcast %cst_237 : f32 to vector<1x128xf32>
    %331 = arith.mulf %330, %328 : vector<1x128xf32>
    %c46 = arith.constant 46 : index
    %c0_238 = arith.constant 0 : index
    %332 = vector.load %arg7[%c46, %c0_238] : memref<128x128xf32, #tpu.memory_space<vmem>>, vector<1x128xf32>
    %cst_239 = arith.constant 0.00389862806 : f32
    %333 = vector.broadcast %cst_239 : f32 to vector<1x128xf32>
    %334 = arith.mulf %333, %332 : vector<1x128xf32>
    %335 = arith.addf %331, %334 : vector<1x128xf32>
    %c46_240 = arith.constant 46 : index
    %c0_241 = arith.constant 0 : index
    %336 = vector.load %arg8[%c46_240, %c0_241] : memref<128x128xf32, #tpu.memory_space<vmem>>, vector<1x128xf32>
    tpu.vector_store %arg8[%c46_240, %c0_241], %335 {strides = array<i32>} : memref<128x128xf32, #tpu.memory_space<vmem>>, vector<1x128xf32>,
    %cst_242 = arith.constant 0.996101379 : f32
    %337 = vector.broadcast %cst_242 : f32 to vector<1x128xf32>
    %338 = arith.mulf %337, %335 : vector<1x128xf32>
    %c47 = arith.constant 47 : index
    %c0_243 = arith.constant 0 : index
    %339 = vector.load %arg7[%c47, %c0_243] : memref<128x128xf32, #tpu.memory_space<vmem>>, vector<1x128xf32>
    %cst_244 = arith.constant 0.00389862806 : f32
    %340 = vector.broadcast %cst_244 : f32 to vector<1x128xf32>
    %341 = arith.mulf %340, %339 : vector<1x128xf32>
    %342 = arith.addf %338, %341 : vector<1x128xf32>
    %c47_245 = arith.constant 47 : index
    %c0_246 = arith.constant 0 : index
    %343 = vector.load %arg8[%c47_245, %c0_246] : memref<128x128xf32, #tpu.memory_space<vmem>>, vector<1x128xf32>
    tpu.vector_store %arg8[%c47_245, %c0_246], %342 {strides = array<i32>} : memref<128x128xf32, #tpu.memory_space<vmem>>, vector<1x128xf32>,
    %cst_247 = arith.constant 0.996101379 : f32
    %344 = vector.broadcast %cst_247 : f32 to vector<1x128xf32>
    %345 = arith.mulf %344, %342 : vector<1x128xf32>
    %c48 = arith.constant 48 : index
    %c0_248 = arith.constant 0 : index
    %346 = vector.load %arg7[%c48, %c0_248] : memref<128x128xf32, #tpu.memory_space<vmem>>, vector<1x128xf32>
    %cst_249 = arith.constant 0.00389862806 : f32
    %347 = vector.broadcast %cst_249 : f32 to vector<1x128xf32>
    %348 = arith.mulf %347, %346 : vector<1x128xf32>
    %349 = arith.addf %345, %348 : vector<1x128xf32>
    %c48_250 = arith.constant 48 : index
    %c0_251 = arith.constant 0 : index
    %350 = vector.load %arg8[%c48_250, %c0_251] : memref<128x128xf32, #tpu.memory_space<vmem>>, vector<1x128xf32>
    tpu.vector_store %arg8[%c48_250, %c0_251], %349 {strides = array<i32>} : memref<128x128xf32, #tpu.memory_space<vmem>>, vector<1x128xf32>,
    %cst_252 = arith.constant 0.996101379 : f32
    %351 = vector.broadcast %cst_252 : f32 to vector<1x128xf32>
    %352 = arith.mulf %351, %349 : vector<1x128xf32>
    %c49 = arith.constant 49 : index
    %c0_253 = arith.constant 0 : index
    %353 = vector.load %arg7[%c49, %c0_253] : memref<128x128xf32, #tpu.memory_space<vmem>>, vector<1x128xf32>
    %cst_254 = arith.constant 0.00389862806 : f32
    %354 = vector.broadcast %cst_254 : f32 to vector<1x128xf32>
    %355 = arith.mulf %354, %353 : vector<1x128xf32>
    %356 = arith.addf %352, %355 : vector<1x128xf32>
    %c49_255 = arith.constant 49 : index
    %c0_256 = arith.constant 0 : index
    %357 = vector.load %arg8[%c49_255, %c0_256] : memref<128x128xf32, #tpu.memory_space<vmem>>, vector<1x128xf32>
    tpu.vector_store %arg8[%c49_255, %c0_256], %356 {strides = array<i32>} : memref<128x128xf32, #tpu.memory_space<vmem>>, vector<1x128xf32>,
    %cst_257 = arith.constant 0.996101379 : f32
    %358 = vector.broadcast %cst_257 : f32 to vector<1x128xf32>
    %359 = arith.mulf %358, %356 : vector<1x128xf32>
    %c50 = arith.constant 50 : index
    %c0_258 = arith.constant 0 : index
    %360 = vector.load %arg7[%c50, %c0_258] : memref<128x128xf32, #tpu.memory_space<vmem>>, vector<1x128xf32>
    %cst_259 = arith.constant 0.00389862806 : f32
    %361 = vector.broadcast %cst_259 : f32 to vector<1x128xf32>
    %362 = arith.mulf %361, %360 : vector<1x128xf32>
    %363 = arith.addf %359, %362 : vector<1x128xf32>
    %c50_260 = arith.constant 50 : index
    %c0_261 = arith.constant 0 : index
    %364 = vector.load %arg8[%c50_260, %c0_261] : memref<128x128xf32, #tpu.memory_space<vmem>>, vector<1x128xf32>
    tpu.vector_store %arg8[%c50_260, %c0_261], %363 {strides = array<i32>} : memref<128x128xf32, #tpu.memory_space<vmem>>, vector<1x128xf32>,
    %cst_262 = arith.constant 0.996101379 : f32
    %365 = vector.broadcast %cst_262 : f32 to vector<1x128xf32>
    %366 = arith.mulf %365, %363 : vector<1x128xf32>
    %c51 = arith.constant 51 : index
    %c0_263 = arith.constant 0 : index
    %367 = vector.load %arg7[%c51, %c0_263] : memref<128x128xf32, #tpu.memory_space<vmem>>, vector<1x128xf32>
    %cst_264 = arith.constant 0.00389862806 : f32
    %368 = vector.broadcast %cst_264 : f32 to vector<1x128xf32>
    %369 = arith.mulf %368, %367 : vector<1x128xf32>
    %370 = arith.addf %366, %369 : vector<1x128xf32>
    %c51_265 = arith.constant 51 : index
    %c0_266 = arith.constant 0 : index
    %371 = vector.load %arg8[%c51_265, %c0_266] : memref<128x128xf32, #tpu.memory_space<vmem>>, vector<1x128xf32>
    tpu.vector_store %arg8[%c51_265, %c0_266], %370 {strides = array<i32>} : memref<128x128xf32, #tpu.memory_space<vmem>>, vector<1x128xf32>,
    %cst_267 = arith.constant 0.996101379 : f32
    %372 = vector.broadcast %cst_267 : f32 to vector<1x128xf32>
    %373 = arith.mulf %372, %370 : vector<1x128xf32>
    %c52 = arith.constant 52 : index
    %c0_268 = arith.constant 0 : index
    %374 = vector.load %arg7[%c52, %c0_268] : memref<128x128xf32, #tpu.memory_space<vmem>>, vector<1x128xf32>
    %cst_269 = arith.constant 0.00389862806 : f32
    %375 = vector.broadcast %cst_269 : f32 to vector<1x128xf32>
    %376 = arith.mulf %375, %374 : vector<1x128xf32>
    %377 = arith.addf %373, %376 : vector<1x128xf32>
    %c52_270 = arith.constant 52 : index
    %c0_271 = arith.constant 0 : index
    %378 = vector.load %arg8[%c52_270, %c0_271] : memref<128x128xf32, #tpu.memory_space<vmem>>, vector<1x128xf32>
    tpu.vector_store %arg8[%c52_270, %c0_271], %377 {strides = array<i32>} : memref<128x128xf32, #tpu.memory_space<vmem>>, vector<1x128xf32>,
    %cst_272 = arith.constant 0.996101379 : f32
    %379 = vector.broadcast %cst_272 : f32 to vector<1x128xf32>
    %380 = arith.mulf %379, %377 : vector<1x128xf32>
    %c53 = arith.constant 53 : index
    %c0_273 = arith.constant 0 : index
    %381 = vector.load %arg7[%c53, %c0_273] : memref<128x128xf32, #tpu.memory_space<vmem>>, vector<1x128xf32>
    %cst_274 = arith.constant 0.00389862806 : f32
    %382 = vector.broadcast %cst_274 : f32 to vector<1x128xf32>
    %383 = arith.mulf %382, %381 : vector<1x128xf32>
    %384 = arith.addf %380, %383 : vector<1x128xf32>
    %c53_275 = arith.constant 53 : index
    %c0_276 = arith.constant 0 : index
    %385 = vector.load %arg8[%c53_275, %c0_276] : memref<128x128xf32, #tpu.memory_space<vmem>>, vector<1x128xf32>
    tpu.vector_store %arg8[%c53_275, %c0_276], %384 {strides = array<i32>} : memref<128x128xf32, #tpu.memory_space<vmem>>, vector<1x128xf32>,
    %cst_277 = arith.constant 0.996101379 : f32
    %386 = vector.broadcast %cst_277 : f32 to vector<1x128xf32>
    %387 = arith.mulf %386, %384 : vector<1x128xf32>
    %c54 = arith.constant 54 : index
    %c0_278 = arith.constant 0 : index
    %388 = vector.load %arg7[%c54, %c0_278] : memref<128x128xf32, #tpu.memory_space<vmem>>, vector<1x128xf32>
    %cst_279 = arith.constant 0.00389862806 : f32
    %389 = vector.broadcast %cst_279 : f32 to vector<1x128xf32>
    %390 = arith.mulf %389, %388 : vector<1x128xf32>
    %391 = arith.addf %387, %390 : vector<1x128xf32>
    %c54_280 = arith.constant 54 : index
    %c0_281 = arith.constant 0 : index
    %392 = vector.load %arg8[%c54_280, %c0_281] : memref<128x128xf32, #tpu.memory_space<vmem>>, vector<1x128xf32>
    tpu.vector_store %arg8[%c54_280, %c0_281], %391 {strides = array<i32>} : memref<128x128xf32, #tpu.memory_space<vmem>>, vector<1x128xf32>,
    %cst_282 = arith.constant 0.996101379 : f32
    %393 = vector.broadcast %cst_282 : f32 to vector<1x128xf32>
    %394 = arith.mulf %393, %391 : vector<1x128xf32>
    %c55 = arith.constant 55 : index
    %c0_283 = arith.constant 0 : index
    %395 = vector.load %arg7[%c55, %c0_283] : memref<128x128xf32, #tpu.memory_space<vmem>>, vector<1x128xf32>
    %cst_284 = arith.constant 0.00389862806 : f32
    %396 = vector.broadcast %cst_284 : f32 to vector<1x128xf32>
    %397 = arith.mulf %396, %395 : vector<1x128xf32>
    %398 = arith.addf %394, %397 : vector<1x128xf32>
    %c55_285 = arith.constant 55 : index
    %c0_286 = arith.constant 0 : index
    %399 = vector.load %arg8[%c55_285, %c0_286] : memref<128x128xf32, #tpu.memory_space<vmem>>, vector<1x128xf32>
    tpu.vector_store %arg8[%c55_285, %c0_286], %398 {strides = array<i32>} : memref<128x128xf32, #tpu.memory_space<vmem>>, vector<1x128xf32>,
    %cst_287 = arith.constant 0.996101379 : f32
    %400 = vector.broadcast %cst_287 : f32 to vector<1x128xf32>
    %401 = arith.mulf %400, %398 : vector<1x128xf32>
    %c56 = arith.constant 56 : index
    %c0_288 = arith.constant 0 : index
    %402 = vector.load %arg7[%c56, %c0_288] : memref<128x128xf32, #tpu.memory_space<vmem>>, vector<1x128xf32>
    %cst_289 = arith.constant 0.00389862806 : f32
    %403 = vector.broadcast %cst_289 : f32 to vector<1x128xf32>
    %404 = arith.mulf %403, %402 : vector<1x128xf32>
    %405 = arith.addf %401, %404 : vector<1x128xf32>
    %c56_290 = arith.constant 56 : index
    %c0_291 = arith.constant 0 : index
    %406 = vector.load %arg8[%c56_290, %c0_291] : memref<128x128xf32, #tpu.memory_space<vmem>>, vector<1x128xf32>
    tpu.vector_store %arg8[%c56_290, %c0_291], %405 {strides = array<i32>} : memref<128x128xf32, #tpu.memory_space<vmem>>, vector<1x128xf32>,
    %cst_292 = arith.constant 0.996101379 : f32
    %407 = vector.broadcast %cst_292 : f32 to vector<1x128xf32>
    %408 = arith.mulf %407, %405 : vector<1x128xf32>
    %c57 = arith.constant 57 : index
    %c0_293 = arith.constant 0 : index
    %409 = vector.load %arg7[%c57, %c0_293] : memref<128x128xf32, #tpu.memory_space<vmem>>, vector<1x128xf32>
    %cst_294 = arith.constant 0.00389862806 : f32
    %410 = vector.broadcast %cst_294 : f32 to vector<1x128xf32>
    %411 = arith.mulf %410, %409 : vector<1x128xf32>
    %412 = arith.addf %408, %411 : vector<1x128xf32>
    %c57_295 = arith.constant 57 : index
    %c0_296 = arith.constant 0 : index
    %413 = vector.load %arg8[%c57_295, %c0_296] : memref<128x128xf32, #tpu.memory_space<vmem>>, vector<1x128xf32>
    tpu.vector_store %arg8[%c57_295, %c0_296], %412 {strides = array<i32>} : memref<128x128xf32, #tpu.memory_space<vmem>>, vector<1x128xf32>,
    %cst_297 = arith.constant 0.996101379 : f32
    %414 = vector.broadcast %cst_297 : f32 to vector<1x128xf32>
    %415 = arith.mulf %414, %412 : vector<1x128xf32>
    %c58 = arith.constant 58 : index
    %c0_298 = arith.constant 0 : index
    %416 = vector.load %arg7[%c58, %c0_298] : memref<128x128xf32, #tpu.memory_space<vmem>>, vector<1x128xf32>
    %cst_299 = arith.constant 0.00389862806 : f32
    %417 = vector.broadcast %cst_299 : f32 to vector<1x128xf32>
    %418 = arith.mulf %417, %416 : vector<1x128xf32>
    %419 = arith.addf %415, %418 : vector<1x128xf32>
    %c58_300 = arith.constant 58 : index
    %c0_301 = arith.constant 0 : index
    %420 = vector.load %arg8[%c58_300, %c0_301] : memref<128x128xf32, #tpu.memory_space<vmem>>, vector<1x128xf32>
    tpu.vector_store %arg8[%c58_300, %c0_301], %419 {strides = array<i32>} : memref<128x128xf32, #tpu.memory_space<vmem>>, vector<1x128xf32>,
    %cst_302 = arith.constant 0.996101379 : f32
    %421 = vector.broadcast %cst_302 : f32 to vector<1x128xf32>
    %422 = arith.mulf %421, %419 : vector<1x128xf32>
    %c59 = arith.constant 59 : index
    %c0_303 = arith.constant 0 : index
    %423 = vector.load %arg7[%c59, %c0_303] : memref<128x128xf32, #tpu.memory_space<vmem>>, vector<1x128xf32>
    %cst_304 = arith.constant 0.00389862806 : f32
    %424 = vector.broadcast %cst_304 : f32 to vector<1x128xf32>
    %425 = arith.mulf %424, %423 : vector<1x128xf32>
    %426 = arith.addf %422, %425 : vector<1x128xf32>
    %c59_305 = arith.constant 59 : index
    %c0_306 = arith.constant 0 : index
    %427 = vector.load %arg8[%c59_305, %c0_306] : memref<128x128xf32, #tpu.memory_space<vmem>>, vector<1x128xf32>
    tpu.vector_store %arg8[%c59_305, %c0_306], %426 {strides = array<i32>} : memref<128x128xf32, #tpu.memory_space<vmem>>, vector<1x128xf32>,
    %cst_307 = arith.constant 0.996101379 : f32
    %428 = vector.broadcast %cst_307 : f32 to vector<1x128xf32>
    %429 = arith.mulf %428, %426 : vector<1x128xf32>
    %c60 = arith.constant 60 : index
    %c0_308 = arith.constant 0 : index
    %430 = vector.load %arg7[%c60, %c0_308] : memref<128x128xf32, #tpu.memory_space<vmem>>, vector<1x128xf32>
    %cst_309 = arith.constant 0.00389862806 : f32
    %431 = vector.broadcast %cst_309 : f32 to vector<1x128xf32>
    %432 = arith.mulf %431, %430 : vector<1x128xf32>
    %433 = arith.addf %429, %432 : vector<1x128xf32>
    %c60_310 = arith.constant 60 : index
    %c0_311 = arith.constant 0 : index
    %434 = vector.load %arg8[%c60_310, %c0_311] : memref<128x128xf32, #tpu.memory_space<vmem>>, vector<1x128xf32>
    tpu.vector_store %arg8[%c60_310, %c0_311], %433 {strides = array<i32>} : memref<128x128xf32, #tpu.memory_space<vmem>>, vector<1x128xf32>,
    %cst_312 = arith.constant 0.996101379 : f32
    %435 = vector.broadcast %cst_312 : f32 to vector<1x128xf32>
    %436 = arith.mulf %435, %433 : vector<1x128xf32>
    %c61 = arith.constant 61 : index
    %c0_313 = arith.constant 0 : index
    %437 = vector.load %arg7[%c61, %c0_313] : memref<128x128xf32, #tpu.memory_space<vmem>>, vector<1x128xf32>
    %cst_314 = arith.constant 0.00389862806 : f32
    %438 = vector.broadcast %cst_314 : f32 to vector<1x128xf32>
    %439 = arith.mulf %438, %437 : vector<1x128xf32>
    %440 = arith.addf %436, %439 : vector<1x128xf32>
    %c61_315 = arith.constant 61 : index
    %c0_316 = arith.constant 0 : index
    %441 = vector.load %arg8[%c61_315, %c0_316] : memref<128x128xf32, #tpu.memory_space<vmem>>, vector<1x128xf32>
    tpu.vector_store %arg8[%c61_315, %c0_316], %440 {strides = array<i32>} : memref<128x128xf32, #tpu.memory_space<vmem>>, vector<1x128xf32>,
    %cst_317 = arith.constant 0.996101379 : f32
    %442 = vector.broadcast %cst_317 : f32 to vector<1x128xf32>
    %443 = arith.mulf %442, %440 : vector<1x128xf32>
    %c62 = arith.constant 62 : index
    %c0_318 = arith.constant 0 : index
    %444 = vector.load %arg7[%c62, %c0_318] : memref<128x128xf32, #tpu.memory_space<vmem>>, vector<1x128xf32>
    %cst_319 = arith.constant 0.00389862806 : f32
    %445 = vector.broadcast %cst_319 : f32 to vector<1x128xf32>
    %446 = arith.mulf %445, %444 : vector<1x128xf32>
    %447 = arith.addf %443, %446 : vector<1x128xf32>
    %c62_320 = arith.constant 62 : index
    %c0_321 = arith.constant 0 : index
    %448 = vector.load %arg8[%c62_320, %c0_321] : memref<128x128xf32, #tpu.memory_space<vmem>>, vector<1x128xf32>
    tpu.vector_store %arg8[%c62_320, %c0_321], %447 {strides = array<i32>} : memref<128x128xf32, #tpu.memory_space<vmem>>, vector<1x128xf32>,
    %cst_322 = arith.constant 0.996101379 : f32
    %449 = vector.broadcast %cst_322 : f32 to vector<1x128xf32>
    %450 = arith.mulf %449, %447 : vector<1x128xf32>
    %c63 = arith.constant 63 : index
    %c0_323 = arith.constant 0 : index
    %451 = vector.load %arg7[%c63, %c0_323] : memref<128x128xf32, #tpu.memory_space<vmem>>, vector<1x128xf32>
    %cst_324 = arith.constant 0.00389862806 : f32
    %452 = vector.broadcast %cst_324 : f32 to vector<1x128xf32>
    %453 = arith.mulf %452, %451 : vector<1x128xf32>
    %454 = arith.addf %450, %453 : vector<1x128xf32>
    %c63_325 = arith.constant 63 : index
    %c0_326 = arith.constant 0 : index
    %455 = vector.load %arg8[%c63_325, %c0_326] : memref<128x128xf32, #tpu.memory_space<vmem>>, vector<1x128xf32>
    tpu.vector_store %arg8[%c63_325, %c0_326], %454 {strides = array<i32>} : memref<128x128xf32, #tpu.memory_space<vmem>>, vector<1x128xf32>,
    %cst_327 = arith.constant 0.996101379 : f32
    %456 = vector.broadcast %cst_327 : f32 to vector<1x128xf32>
    %457 = arith.mulf %456, %454 : vector<1x128xf32>
    %c64 = arith.constant 64 : index
    %c0_328 = arith.constant 0 : index
    %458 = vector.load %arg7[%c64, %c0_328] : memref<128x128xf32, #tpu.memory_space<vmem>>, vector<1x128xf32>
    %cst_329 = arith.constant 0.00389862806 : f32
    %459 = vector.broadcast %cst_329 : f32 to vector<1x128xf32>
    %460 = arith.mulf %459, %458 : vector<1x128xf32>
    %461 = arith.addf %457, %460 : vector<1x128xf32>
    %c64_330 = arith.constant 64 : index
    %c0_331 = arith.constant 0 : index
    %462 = vector.load %arg8[%c64_330, %c0_331] : memref<128x128xf32, #tpu.memory_space<vmem>>, vector<1x128xf32>
    tpu.vector_store %arg8[%c64_330, %c0_331], %461 {strides = array<i32>} : memref<128x128xf32, #tpu.memory_space<vmem>>, vector<1x128xf32>,
    %cst_332 = arith.constant 0.996101379 : f32
    %463 = vector.broadcast %cst_332 : f32 to vector<1x128xf32>
    %464 = arith.mulf %463, %461 : vector<1x128xf32>
    %c65 = arith.constant 65 : index
    %c0_333 = arith.constant 0 : index
    %465 = vector.load %arg7[%c65, %c0_333] : memref<128x128xf32, #tpu.memory_space<vmem>>, vector<1x128xf32>
    %cst_334 = arith.constant 0.00389862806 : f32
    %466 = vector.broadcast %cst_334 : f32 to vector<1x128xf32>
    %467 = arith.mulf %466, %465 : vector<1x128xf32>
    %468 = arith.addf %464, %467 : vector<1x128xf32>
    %c65_335 = arith.constant 65 : index
    %c0_336 = arith.constant 0 : index
    %469 = vector.load %arg8[%c65_335, %c0_336] : memref<128x128xf32, #tpu.memory_space<vmem>>, vector<1x128xf32>
    tpu.vector_store %arg8[%c65_335, %c0_336], %468 {strides = array<i32>} : memref<128x128xf32, #tpu.memory_space<vmem>>, vector<1x128xf32>,
    %cst_337 = arith.constant 0.996101379 : f32
    %470 = vector.broadcast %cst_337 : f32 to vector<1x128xf32>
    %471 = arith.mulf %470, %468 : vector<1x128xf32>
    %c66 = arith.constant 66 : index
    %c0_338 = arith.constant 0 : index
    %472 = vector.load %arg7[%c66, %c0_338] : memref<128x128xf32, #tpu.memory_space<vmem>>, vector<1x128xf32>
    %cst_339 = arith.constant 0.00389862806 : f32
    %473 = vector.broadcast %cst_339 : f32 to vector<1x128xf32>
    %474 = arith.mulf %473, %472 : vector<1x128xf32>
    %475 = arith.addf %471, %474 : vector<1x128xf32>
    %c66_340 = arith.constant 66 : index
    %c0_341 = arith.constant 0 : index
    %476 = vector.load %arg8[%c66_340, %c0_341] : memref<128x128xf32, #tpu.memory_space<vmem>>, vector<1x128xf32>
    tpu.vector_store %arg8[%c66_340, %c0_341], %475 {strides = array<i32>} : memref<128x128xf32, #tpu.memory_space<vmem>>, vector<1x128xf32>,
    %cst_342 = arith.constant 0.996101379 : f32
    %477 = vector.broadcast %cst_342 : f32 to vector<1x128xf32>
    %478 = arith.mulf %477, %475 : vector<1x128xf32>
    %c67 = arith.constant 67 : index
    %c0_343 = arith.constant 0 : index
    %479 = vector.load %arg7[%c67, %c0_343] : memref<128x128xf32, #tpu.memory_space<vmem>>, vector<1x128xf32>
    %cst_344 = arith.constant 0.00389862806 : f32
    %480 = vector.broadcast %cst_344 : f32 to vector<1x128xf32>
    %481 = arith.mulf %480, %479 : vector<1x128xf32>
    %482 = arith.addf %478, %481 : vector<1x128xf32>
    %c67_345 = arith.constant 67 : index
    %c0_346 = arith.constant 0 : index
    %483 = vector.load %arg8[%c67_345, %c0_346] : memref<128x128xf32, #tpu.memory_space<vmem>>, vector<1x128xf32>
    tpu.vector_store %arg8[%c67_345, %c0_346], %482 {strides = array<i32>} : memref<128x128xf32, #tpu.memory_space<vmem>>, vector<1x128xf32>,
    %cst_347 = arith.constant 0.996101379 : f32
    %484 = vector.broadcast %cst_347 : f32 to vector<1x128xf32>
    %485 = arith.mulf %484, %482 : vector<1x128xf32>
    %c68 = arith.constant 68 : index
    %c0_348 = arith.constant 0 : index
    %486 = vector.load %arg7[%c68, %c0_348] : memref<128x128xf32, #tpu.memory_space<vmem>>, vector<1x128xf32>
    %cst_349 = arith.constant 0.00389862806 : f32
    %487 = vector.broadcast %cst_349 : f32 to vector<1x128xf32>
    %488 = arith.mulf %487, %486 : vector<1x128xf32>
    %489 = arith.addf %485, %488 : vector<1x128xf32>
    %c68_350 = arith.constant 68 : index
    %c0_351 = arith.constant 0 : index
    %490 = vector.load %arg8[%c68_350, %c0_351] : memref<128x128xf32, #tpu.memory_space<vmem>>, vector<1x128xf32>
    tpu.vector_store %arg8[%c68_350, %c0_351], %489 {strides = array<i32>} : memref<128x128xf32, #tpu.memory_space<vmem>>, vector<1x128xf32>,
    %cst_352 = arith.constant 0.996101379 : f32
    %491 = vector.broadcast %cst_352 : f32 to vector<1x128xf32>
    %492 = arith.mulf %491, %489 : vector<1x128xf32>
    %c69 = arith.constant 69 : index
    %c0_353 = arith.constant 0 : index
    %493 = vector.load %arg7[%c69, %c0_353] : memref<128x128xf32, #tpu.memory_space<vmem>>, vector<1x128xf32>
    %cst_354 = arith.constant 0.00389862806 : f32
    %494 = vector.broadcast %cst_354 : f32 to vector<1x128xf32>
    %495 = arith.mulf %494, %493 : vector<1x128xf32>
    %496 = arith.addf %492, %495 : vector<1x128xf32>
    %c69_355 = arith.constant 69 : index
    %c0_356 = arith.constant 0 : index
    %497 = vector.load %arg8[%c69_355, %c0_356] : memref<128x128xf32, #tpu.memory_space<vmem>>, vector<1x128xf32>
    tpu.vector_store %arg8[%c69_355, %c0_356], %496 {strides = array<i32>} : memref<128x128xf32, #tpu.memory_space<vmem>>, vector<1x128xf32>,
    %cst_357 = arith.constant 0.996101379 : f32
    %498 = vector.broadcast %cst_357 : f32 to vector<1x128xf32>
    %499 = arith.mulf %498, %496 : vector<1x128xf32>
    %c70 = arith.constant 70 : index
    %c0_358 = arith.constant 0 : index
    %500 = vector.load %arg7[%c70, %c0_358] : memref<128x128xf32, #tpu.memory_space<vmem>>, vector<1x128xf32>
    %cst_359 = arith.constant 0.00389862806 : f32
    %501 = vector.broadcast %cst_359 : f32 to vector<1x128xf32>
    %502 = arith.mulf %501, %500 : vector<1x128xf32>
    %503 = arith.addf %499, %502 : vector<1x128xf32>
    %c70_360 = arith.constant 70 : index
    %c0_361 = arith.constant 0 : index
    %504 = vector.load %arg8[%c70_360, %c0_361] : memref<128x128xf32, #tpu.memory_space<vmem>>, vector<1x128xf32>
    tpu.vector_store %arg8[%c70_360, %c0_361], %503 {strides = array<i32>} : memref<128x128xf32, #tpu.memory_space<vmem>>, vector<1x128xf32>,
    %cst_362 = arith.constant 0.996101379 : f32
    %505 = vector.broadcast %cst_362 : f32 to vector<1x128xf32>
    %506 = arith.mulf %505, %503 : vector<1x128xf32>
    %c71 = arith.constant 71 : index
    %c0_363 = arith.constant 0 : index
    %507 = vector.load %arg7[%c71, %c0_363] : memref<128x128xf32, #tpu.memory_space<vmem>>, vector<1x128xf32>
    %cst_364 = arith.constant 0.00389862806 : f32
    %508 = vector.broadcast %cst_364 : f32 to vector<1x128xf32>
    %509 = arith.mulf %508, %507 : vector<1x128xf32>
    %510 = arith.addf %506, %509 : vector<1x128xf32>
    %c71_365 = arith.constant 71 : index
    %c0_366 = arith.constant 0 : index
    %511 = vector.load %arg8[%c71_365, %c0_366] : memref<128x128xf32, #tpu.memory_space<vmem>>, vector<1x128xf32>
    tpu.vector_store %arg8[%c71_365, %c0_366], %510 {strides = array<i32>} : memref<128x128xf32, #tpu.memory_space<vmem>>, vector<1x128xf32>,
    %cst_367 = arith.constant 0.996101379 : f32
    %512 = vector.broadcast %cst_367 : f32 to vector<1x128xf32>
    %513 = arith.mulf %512, %510 : vector<1x128xf32>
    %c72 = arith.constant 72 : index
    %c0_368 = arith.constant 0 : index
    %514 = vector.load %arg7[%c72, %c0_368] : memref<128x128xf32, #tpu.memory_space<vmem>>, vector<1x128xf32>
    %cst_369 = arith.constant 0.00389862806 : f32
    %515 = vector.broadcast %cst_369 : f32 to vector<1x128xf32>
    %516 = arith.mulf %515, %514 : vector<1x128xf32>
    %517 = arith.addf %513, %516 : vector<1x128xf32>
    %c72_370 = arith.constant 72 : index
    %c0_371 = arith.constant 0 : index
    %518 = vector.load %arg8[%c72_370, %c0_371] : memref<128x128xf32, #tpu.memory_space<vmem>>, vector<1x128xf32>
    tpu.vector_store %arg8[%c72_370, %c0_371], %517 {strides = array<i32>} : memref<128x128xf32, #tpu.memory_space<vmem>>, vector<1x128xf32>,
    %cst_372 = arith.constant 0.996101379 : f32
    %519 = vector.broadcast %cst_372 : f32 to vector<1x128xf32>
    %520 = arith.mulf %519, %517 : vector<1x128xf32>
    %c73 = arith.constant 73 : index
    %c0_373 = arith.constant 0 : index
    %521 = vector.load %arg7[%c73, %c0_373] : memref<128x128xf32, #tpu.memory_space<vmem>>, vector<1x128xf32>
    %cst_374 = arith.constant 0.00389862806 : f32
    %522 = vector.broadcast %cst_374 : f32 to vector<1x128xf32>
    %523 = arith.mulf %522, %521 : vector<1x128xf32>
    %524 = arith.addf %520, %523 : vector<1x128xf32>
    %c73_375 = arith.constant 73 : index
    %c0_376 = arith.constant 0 : index
    %525 = vector.load %arg8[%c73_375, %c0_376] : memref<128x128xf32, #tpu.memory_space<vmem>>, vector<1x128xf32>
    tpu.vector_store %arg8[%c73_375, %c0_376], %524 {strides = array<i32>} : memref<128x128xf32, #tpu.memory_space<vmem>>, vector<1x128xf32>,
    %cst_377 = arith.constant 0.996101379 : f32
    %526 = vector.broadcast %cst_377 : f32 to vector<1x128xf32>
    %527 = arith.mulf %526, %524 : vector<1x128xf32>
    %c74 = arith.constant 74 : index
    %c0_378 = arith.constant 0 : index
    %528 = vector.load %arg7[%c74, %c0_378] : memref<128x128xf32, #tpu.memory_space<vmem>>, vector<1x128xf32>
    %cst_379 = arith.constant 0.00389862806 : f32
    %529 = vector.broadcast %cst_379 : f32 to vector<1x128xf32>
    %530 = arith.mulf %529, %528 : vector<1x128xf32>
    %531 = arith.addf %527, %530 : vector<1x128xf32>
    %c74_380 = arith.constant 74 : index
    %c0_381 = arith.constant 0 : index
    %532 = vector.load %arg8[%c74_380, %c0_381] : memref<128x128xf32, #tpu.memory_space<vmem>>, vector<1x128xf32>
    tpu.vector_store %arg8[%c74_380, %c0_381], %531 {strides = array<i32>} : memref<128x128xf32, #tpu.memory_space<vmem>>, vector<1x128xf32>,
    %cst_382 = arith.constant 0.996101379 : f32
    %533 = vector.broadcast %cst_382 : f32 to vector<1x128xf32>
    %534 = arith.mulf %533, %531 : vector<1x128xf32>
    %c75 = arith.constant 75 : index
    %c0_383 = arith.constant 0 : index
    %535 = vector.load %arg7[%c75, %c0_383] : memref<128x128xf32, #tpu.memory_space<vmem>>, vector<1x128xf32>
    %cst_384 = arith.constant 0.00389862806 : f32
    %536 = vector.broadcast %cst_384 : f32 to vector<1x128xf32>
    %537 = arith.mulf %536, %535 : vector<1x128xf32>
    %538 = arith.addf %534, %537 : vector<1x128xf32>
    %c75_385 = arith.constant 75 : index
    %c0_386 = arith.constant 0 : index
    %539 = vector.load %arg8[%c75_385, %c0_386] : memref<128x128xf32, #tpu.memory_space<vmem>>, vector<1x128xf32>
    tpu.vector_store %arg8[%c75_385, %c0_386], %538 {strides = array<i32>} : memref<128x128xf32, #tpu.memory_space<vmem>>, vector<1x128xf32>,
    %cst_387 = arith.constant 0.996101379 : f32
    %540 = vector.broadcast %cst_387 : f32 to vector<1x128xf32>
    %541 = arith.mulf %540, %538 : vector<1x128xf32>
    %c76 = arith.constant 76 : index
    %c0_388 = arith.constant 0 : index
    %542 = vector.load %arg7[%c76, %c0_388] : memref<128x128xf32, #tpu.memory_space<vmem>>, vector<1x128xf32>
    %cst_389 = arith.constant 0.00389862806 : f32
    %543 = vector.broadcast %cst_389 : f32 to vector<1x128xf32>
    %544 = arith.mulf %543, %542 : vector<1x128xf32>
    %545 = arith.addf %541, %544 : vector<1x128xf32>
    %c76_390 = arith.constant 76 : index
    %c0_391 = arith.constant 0 : index
    %546 = vector.load %arg8[%c76_390, %c0_391] : memref<128x128xf32, #tpu.memory_space<vmem>>, vector<1x128xf32>
    tpu.vector_store %arg8[%c76_390, %c0_391], %545 {strides = array<i32>} : memref<128x128xf32, #tpu.memory_space<vmem>>, vector<1x128xf32>,
    %cst_392 = arith.constant 0.996101379 : f32
    %547 = vector.broadcast %cst_392 : f32 to vector<1x128xf32>
    %548 = arith.mulf %547, %545 : vector<1x128xf32>
    %c77 = arith.constant 77 : index
    %c0_393 = arith.constant 0 : index
    %549 = vector.load %arg7[%c77, %c0_393] : memref<128x128xf32, #tpu.memory_space<vmem>>, vector<1x128xf32>
    %cst_394 = arith.constant 0.00389862806 : f32
    %550 = vector.broadcast %cst_394 : f32 to vector<1x128xf32>
    %551 = arith.mulf %550, %549 : vector<1x128xf32>
    %552 = arith.addf %548, %551 : vector<1x128xf32>
    %c77_395 = arith.constant 77 : index
    %c0_396 = arith.constant 0 : index
    %553 = vector.load %arg8[%c77_395, %c0_396] : memref<128x128xf32, #tpu.memory_space<vmem>>, vector<1x128xf32>
    tpu.vector_store %arg8[%c77_395, %c0_396], %552 {strides = array<i32>} : memref<128x128xf32, #tpu.memory_space<vmem>>, vector<1x128xf32>,
    %cst_397 = arith.constant 0.996101379 : f32
    %554 = vector.broadcast %cst_397 : f32 to vector<1x128xf32>
    %555 = arith.mulf %554, %552 : vector<1x128xf32>
    %c78 = arith.constant 78 : index
    %c0_398 = arith.constant 0 : index
    %556 = vector.load %arg7[%c78, %c0_398] : memref<128x128xf32, #tpu.memory_space<vmem>>, vector<1x128xf32>
    %cst_399 = arith.constant 0.00389862806 : f32
    %557 = vector.broadcast %cst_399 : f32 to vector<1x128xf32>
    %558 = arith.mulf %557, %556 : vector<1x128xf32>
    %559 = arith.addf %555, %558 : vector<1x128xf32>
    %c78_400 = arith.constant 78 : index
    %c0_401 = arith.constant 0 : index
    %560 = vector.load %arg8[%c78_400, %c0_401] : memref<128x128xf32, #tpu.memory_space<vmem>>, vector<1x128xf32>
    tpu.vector_store %arg8[%c78_400, %c0_401], %559 {strides = array<i32>} : memref<128x128xf32, #tpu.memory_space<vmem>>, vector<1x128xf32>,
    %cst_402 = arith.constant 0.996101379 : f32
    %561 = vector.broadcast %cst_402 : f32 to vector<1x128xf32>
    %562 = arith.mulf %561, %559 : vector<1x128xf32>
    %c79 = arith.constant 79 : index
    %c0_403 = arith.constant 0 : index
    %563 = vector.load %arg7[%c79, %c0_403] : memref<128x128xf32, #tpu.memory_space<vmem>>, vector<1x128xf32>
    %cst_404 = arith.constant 0.00389862806 : f32
    %564 = vector.broadcast %cst_404 : f32 to vector<1x128xf32>
    %565 = arith.mulf %564, %563 : vector<1x128xf32>
    %566 = arith.addf %562, %565 : vector<1x128xf32>
    %c79_405 = arith.constant 79 : index
    %c0_406 = arith.constant 0 : index
    %567 = vector.load %arg8[%c79_405, %c0_406] : memref<128x128xf32, #tpu.memory_space<vmem>>, vector<1x128xf32>
    tpu.vector_store %arg8[%c79_405, %c0_406], %566 {strides = array<i32>} : memref<128x128xf32, #tpu.memory_space<vmem>>, vector<1x128xf32>,
    %cst_407 = arith.constant 0.996101379 : f32
    %568 = vector.broadcast %cst_407 : f32 to vector<1x128xf32>
    %569 = arith.mulf %568, %566 : vector<1x128xf32>
    %c80 = arith.constant 80 : index
    %c0_408 = arith.constant 0 : index
    %570 = vector.load %arg7[%c80, %c0_408] : memref<128x128xf32, #tpu.memory_space<vmem>>, vector<1x128xf32>
    %cst_409 = arith.constant 0.00389862806 : f32
    %571 = vector.broadcast %cst_409 : f32 to vector<1x128xf32>
    %572 = arith.mulf %571, %570 : vector<1x128xf32>
    %573 = arith.addf %569, %572 : vector<1x128xf32>
    %c80_410 = arith.constant 80 : index
    %c0_411 = arith.constant 0 : index
    %574 = vector.load %arg8[%c80_410, %c0_411] : memref<128x128xf32, #tpu.memory_space<vmem>>, vector<1x128xf32>
    tpu.vector_store %arg8[%c80_410, %c0_411], %573 {strides = array<i32>} : memref<128x128xf32, #tpu.memory_space<vmem>>, vector<1x128xf32>,
    %cst_412 = arith.constant 0.996101379 : f32
    %575 = vector.broadcast %cst_412 : f32 to vector<1x128xf32>
    %576 = arith.mulf %575, %573 : vector<1x128xf32>
    %c81 = arith.constant 81 : index
    %c0_413 = arith.constant 0 : index
    %577 = vector.load %arg7[%c81, %c0_413] : memref<128x128xf32, #tpu.memory_space<vmem>>, vector<1x128xf32>
    %cst_414 = arith.constant 0.00389862806 : f32
    %578 = vector.broadcast %cst_414 : f32 to vector<1x128xf32>
    %579 = arith.mulf %578, %577 : vector<1x128xf32>
    %580 = arith.addf %576, %579 : vector<1x128xf32>
    %c81_415 = arith.constant 81 : index
    %c0_416 = arith.constant 0 : index
    %581 = vector.load %arg8[%c81_415, %c0_416] : memref<128x128xf32, #tpu.memory_space<vmem>>, vector<1x128xf32>
    tpu.vector_store %arg8[%c81_415, %c0_416], %580 {strides = array<i32>} : memref<128x128xf32, #tpu.memory_space<vmem>>, vector<1x128xf32>,
    %cst_417 = arith.constant 0.996101379 : f32
    %582 = vector.broadcast %cst_417 : f32 to vector<1x128xf32>
    %583 = arith.mulf %582, %580 : vector<1x128xf32>
    %c82 = arith.constant 82 : index
    %c0_418 = arith.constant 0 : index
    %584 = vector.load %arg7[%c82, %c0_418] : memref<128x128xf32, #tpu.memory_space<vmem>>, vector<1x128xf32>
    %cst_419 = arith.constant 0.00389862806 : f32
    %585 = vector.broadcast %cst_419 : f32 to vector<1x128xf32>
    %586 = arith.mulf %585, %584 : vector<1x128xf32>
    %587 = arith.addf %583, %586 : vector<1x128xf32>
    %c82_420 = arith.constant 82 : index
    %c0_421 = arith.constant 0 : index
    %588 = vector.load %arg8[%c82_420, %c0_421] : memref<128x128xf32, #tpu.memory_space<vmem>>, vector<1x128xf32>
    tpu.vector_store %arg8[%c82_420, %c0_421], %587 {strides = array<i32>} : memref<128x128xf32, #tpu.memory_space<vmem>>, vector<1x128xf32>,
    %cst_422 = arith.constant 0.996101379 : f32
    %589 = vector.broadcast %cst_422 : f32 to vector<1x128xf32>
    %590 = arith.mulf %589, %587 : vector<1x128xf32>
    %c83 = arith.constant 83 : index
    %c0_423 = arith.constant 0 : index
    %591 = vector.load %arg7[%c83, %c0_423] : memref<128x128xf32, #tpu.memory_space<vmem>>, vector<1x128xf32>
    %cst_424 = arith.constant 0.00389862806 : f32
    %592 = vector.broadcast %cst_424 : f32 to vector<1x128xf32>
    %593 = arith.mulf %592, %591 : vector<1x128xf32>
    %594 = arith.addf %590, %593 : vector<1x128xf32>
    %c83_425 = arith.constant 83 : index
    %c0_426 = arith.constant 0 : index
    %595 = vector.load %arg8[%c83_425, %c0_426] : memref<128x128xf32, #tpu.memory_space<vmem>>, vector<1x128xf32>
    tpu.vector_store %arg8[%c83_425, %c0_426], %594 {strides = array<i32>} : memref<128x128xf32, #tpu.memory_space<vmem>>, vector<1x128xf32>,
    %cst_427 = arith.constant 0.996101379 : f32
    %596 = vector.broadcast %cst_427 : f32 to vector<1x128xf32>
    %597 = arith.mulf %596, %594 : vector<1x128xf32>
    %c84 = arith.constant 84 : index
    %c0_428 = arith.constant 0 : index
    %598 = vector.load %arg7[%c84, %c0_428] : memref<128x128xf32, #tpu.memory_space<vmem>>, vector<1x128xf32>
    %cst_429 = arith.constant 0.00389862806 : f32
    %599 = vector.broadcast %cst_429 : f32 to vector<1x128xf32>
    %600 = arith.mulf %599, %598 : vector<1x128xf32>
    %601 = arith.addf %597, %600 : vector<1x128xf32>
    %c84_430 = arith.constant 84 : index
    %c0_431 = arith.constant 0 : index
    %602 = vector.load %arg8[%c84_430, %c0_431] : memref<128x128xf32, #tpu.memory_space<vmem>>, vector<1x128xf32>
    tpu.vector_store %arg8[%c84_430, %c0_431], %601 {strides = array<i32>} : memref<128x128xf32, #tpu.memory_space<vmem>>, vector<1x128xf32>,
    %cst_432 = arith.constant 0.996101379 : f32
    %603 = vector.broadcast %cst_432 : f32 to vector<1x128xf32>
    %604 = arith.mulf %603, %601 : vector<1x128xf32>
    %c85 = arith.constant 85 : index
    %c0_433 = arith.constant 0 : index
    %605 = vector.load %arg7[%c85, %c0_433] : memref<128x128xf32, #tpu.memory_space<vmem>>, vector<1x128xf32>
    %cst_434 = arith.constant 0.00389862806 : f32
    %606 = vector.broadcast %cst_434 : f32 to vector<1x128xf32>
    %607 = arith.mulf %606, %605 : vector<1x128xf32>
    %608 = arith.addf %604, %607 : vector<1x128xf32>
    %c85_435 = arith.constant 85 : index
    %c0_436 = arith.constant 0 : index
    %609 = vector.load %arg8[%c85_435, %c0_436] : memref<128x128xf32, #tpu.memory_space<vmem>>, vector<1x128xf32>
    tpu.vector_store %arg8[%c85_435, %c0_436], %608 {strides = array<i32>} : memref<128x128xf32, #tpu.memory_space<vmem>>, vector<1x128xf32>,
    %cst_437 = arith.constant 0.996101379 : f32
    %610 = vector.broadcast %cst_437 : f32 to vector<1x128xf32>
    %611 = arith.mulf %610, %608 : vector<1x128xf32>
    %c86 = arith.constant 86 : index
    %c0_438 = arith.constant 0 : index
    %612 = vector.load %arg7[%c86, %c0_438] : memref<128x128xf32, #tpu.memory_space<vmem>>, vector<1x128xf32>
    %cst_439 = arith.constant 0.00389862806 : f32
    %613 = vector.broadcast %cst_439 : f32 to vector<1x128xf32>
    %614 = arith.mulf %613, %612 : vector<1x128xf32>
    %615 = arith.addf %611, %614 : vector<1x128xf32>
    %c86_440 = arith.constant 86 : index
    %c0_441 = arith.constant 0 : index
    %616 = vector.load %arg8[%c86_440, %c0_441] : memref<128x128xf32, #tpu.memory_space<vmem>>, vector<1x128xf32>
    tpu.vector_store %arg8[%c86_440, %c0_441], %615 {strides = array<i32>} : memref<128x128xf32, #tpu.memory_space<vmem>>, vector<1x128xf32>,
    %cst_442 = arith.constant 0.996101379 : f32
    %617 = vector.broadcast %cst_442 : f32 to vector<1x128xf32>
    %618 = arith.mulf %617, %615 : vector<1x128xf32>
    %c87 = arith.constant 87 : index
    %c0_443 = arith.constant 0 : index
    %619 = vector.load %arg7[%c87, %c0_443] : memref<128x128xf32, #tpu.memory_space<vmem>>, vector<1x128xf32>
    %cst_444 = arith.constant 0.00389862806 : f32
    %620 = vector.broadcast %cst_444 : f32 to vector<1x128xf32>
    %621 = arith.mulf %620, %619 : vector<1x128xf32>
    %622 = arith.addf %618, %621 : vector<1x128xf32>
    %c87_445 = arith.constant 87 : index
    %c0_446 = arith.constant 0 : index
    %623 = vector.load %arg8[%c87_445, %c0_446] : memref<128x128xf32, #tpu.memory_space<vmem>>, vector<1x128xf32>
    tpu.vector_store %arg8[%c87_445, %c0_446], %622 {strides = array<i32>} : memref<128x128xf32, #tpu.memory_space<vmem>>, vector<1x128xf32>,
    %cst_447 = arith.constant 0.996101379 : f32
    %624 = vector.broadcast %cst_447 : f32 to vector<1x128xf32>
    %625 = arith.mulf %624, %622 : vector<1x128xf32>
    %c88 = arith.constant 88 : index
    %c0_448 = arith.constant 0 : index
    %626 = vector.load %arg7[%c88, %c0_448] : memref<128x128xf32, #tpu.memory_space<vmem>>, vector<1x128xf32>
    %cst_449 = arith.constant 0.00389862806 : f32
    %627 = vector.broadcast %cst_449 : f32 to vector<1x128xf32>
    %628 = arith.mulf %627, %626 : vector<1x128xf32>
    %629 = arith.addf %625, %628 : vector<1x128xf32>
    %c88_450 = arith.constant 88 : index
    %c0_451 = arith.constant 0 : index
    %630 = vector.load %arg8[%c88_450, %c0_451] : memref<128x128xf32, #tpu.memory_space<vmem>>, vector<1x128xf32>
    tpu.vector_store %arg8[%c88_450, %c0_451], %629 {strides = array<i32>} : memref<128x128xf32, #tpu.memory_space<vmem>>, vector<1x128xf32>,
    %cst_452 = arith.constant 0.996101379 : f32
    %631 = vector.broadcast %cst_452 : f32 to vector<1x128xf32>
    %632 = arith.mulf %631, %629 : vector<1x128xf32>
    %c89 = arith.constant 89 : index
    %c0_453 = arith.constant 0 : index
    %633 = vector.load %arg7[%c89, %c0_453] : memref<128x128xf32, #tpu.memory_space<vmem>>, vector<1x128xf32>
    %cst_454 = arith.constant 0.00389862806 : f32
    %634 = vector.broadcast %cst_454 : f32 to vector<1x128xf32>
    %635 = arith.mulf %634, %633 : vector<1x128xf32>
    %636 = arith.addf %632, %635 : vector<1x128xf32>
    %c89_455 = arith.constant 89 : index
    %c0_456 = arith.constant 0 : index
    %637 = vector.load %arg8[%c89_455, %c0_456] : memref<128x128xf32, #tpu.memory_space<vmem>>, vector<1x128xf32>
    tpu.vector_store %arg8[%c89_455, %c0_456], %636 {strides = array<i32>} : memref<128x128xf32, #tpu.memory_space<vmem>>, vector<1x128xf32>,
    %cst_457 = arith.constant 0.996101379 : f32
    %638 = vector.broadcast %cst_457 : f32 to vector<1x128xf32>
    %639 = arith.mulf %638, %636 : vector<1x128xf32>
    %c90 = arith.constant 90 : index
    %c0_458 = arith.constant 0 : index
    %640 = vector.load %arg7[%c90, %c0_458] : memref<128x128xf32, #tpu.memory_space<vmem>>, vector<1x128xf32>
    %cst_459 = arith.constant 0.00389862806 : f32
    %641 = vector.broadcast %cst_459 : f32 to vector<1x128xf32>
    %642 = arith.mulf %641, %640 : vector<1x128xf32>
    %643 = arith.addf %639, %642 : vector<1x128xf32>
    %c90_460 = arith.constant 90 : index
    %c0_461 = arith.constant 0 : index
    %644 = vector.load %arg8[%c90_460, %c0_461] : memref<128x128xf32, #tpu.memory_space<vmem>>, vector<1x128xf32>
    tpu.vector_store %arg8[%c90_460, %c0_461], %643 {strides = array<i32>} : memref<128x128xf32, #tpu.memory_space<vmem>>, vector<1x128xf32>,
    %cst_462 = arith.constant 0.996101379 : f32
    %645 = vector.broadcast %cst_462 : f32 to vector<1x128xf32>
    %646 = arith.mulf %645, %643 : vector<1x128xf32>
    %c91 = arith.constant 91 : index
    %c0_463 = arith.constant 0 : index
    %647 = vector.load %arg7[%c91, %c0_463] : memref<128x128xf32, #tpu.memory_space<vmem>>, vector<1x128xf32>
    %cst_464 = arith.constant 0.00389862806 : f32
    %648 = vector.broadcast %cst_464 : f32 to vector<1x128xf32>
    %649 = arith.mulf %648, %647 : vector<1x128xf32>
    %650 = arith.addf %646, %649 : vector<1x128xf32>
    %c91_465 = arith.constant 91 : index
    %c0_466 = arith.constant 0 : index
    %651 = vector.load %arg8[%c91_465, %c0_466] : memref<128x128xf32, #tpu.memory_space<vmem>>, vector<1x128xf32>
    tpu.vector_store %arg8[%c91_465, %c0_466], %650 {strides = array<i32>} : memref<128x128xf32, #tpu.memory_space<vmem>>, vector<1x128xf32>,
    %cst_467 = arith.constant 0.996101379 : f32
    %652 = vector.broadcast %cst_467 : f32 to vector<1x128xf32>
    %653 = arith.mulf %652, %650 : vector<1x128xf32>
    %c92 = arith.constant 92 : index
    %c0_468 = arith.constant 0 : index
    %654 = vector.load %arg7[%c92, %c0_468] : memref<128x128xf32, #tpu.memory_space<vmem>>, vector<1x128xf32>
    %cst_469 = arith.constant 0.00389862806 : f32
    %655 = vector.broadcast %cst_469 : f32 to vector<1x128xf32>
    %656 = arith.mulf %655, %654 : vector<1x128xf32>
    %657 = arith.addf %653, %656 : vector<1x128xf32>
    %c92_470 = arith.constant 92 : index
    %c0_471 = arith.constant 0 : index
    %658 = vector.load %arg8[%c92_470, %c0_471] : memref<128x128xf32, #tpu.memory_space<vmem>>, vector<1x128xf32>
    tpu.vector_store %arg8[%c92_470, %c0_471], %657 {strides = array<i32>} : memref<128x128xf32, #tpu.memory_space<vmem>>, vector<1x128xf32>,
    %cst_472 = arith.constant 0.996101379 : f32
    %659 = vector.broadcast %cst_472 : f32 to vector<1x128xf32>
    %660 = arith.mulf %659, %657 : vector<1x128xf32>
    %c93 = arith.constant 93 : index
    %c0_473 = arith.constant 0 : index
    %661 = vector.load %arg7[%c93, %c0_473] : memref<128x128xf32, #tpu.memory_space<vmem>>, vector<1x128xf32>
    %cst_474 = arith.constant 0.00389862806 : f32
    %662 = vector.broadcast %cst_474 : f32 to vector<1x128xf32>
    %663 = arith.mulf %662, %661 : vector<1x128xf32>
    %664 = arith.addf %660, %663 : vector<1x128xf32>
    %c93_475 = arith.constant 93 : index
    %c0_476 = arith.constant 0 : index
    %665 = vector.load %arg8[%c93_475, %c0_476] : memref<128x128xf32, #tpu.memory_space<vmem>>, vector<1x128xf32>
    tpu.vector_store %arg8[%c93_475, %c0_476], %664 {strides = array<i32>} : memref<128x128xf32, #tpu.memory_space<vmem>>, vector<1x128xf32>,
    %cst_477 = arith.constant 0.996101379 : f32
    %666 = vector.broadcast %cst_477 : f32 to vector<1x128xf32>
    %667 = arith.mulf %666, %664 : vector<1x128xf32>
    %c94 = arith.constant 94 : index
    %c0_478 = arith.constant 0 : index
    %668 = vector.load %arg7[%c94, %c0_478] : memref<128x128xf32, #tpu.memory_space<vmem>>, vector<1x128xf32>
    %cst_479 = arith.constant 0.00389862806 : f32
    %669 = vector.broadcast %cst_479 : f32 to vector<1x128xf32>
    %670 = arith.mulf %669, %668 : vector<1x128xf32>
    %671 = arith.addf %667, %670 : vector<1x128xf32>
    %c94_480 = arith.constant 94 : index
    %c0_481 = arith.constant 0 : index
    %672 = vector.load %arg8[%c94_480, %c0_481] : memref<128x128xf32, #tpu.memory_space<vmem>>, vector<1x128xf32>
    tpu.vector_store %arg8[%c94_480, %c0_481], %671 {strides = array<i32>} : memref<128x128xf32, #tpu.memory_space<vmem>>, vector<1x128xf32>,
    %cst_482 = arith.constant 0.996101379 : f32
    %673 = vector.broadcast %cst_482 : f32 to vector<1x128xf32>
    %674 = arith.mulf %673, %671 : vector<1x128xf32>
    %c95 = arith.constant 95 : index
    %c0_483 = arith.constant 0 : index
    %675 = vector.load %arg7[%c95, %c0_483] : memref<128x128xf32, #tpu.memory_space<vmem>>, vector<1x128xf32>
    %cst_484 = arith.constant 0.00389862806 : f32
    %676 = vector.broadcast %cst_484 : f32 to vector<1x128xf32>
    %677 = arith.mulf %676, %675 : vector<1x128xf32>
    %678 = arith.addf %674, %677 : vector<1x128xf32>
    %c95_485 = arith.constant 95 : index
    %c0_486 = arith.constant 0 : index
    %679 = vector.load %arg8[%c95_485, %c0_486] : memref<128x128xf32, #tpu.memory_space<vmem>>, vector<1x128xf32>
    tpu.vector_store %arg8[%c95_485, %c0_486], %678 {strides = array<i32>} : memref<128x128xf32, #tpu.memory_space<vmem>>, vector<1x128xf32>,
    %cst_487 = arith.constant 0.996101379 : f32
    %680 = vector.broadcast %cst_487 : f32 to vector<1x128xf32>
    %681 = arith.mulf %680, %678 : vector<1x128xf32>
    %c96 = arith.constant 96 : index
    %c0_488 = arith.constant 0 : index
    %682 = vector.load %arg7[%c96, %c0_488] : memref<128x128xf32, #tpu.memory_space<vmem>>, vector<1x128xf32>
    %cst_489 = arith.constant 0.00389862806 : f32
    %683 = vector.broadcast %cst_489 : f32 to vector<1x128xf32>
    %684 = arith.mulf %683, %682 : vector<1x128xf32>
    %685 = arith.addf %681, %684 : vector<1x128xf32>
    %c96_490 = arith.constant 96 : index
    %c0_491 = arith.constant 0 : index
    %686 = vector.load %arg8[%c96_490, %c0_491] : memref<128x128xf32, #tpu.memory_space<vmem>>, vector<1x128xf32>
    tpu.vector_store %arg8[%c96_490, %c0_491], %685 {strides = array<i32>} : memref<128x128xf32, #tpu.memory_space<vmem>>, vector<1x128xf32>,
    %cst_492 = arith.constant 0.996101379 : f32
    %687 = vector.broadcast %cst_492 : f32 to vector<1x128xf32>
    %688 = arith.mulf %687, %685 : vector<1x128xf32>
    %c97 = arith.constant 97 : index
    %c0_493 = arith.constant 0 : index
    %689 = vector.load %arg7[%c97, %c0_493] : memref<128x128xf32, #tpu.memory_space<vmem>>, vector<1x128xf32>
    %cst_494 = arith.constant 0.00389862806 : f32
    %690 = vector.broadcast %cst_494 : f32 to vector<1x128xf32>
    %691 = arith.mulf %690, %689 : vector<1x128xf32>
    %692 = arith.addf %688, %691 : vector<1x128xf32>
    %c97_495 = arith.constant 97 : index
    %c0_496 = arith.constant 0 : index
    %693 = vector.load %arg8[%c97_495, %c0_496] : memref<128x128xf32, #tpu.memory_space<vmem>>, vector<1x128xf32>
    tpu.vector_store %arg8[%c97_495, %c0_496], %692 {strides = array<i32>} : memref<128x128xf32, #tpu.memory_space<vmem>>, vector<1x128xf32>,
    %cst_497 = arith.constant 0.996101379 : f32
    %694 = vector.broadcast %cst_497 : f32 to vector<1x128xf32>
    %695 = arith.mulf %694, %692 : vector<1x128xf32>
    %c98 = arith.constant 98 : index
    %c0_498 = arith.constant 0 : index
    %696 = vector.load %arg7[%c98, %c0_498] : memref<128x128xf32, #tpu.memory_space<vmem>>, vector<1x128xf32>
    %cst_499 = arith.constant 0.00389862806 : f32
    %697 = vector.broadcast %cst_499 : f32 to vector<1x128xf32>
    %698 = arith.mulf %697, %696 : vector<1x128xf32>
    %699 = arith.addf %695, %698 : vector<1x128xf32>
    %c98_500 = arith.constant 98 : index
    %c0_501 = arith.constant 0 : index
    %700 = vector.load %arg8[%c98_500, %c0_501] : memref<128x128xf32, #tpu.memory_space<vmem>>, vector<1x128xf32>
    tpu.vector_store %arg8[%c98_500, %c0_501], %699 {strides = array<i32>} : memref<128x128xf32, #tpu.memory_space<vmem>>, vector<1x128xf32>,
    %cst_502 = arith.constant 0.996101379 : f32
    %701 = vector.broadcast %cst_502 : f32 to vector<1x128xf32>
    %702 = arith.mulf %701, %699 : vector<1x128xf32>
    %c99 = arith.constant 99 : index
    %c0_503 = arith.constant 0 : index
    %703 = vector.load %arg7[%c99, %c0_503] : memref<128x128xf32, #tpu.memory_space<vmem>>, vector<1x128xf32>
    %cst_504 = arith.constant 0.00389862806 : f32
    %704 = vector.broadcast %cst_504 : f32 to vector<1x128xf32>
    %705 = arith.mulf %704, %703 : vector<1x128xf32>
    %706 = arith.addf %702, %705 : vector<1x128xf32>
    %c99_505 = arith.constant 99 : index
    %c0_506 = arith.constant 0 : index
    %707 = vector.load %arg8[%c99_505, %c0_506] : memref<128x128xf32, #tpu.memory_space<vmem>>, vector<1x128xf32>
    tpu.vector_store %arg8[%c99_505, %c0_506], %706 {strides = array<i32>} : memref<128x128xf32, #tpu.memory_space<vmem>>, vector<1x128xf32>,
    %cst_507 = arith.constant 0.996101379 : f32
    %708 = vector.broadcast %cst_507 : f32 to vector<1x128xf32>
    %709 = arith.mulf %708, %706 : vector<1x128xf32>
    %c100 = arith.constant 100 : index
    %c0_508 = arith.constant 0 : index
    %710 = vector.load %arg7[%c100, %c0_508] : memref<128x128xf32, #tpu.memory_space<vmem>>, vector<1x128xf32>
    %cst_509 = arith.constant 0.00389862806 : f32
    %711 = vector.broadcast %cst_509 : f32 to vector<1x128xf32>
    %712 = arith.mulf %711, %710 : vector<1x128xf32>
    %713 = arith.addf %709, %712 : vector<1x128xf32>
    %c100_510 = arith.constant 100 : index
    %c0_511 = arith.constant 0 : index
    %714 = vector.load %arg8[%c100_510, %c0_511] : memref<128x128xf32, #tpu.memory_space<vmem>>, vector<1x128xf32>
    tpu.vector_store %arg8[%c100_510, %c0_511], %713 {strides = array<i32>} : memref<128x128xf32, #tpu.memory_space<vmem>>, vector<1x128xf32>,
    %cst_512 = arith.constant 0.996101379 : f32
    %715 = vector.broadcast %cst_512 : f32 to vector<1x128xf32>
    %716 = arith.mulf %715, %713 : vector<1x128xf32>
    %c101 = arith.constant 101 : index
    %c0_513 = arith.constant 0 : index
    %717 = vector.load %arg7[%c101, %c0_513] : memref<128x128xf32, #tpu.memory_space<vmem>>, vector<1x128xf32>
    %cst_514 = arith.constant 0.00389862806 : f32
    %718 = vector.broadcast %cst_514 : f32 to vector<1x128xf32>
    %719 = arith.mulf %718, %717 : vector<1x128xf32>
    %720 = arith.addf %716, %719 : vector<1x128xf32>
    %c101_515 = arith.constant 101 : index
    %c0_516 = arith.constant 0 : index
    %721 = vector.load %arg8[%c101_515, %c0_516] : memref<128x128xf32, #tpu.memory_space<vmem>>, vector<1x128xf32>
    tpu.vector_store %arg8[%c101_515, %c0_516], %720 {strides = array<i32>} : memref<128x128xf32, #tpu.memory_space<vmem>>, vector<1x128xf32>,
    %cst_517 = arith.constant 0.996101379 : f32
    %722 = vector.broadcast %cst_517 : f32 to vector<1x128xf32>
    %723 = arith.mulf %722, %720 : vector<1x128xf32>
    %c102 = arith.constant 102 : index
    %c0_518 = arith.constant 0 : index
    %724 = vector.load %arg7[%c102, %c0_518] : memref<128x128xf32, #tpu.memory_space<vmem>>, vector<1x128xf32>
    %cst_519 = arith.constant 0.00389862806 : f32
    %725 = vector.broadcast %cst_519 : f32 to vector<1x128xf32>
    %726 = arith.mulf %725, %724 : vector<1x128xf32>
    %727 = arith.addf %723, %726 : vector<1x128xf32>
    %c102_520 = arith.constant 102 : index
    %c0_521 = arith.constant 0 : index
    %728 = vector.load %arg8[%c102_520, %c0_521] : memref<128x128xf32, #tpu.memory_space<vmem>>, vector<1x128xf32>
    tpu.vector_store %arg8[%c102_520, %c0_521], %727 {strides = array<i32>} : memref<128x128xf32, #tpu.memory_space<vmem>>, vector<1x128xf32>,
    %cst_522 = arith.constant 0.996101379 : f32
    %729 = vector.broadcast %cst_522 : f32 to vector<1x128xf32>
    %730 = arith.mulf %729, %727 : vector<1x128xf32>
    %c103 = arith.constant 103 : index
    %c0_523 = arith.constant 0 : index
    %731 = vector.load %arg7[%c103, %c0_523] : memref<128x128xf32, #tpu.memory_space<vmem>>, vector<1x128xf32>
    %cst_524 = arith.constant 0.00389862806 : f32
    %732 = vector.broadcast %cst_524 : f32 to vector<1x128xf32>
    %733 = arith.mulf %732, %731 : vector<1x128xf32>
    %734 = arith.addf %730, %733 : vector<1x128xf32>
    %c103_525 = arith.constant 103 : index
    %c0_526 = arith.constant 0 : index
    %735 = vector.load %arg8[%c103_525, %c0_526] : memref<128x128xf32, #tpu.memory_space<vmem>>, vector<1x128xf32>
    tpu.vector_store %arg8[%c103_525, %c0_526], %734 {strides = array<i32>} : memref<128x128xf32, #tpu.memory_space<vmem>>, vector<1x128xf32>,
    %cst_527 = arith.constant 0.996101379 : f32
    %736 = vector.broadcast %cst_527 : f32 to vector<1x128xf32>
    %737 = arith.mulf %736, %734 : vector<1x128xf32>
    %c104 = arith.constant 104 : index
    %c0_528 = arith.constant 0 : index
    %738 = vector.load %arg7[%c104, %c0_528] : memref<128x128xf32, #tpu.memory_space<vmem>>, vector<1x128xf32>
    %cst_529 = arith.constant 0.00389862806 : f32
    %739 = vector.broadcast %cst_529 : f32 to vector<1x128xf32>
    %740 = arith.mulf %739, %738 : vector<1x128xf32>
    %741 = arith.addf %737, %740 : vector<1x128xf32>
    %c104_530 = arith.constant 104 : index
    %c0_531 = arith.constant 0 : index
    %742 = vector.load %arg8[%c104_530, %c0_531] : memref<128x128xf32, #tpu.memory_space<vmem>>, vector<1x128xf32>
    tpu.vector_store %arg8[%c104_530, %c0_531], %741 {strides = array<i32>} : memref<128x128xf32, #tpu.memory_space<vmem>>, vector<1x128xf32>,
    %cst_532 = arith.constant 0.996101379 : f32
    %743 = vector.broadcast %cst_532 : f32 to vector<1x128xf32>
    %744 = arith.mulf %743, %741 : vector<1x128xf32>
    %c105 = arith.constant 105 : index
    %c0_533 = arith.constant 0 : index
    %745 = vector.load %arg7[%c105, %c0_533] : memref<128x128xf32, #tpu.memory_space<vmem>>, vector<1x128xf32>
    %cst_534 = arith.constant 0.00389862806 : f32
    %746 = vector.broadcast %cst_534 : f32 to vector<1x128xf32>
    %747 = arith.mulf %746, %745 : vector<1x128xf32>
    %748 = arith.addf %744, %747 : vector<1x128xf32>
    %c105_535 = arith.constant 105 : index
    %c0_536 = arith.constant 0 : index
    %749 = vector.load %arg8[%c105_535, %c0_536] : memref<128x128xf32, #tpu.memory_space<vmem>>, vector<1x128xf32>
    tpu.vector_store %arg8[%c105_535, %c0_536], %748 {strides = array<i32>} : memref<128x128xf32, #tpu.memory_space<vmem>>, vector<1x128xf32>,
    %cst_537 = arith.constant 0.996101379 : f32
    %750 = vector.broadcast %cst_537 : f32 to vector<1x128xf32>
    %751 = arith.mulf %750, %748 : vector<1x128xf32>
    %c106 = arith.constant 106 : index
    %c0_538 = arith.constant 0 : index
    %752 = vector.load %arg7[%c106, %c0_538] : memref<128x128xf32, #tpu.memory_space<vmem>>, vector<1x128xf32>
    %cst_539 = arith.constant 0.00389862806 : f32
    %753 = vector.broadcast %cst_539 : f32 to vector<1x128xf32>
    %754 = arith.mulf %753, %752 : vector<1x128xf32>
    %755 = arith.addf %751, %754 : vector<1x128xf32>
    %c106_540 = arith.constant 106 : index
    %c0_541 = arith.constant 0 : index
    %756 = vector.load %arg8[%c106_540, %c0_541] : memref<128x128xf32, #tpu.memory_space<vmem>>, vector<1x128xf32>
    tpu.vector_store %arg8[%c106_540, %c0_541], %755 {strides = array<i32>} : memref<128x128xf32, #tpu.memory_space<vmem>>, vector<1x128xf32>,
    %cst_542 = arith.constant 0.996101379 : f32
    %757 = vector.broadcast %cst_542 : f32 to vector<1x128xf32>
    %758 = arith.mulf %757, %755 : vector<1x128xf32>
    %c107 = arith.constant 107 : index
    %c0_543 = arith.constant 0 : index
    %759 = vector.load %arg7[%c107, %c0_543] : memref<128x128xf32, #tpu.memory_space<vmem>>, vector<1x128xf32>
    %cst_544 = arith.constant 0.00389862806 : f32
    %760 = vector.broadcast %cst_544 : f32 to vector<1x128xf32>
    %761 = arith.mulf %760, %759 : vector<1x128xf32>
    %762 = arith.addf %758, %761 : vector<1x128xf32>
    %c107_545 = arith.constant 107 : index
    %c0_546 = arith.constant 0 : index
    %763 = vector.load %arg8[%c107_545, %c0_546] : memref<128x128xf32, #tpu.memory_space<vmem>>, vector<1x128xf32>
    tpu.vector_store %arg8[%c107_545, %c0_546], %762 {strides = array<i32>} : memref<128x128xf32, #tpu.memory_space<vmem>>, vector<1x128xf32>,
    %cst_547 = arith.constant 0.996101379 : f32
    %764 = vector.broadcast %cst_547 : f32 to vector<1x128xf32>
    %765 = arith.mulf %764, %762 : vector<1x128xf32>
    %c108 = arith.constant 108 : index
    %c0_548 = arith.constant 0 : index
    %766 = vector.load %arg7[%c108, %c0_548] : memref<128x128xf32, #tpu.memory_space<vmem>>, vector<1x128xf32>
    %cst_549 = arith.constant 0.00389862806 : f32
    %767 = vector.broadcast %cst_549 : f32 to vector<1x128xf32>
    %768 = arith.mulf %767, %766 : vector<1x128xf32>
    %769 = arith.addf %765, %768 : vector<1x128xf32>
    %c108_550 = arith.constant 108 : index
    %c0_551 = arith.constant 0 : index
    %770 = vector.load %arg8[%c108_550, %c0_551] : memref<128x128xf32, #tpu.memory_space<vmem>>, vector<1x128xf32>
    tpu.vector_store %arg8[%c108_550, %c0_551], %769 {strides = array<i32>} : memref<128x128xf32, #tpu.memory_space<vmem>>, vector<1x128xf32>,
    %cst_552 = arith.constant 0.996101379 : f32
    %771 = vector.broadcast %cst_552 : f32 to vector<1x128xf32>
    %772 = arith.mulf %771, %769 : vector<1x128xf32>
    %c109 = arith.constant 109 : index
    %c0_553 = arith.constant 0 : index
    %773 = vector.load %arg7[%c109, %c0_553] : memref<128x128xf32, #tpu.memory_space<vmem>>, vector<1x128xf32>
    %cst_554 = arith.constant 0.00389862806 : f32
    %774 = vector.broadcast %cst_554 : f32 to vector<1x128xf32>
    %775 = arith.mulf %774, %773 : vector<1x128xf32>
    %776 = arith.addf %772, %775 : vector<1x128xf32>
    %c109_555 = arith.constant 109 : index
    %c0_556 = arith.constant 0 : index
    %777 = vector.load %arg8[%c109_555, %c0_556] : memref<128x128xf32, #tpu.memory_space<vmem>>, vector<1x128xf32>
    tpu.vector_store %arg8[%c109_555, %c0_556], %776 {strides = array<i32>} : memref<128x128xf32, #tpu.memory_space<vmem>>, vector<1x128xf32>,
    %cst_557 = arith.constant 0.996101379 : f32
    %778 = vector.broadcast %cst_557 : f32 to vector<1x128xf32>
    %779 = arith.mulf %778, %776 : vector<1x128xf32>
    %c110 = arith.constant 110 : index
    %c0_558 = arith.constant 0 : index
    %780 = vector.load %arg7[%c110, %c0_558] : memref<128x128xf32, #tpu.memory_space<vmem>>, vector<1x128xf32>
    %cst_559 = arith.constant 0.00389862806 : f32
    %781 = vector.broadcast %cst_559 : f32 to vector<1x128xf32>
    %782 = arith.mulf %781, %780 : vector<1x128xf32>
    %783 = arith.addf %779, %782 : vector<1x128xf32>
    %c110_560 = arith.constant 110 : index
    %c0_561 = arith.constant 0 : index
    %784 = vector.load %arg8[%c110_560, %c0_561] : memref<128x128xf32, #tpu.memory_space<vmem>>, vector<1x128xf32>
    tpu.vector_store %arg8[%c110_560, %c0_561], %783 {strides = array<i32>} : memref<128x128xf32, #tpu.memory_space<vmem>>, vector<1x128xf32>,
    %cst_562 = arith.constant 0.996101379 : f32
    %785 = vector.broadcast %cst_562 : f32 to vector<1x128xf32>
    %786 = arith.mulf %785, %783 : vector<1x128xf32>
    %c111 = arith.constant 111 : index
    %c0_563 = arith.constant 0 : index
    %787 = vector.load %arg7[%c111, %c0_563] : memref<128x128xf32, #tpu.memory_space<vmem>>, vector<1x128xf32>
    %cst_564 = arith.constant 0.00389862806 : f32
    %788 = vector.broadcast %cst_564 : f32 to vector<1x128xf32>
    %789 = arith.mulf %788, %787 : vector<1x128xf32>
    %790 = arith.addf %786, %789 : vector<1x128xf32>
    %c111_565 = arith.constant 111 : index
    %c0_566 = arith.constant 0 : index
    %791 = vector.load %arg8[%c111_565, %c0_566] : memref<128x128xf32, #tpu.memory_space<vmem>>, vector<1x128xf32>
    tpu.vector_store %arg8[%c111_565, %c0_566], %790 {strides = array<i32>} : memref<128x128xf32, #tpu.memory_space<vmem>>, vector<1x128xf32>,
    %cst_567 = arith.constant 0.996101379 : f32
    %792 = vector.broadcast %cst_567 : f32 to vector<1x128xf32>
    %793 = arith.mulf %792, %790 : vector<1x128xf32>
    %c112 = arith.constant 112 : index
    %c0_568 = arith.constant 0 : index
    %794 = vector.load %arg7[%c112, %c0_568] : memref<128x128xf32, #tpu.memory_space<vmem>>, vector<1x128xf32>
    %cst_569 = arith.constant 0.00389862806 : f32
    %795 = vector.broadcast %cst_569 : f32 to vector<1x128xf32>
    %796 = arith.mulf %795, %794 : vector<1x128xf32>
    %797 = arith.addf %793, %796 : vector<1x128xf32>
    %c112_570 = arith.constant 112 : index
    %c0_571 = arith.constant 0 : index
    %798 = vector.load %arg8[%c112_570, %c0_571] : memref<128x128xf32, #tpu.memory_space<vmem>>, vector<1x128xf32>
    tpu.vector_store %arg8[%c112_570, %c0_571], %797 {strides = array<i32>} : memref<128x128xf32, #tpu.memory_space<vmem>>, vector<1x128xf32>,
    %cst_572 = arith.constant 0.996101379 : f32
    %799 = vector.broadcast %cst_572 : f32 to vector<1x128xf32>
    %800 = arith.mulf %799, %797 : vector<1x128xf32>
    %c113 = arith.constant 113 : index
    %c0_573 = arith.constant 0 : index
    %801 = vector.load %arg7[%c113, %c0_573] : memref<128x128xf32, #tpu.memory_space<vmem>>, vector<1x128xf32>
    %cst_574 = arith.constant 0.00389862806 : f32
    %802 = vector.broadcast %cst_574 : f32 to vector<1x128xf32>
    %803 = arith.mulf %802, %801 : vector<1x128xf32>
    %804 = arith.addf %800, %803 : vector<1x128xf32>
    %c113_575 = arith.constant 113 : index
    %c0_576 = arith.constant 0 : index
    %805 = vector.load %arg8[%c113_575, %c0_576] : memref<128x128xf32, #tpu.memory_space<vmem>>, vector<1x128xf32>
    tpu.vector_store %arg8[%c113_575, %c0_576], %804 {strides = array<i32>} : memref<128x128xf32, #tpu.memory_space<vmem>>, vector<1x128xf32>,
    %cst_577 = arith.constant 0.996101379 : f32
    %806 = vector.broadcast %cst_577 : f32 to vector<1x128xf32>
    %807 = arith.mulf %806, %804 : vector<1x128xf32>
    %c114 = arith.constant 114 : index
    %c0_578 = arith.constant 0 : index
    %808 = vector.load %arg7[%c114, %c0_578] : memref<128x128xf32, #tpu.memory_space<vmem>>, vector<1x128xf32>
    %cst_579 = arith.constant 0.00389862806 : f32
    %809 = vector.broadcast %cst_579 : f32 to vector<1x128xf32>
    %810 = arith.mulf %809, %808 : vector<1x128xf32>
    %811 = arith.addf %807, %810 : vector<1x128xf32>
    %c114_580 = arith.constant 114 : index
    %c0_581 = arith.constant 0 : index
    %812 = vector.load %arg8[%c114_580, %c0_581] : memref<128x128xf32, #tpu.memory_space<vmem>>, vector<1x128xf32>
    tpu.vector_store %arg8[%c114_580, %c0_581], %811 {strides = array<i32>} : memref<128x128xf32, #tpu.memory_space<vmem>>, vector<1x128xf32>,
    %cst_582 = arith.constant 0.996101379 : f32
    %813 = vector.broadcast %cst_582 : f32 to vector<1x128xf32>
    %814 = arith.mulf %813, %811 : vector<1x128xf32>
    %c115 = arith.constant 115 : index
    %c0_583 = arith.constant 0 : index
    %815 = vector.load %arg7[%c115, %c0_583] : memref<128x128xf32, #tpu.memory_space<vmem>>, vector<1x128xf32>
    %cst_584 = arith.constant 0.00389862806 : f32
    %816 = vector.broadcast %cst_584 : f32 to vector<1x128xf32>
    %817 = arith.mulf %816, %815 : vector<1x128xf32>
    %818 = arith.addf %814, %817 : vector<1x128xf32>
    %c115_585 = arith.constant 115 : index
    %c0_586 = arith.constant 0 : index
    %819 = vector.load %arg8[%c115_585, %c0_586] : memref<128x128xf32, #tpu.memory_space<vmem>>, vector<1x128xf32>
    tpu.vector_store %arg8[%c115_585, %c0_586], %818 {strides = array<i32>} : memref<128x128xf32, #tpu.memory_space<vmem>>, vector<1x128xf32>,
    %cst_587 = arith.constant 0.996101379 : f32
    %820 = vector.broadcast %cst_587 : f32 to vector<1x128xf32>
    %821 = arith.mulf %820, %818 : vector<1x128xf32>
    %c116 = arith.constant 116 : index
    %c0_588 = arith.constant 0 : index
    %822 = vector.load %arg7[%c116, %c0_588] : memref<128x128xf32, #tpu.memory_space<vmem>>, vector<1x128xf32>
    %cst_589 = arith.constant 0.00389862806 : f32
    %823 = vector.broadcast %cst_589 : f32 to vector<1x128xf32>
    %824 = arith.mulf %823, %822 : vector<1x128xf32>
    %825 = arith.addf %821, %824 : vector<1x128xf32>
    %c116_590 = arith.constant 116 : index
    %c0_591 = arith.constant 0 : index
    %826 = vector.load %arg8[%c116_590, %c0_591] : memref<128x128xf32, #tpu.memory_space<vmem>>, vector<1x128xf32>
    tpu.vector_store %arg8[%c116_590, %c0_591], %825 {strides = array<i32>} : memref<128x128xf32, #tpu.memory_space<vmem>>, vector<1x128xf32>,
    %cst_592 = arith.constant 0.996101379 : f32
    %827 = vector.broadcast %cst_592 : f32 to vector<1x128xf32>
    %828 = arith.mulf %827, %825 : vector<1x128xf32>
    %c117 = arith.constant 117 : index
    %c0_593 = arith.constant 0 : index
    %829 = vector.load %arg7[%c117, %c0_593] : memref<128x128xf32, #tpu.memory_space<vmem>>, vector<1x128xf32>
    %cst_594 = arith.constant 0.00389862806 : f32
    %830 = vector.broadcast %cst_594 : f32 to vector<1x128xf32>
    %831 = arith.mulf %830, %829 : vector<1x128xf32>
    %832 = arith.addf %828, %831 : vector<1x128xf32>
    %c117_595 = arith.constant 117 : index
    %c0_596 = arith.constant 0 : index
    %833 = vector.load %arg8[%c117_595, %c0_596] : memref<128x128xf32, #tpu.memory_space<vmem>>, vector<1x128xf32>
    tpu.vector_store %arg8[%c117_595, %c0_596], %832 {strides = array<i32>} : memref<128x128xf32, #tpu.memory_space<vmem>>, vector<1x128xf32>,
    %cst_597 = arith.constant 0.996101379 : f32
    %834 = vector.broadcast %cst_597 : f32 to vector<1x128xf32>
    %835 = arith.mulf %834, %832 : vector<1x128xf32>
    %c118 = arith.constant 118 : index
    %c0_598 = arith.constant 0 : index
    %836 = vector.load %arg7[%c118, %c0_598] : memref<128x128xf32, #tpu.memory_space<vmem>>, vector<1x128xf32>
    %cst_599 = arith.constant 0.00389862806 : f32
    %837 = vector.broadcast %cst_599 : f32 to vector<1x128xf32>
    %838 = arith.mulf %837, %836 : vector<1x128xf32>
    %839 = arith.addf %835, %838 : vector<1x128xf32>
    %c118_600 = arith.constant 118 : index
    %c0_601 = arith.constant 0 : index
    %840 = vector.load %arg8[%c118_600, %c0_601] : memref<128x128xf32, #tpu.memory_space<vmem>>, vector<1x128xf32>
    tpu.vector_store %arg8[%c118_600, %c0_601], %839 {strides = array<i32>} : memref<128x128xf32, #tpu.memory_space<vmem>>, vector<1x128xf32>,
    %cst_602 = arith.constant 0.996101379 : f32
    %841 = vector.broadcast %cst_602 : f32 to vector<1x128xf32>
    %842 = arith.mulf %841, %839 : vector<1x128xf32>
    %c119 = arith.constant 119 : index
    %c0_603 = arith.constant 0 : index
    %843 = vector.load %arg7[%c119, %c0_603] : memref<128x128xf32, #tpu.memory_space<vmem>>, vector<1x128xf32>
    %cst_604 = arith.constant 0.00389862806 : f32
    %844 = vector.broadcast %cst_604 : f32 to vector<1x128xf32>
    %845 = arith.mulf %844, %843 : vector<1x128xf32>
    %846 = arith.addf %842, %845 : vector<1x128xf32>
    %c119_605 = arith.constant 119 : index
    %c0_606 = arith.constant 0 : index
    %847 = vector.load %arg8[%c119_605, %c0_606] : memref<128x128xf32, #tpu.memory_space<vmem>>, vector<1x128xf32>
    tpu.vector_store %arg8[%c119_605, %c0_606], %846 {strides = array<i32>} : memref<128x128xf32, #tpu.memory_space<vmem>>, vector<1x128xf32>,
    %cst_607 = arith.constant 0.996101379 : f32
    %848 = vector.broadcast %cst_607 : f32 to vector<1x128xf32>
    %849 = arith.mulf %848, %846 : vector<1x128xf32>
    %c120 = arith.constant 120 : index
    %c0_608 = arith.constant 0 : index
    %850 = vector.load %arg7[%c120, %c0_608] : memref<128x128xf32, #tpu.memory_space<vmem>>, vector<1x128xf32>
    %cst_609 = arith.constant 0.00389862806 : f32
    %851 = vector.broadcast %cst_609 : f32 to vector<1x128xf32>
    %852 = arith.mulf %851, %850 : vector<1x128xf32>
    %853 = arith.addf %849, %852 : vector<1x128xf32>
    %c120_610 = arith.constant 120 : index
    %c0_611 = arith.constant 0 : index
    %854 = vector.load %arg8[%c120_610, %c0_611] : memref<128x128xf32, #tpu.memory_space<vmem>>, vector<1x128xf32>
    tpu.vector_store %arg8[%c120_610, %c0_611], %853 {strides = array<i32>} : memref<128x128xf32, #tpu.memory_space<vmem>>, vector<1x128xf32>,
    %cst_612 = arith.constant 0.996101379 : f32
    %855 = vector.broadcast %cst_612 : f32 to vector<1x128xf32>
    %856 = arith.mulf %855, %853 : vector<1x128xf32>
    %c121 = arith.constant 121 : index
    %c0_613 = arith.constant 0 : index
    %857 = vector.load %arg7[%c121, %c0_613] : memref<128x128xf32, #tpu.memory_space<vmem>>, vector<1x128xf32>
    %cst_614 = arith.constant 0.00389862806 : f32
    %858 = vector.broadcast %cst_614 : f32 to vector<1x128xf32>
    %859 = arith.mulf %858, %857 : vector<1x128xf32>
    %860 = arith.addf %856, %859 : vector<1x128xf32>
    %c121_615 = arith.constant 121 : index
    %c0_616 = arith.constant 0 : index
    %861 = vector.load %arg8[%c121_615, %c0_616] : memref<128x128xf32, #tpu.memory_space<vmem>>, vector<1x128xf32>
    tpu.vector_store %arg8[%c121_615, %c0_616], %860 {strides = array<i32>} : memref<128x128xf32, #tpu.memory_space<vmem>>, vector<1x128xf32>,
    %cst_617 = arith.constant 0.996101379 : f32
    %862 = vector.broadcast %cst_617 : f32 to vector<1x128xf32>
    %863 = arith.mulf %862, %860 : vector<1x128xf32>
    %c122 = arith.constant 122 : index
    %c0_618 = arith.constant 0 : index
    %864 = vector.load %arg7[%c122, %c0_618] : memref<128x128xf32, #tpu.memory_space<vmem>>, vector<1x128xf32>
    %cst_619 = arith.constant 0.00389862806 : f32
    %865 = vector.broadcast %cst_619 : f32 to vector<1x128xf32>
    %866 = arith.mulf %865, %864 : vector<1x128xf32>
    %867 = arith.addf %863, %866 : vector<1x128xf32>
    %c122_620 = arith.constant 122 : index
    %c0_621 = arith.constant 0 : index
    %868 = vector.load %arg8[%c122_620, %c0_621] : memref<128x128xf32, #tpu.memory_space<vmem>>, vector<1x128xf32>
    tpu.vector_store %arg8[%c122_620, %c0_621], %867 {strides = array<i32>} : memref<128x128xf32, #tpu.memory_space<vmem>>, vector<1x128xf32>,
    %cst_622 = arith.constant 0.996101379 : f32
    %869 = vector.broadcast %cst_622 : f32 to vector<1x128xf32>
    %870 = arith.mulf %869, %867 : vector<1x128xf32>
    %c123 = arith.constant 123 : index
    %c0_623 = arith.constant 0 : index
    %871 = vector.load %arg7[%c123, %c0_623] : memref<128x128xf32, #tpu.memory_space<vmem>>, vector<1x128xf32>
    %cst_624 = arith.constant 0.00389862806 : f32
    %872 = vector.broadcast %cst_624 : f32 to vector<1x128xf32>
    %873 = arith.mulf %872, %871 : vector<1x128xf32>
    %874 = arith.addf %870, %873 : vector<1x128xf32>
    %c123_625 = arith.constant 123 : index
    %c0_626 = arith.constant 0 : index
    %875 = vector.load %arg8[%c123_625, %c0_626] : memref<128x128xf32, #tpu.memory_space<vmem>>, vector<1x128xf32>
    tpu.vector_store %arg8[%c123_625, %c0_626], %874 {strides = array<i32>} : memref<128x128xf32, #tpu.memory_space<vmem>>, vector<1x128xf32>,
    %cst_627 = arith.constant 0.996101379 : f32
    %876 = vector.broadcast %cst_627 : f32 to vector<1x128xf32>
    %877 = arith.mulf %876, %874 : vector<1x128xf32>
    %c124 = arith.constant 124 : index
    %c0_628 = arith.constant 0 : index
    %878 = vector.load %arg7[%c124, %c0_628] : memref<128x128xf32, #tpu.memory_space<vmem>>, vector<1x128xf32>
    %cst_629 = arith.constant 0.00389862806 : f32
    %879 = vector.broadcast %cst_629 : f32 to vector<1x128xf32>
    %880 = arith.mulf %879, %878 : vector<1x128xf32>
    %881 = arith.addf %877, %880 : vector<1x128xf32>
    %c124_630 = arith.constant 124 : index
    %c0_631 = arith.constant 0 : index
    %882 = vector.load %arg8[%c124_630, %c0_631] : memref<128x128xf32, #tpu.memory_space<vmem>>, vector<1x128xf32>
    tpu.vector_store %arg8[%c124_630, %c0_631], %881 {strides = array<i32>} : memref<128x128xf32, #tpu.memory_space<vmem>>, vector<1x128xf32>,
    %cst_632 = arith.constant 0.996101379 : f32
    %883 = vector.broadcast %cst_632 : f32 to vector<1x128xf32>
    %884 = arith.mulf %883, %881 : vector<1x128xf32>
    %c125 = arith.constant 125 : index
    %c0_633 = arith.constant 0 : index
    %885 = vector.load %arg7[%c125, %c0_633] : memref<128x128xf32, #tpu.memory_space<vmem>>, vector<1x128xf32>
    %cst_634 = arith.constant 0.00389862806 : f32
    %886 = vector.broadcast %cst_634 : f32 to vector<1x128xf32>
    %887 = arith.mulf %886, %885 : vector<1x128xf32>
    %888 = arith.addf %884, %887 : vector<1x128xf32>
    %c125_635 = arith.constant 125 : index
    %c0_636 = arith.constant 0 : index
    %889 = vector.load %arg8[%c125_635, %c0_636] : memref<128x128xf32, #tpu.memory_space<vmem>>, vector<1x128xf32>
    tpu.vector_store %arg8[%c125_635, %c0_636], %888 {strides = array<i32>} : memref<128x128xf32, #tpu.memory_space<vmem>>, vector<1x128xf32>,
    %cst_637 = arith.constant 0.996101379 : f32
    %890 = vector.broadcast %cst_637 : f32 to vector<1x128xf32>
    %891 = arith.mulf %890, %888 : vector<1x128xf32>
    %c126 = arith.constant 126 : index
    %c0_638 = arith.constant 0 : index
    %892 = vector.load %arg7[%c126, %c0_638] : memref<128x128xf32, #tpu.memory_space<vmem>>, vector<1x128xf32>
    %cst_639 = arith.constant 0.00389862806 : f32
    %893 = vector.broadcast %cst_639 : f32 to vector<1x128xf32>
    %894 = arith.mulf %893, %892 : vector<1x128xf32>
    %895 = arith.addf %891, %894 : vector<1x128xf32>
    %c126_640 = arith.constant 126 : index
    %c0_641 = arith.constant 0 : index
    %896 = vector.load %arg8[%c126_640, %c0_641] : memref<128x128xf32, #tpu.memory_space<vmem>>, vector<1x128xf32>
    tpu.vector_store %arg8[%c126_640, %c0_641], %895 {strides = array<i32>} : memref<128x128xf32, #tpu.memory_space<vmem>>, vector<1x128xf32>,
    %cst_642 = arith.constant 0.996101379 : f32
    %897 = vector.broadcast %cst_642 : f32 to vector<1x128xf32>
    %898 = arith.mulf %897, %895 : vector<1x128xf32>
    %c127 = arith.constant 127 : index
    %c0_643 = arith.constant 0 : index
    %899 = vector.load %arg7[%c127, %c0_643] : memref<128x128xf32, #tpu.memory_space<vmem>>, vector<1x128xf32>
    %cst_644 = arith.constant 0.00389862806 : f32
    %900 = vector.broadcast %cst_644 : f32 to vector<1x128xf32>
    %901 = arith.mulf %900, %899 : vector<1x128xf32>
    %902 = arith.addf %898, %901 : vector<1x128xf32>
    %c127_645 = arith.constant 127 : index
    %c0_646 = arith.constant 0 : index
    %903 = vector.load %arg8[%c127_645, %c0_646] : memref<128x128xf32, #tpu.memory_space<vmem>>, vector<1x128xf32>
    tpu.vector_store %arg8[%c127_645, %c0_646], %902 {strides = array<i32>} : memref<128x128xf32, #tpu.memory_space<vmem>>, vector<1x128xf32>,
    %c0_647 = arith.constant 0 : index
    %c0_648 = arith.constant 0 : index
    %904 = vector.load %arg9[%c0_647, %c0_648] : memref<1x128xf32, #tpu.memory_space<vmem>>, vector<1x128xf32>
    tpu.vector_store %arg9[%c0_647, %c0_648], %902 {strides = array<i32>} : memref<1x128xf32, #tpu.memory_space<vmem>>, vector<1x128xf32>,
    %c0_649 = arith.constant 0 : index
    %c0_650 = arith.constant 0 : index
    %905 = vector.load %arg3[%c0_649, %c0_650] : memref<1x128xf32, #tpu.memory_space<vmem>>, vector<1x128xf32>
    %906 = math.exp %905 : vector<1x128xf32>
    %c0_651 = arith.constant 0 : index
    %c0_652 = arith.constant 0 : index
    %907 = vector.load %arg4[%c0_651, %c0_652] : memref<1x128xf32, #tpu.memory_space<vmem>>, vector<1x128xf32>
    %908 = math.exp %907 : vector<1x128xf32>
    %c0_653 = arith.constant 0 : index
    %c0_654 = arith.constant 0 : index
    %909 = vector.load %arg5[%c0_653, %c0_654] : memref<1x128xf32, #tpu.memory_space<vmem>>, vector<1x128xf32>
    %910 = math.exp %909 : vector<1x128xf32>
    %911 = math.powf %908, %910 : vector<1x128xf32>
    %c0_655 = arith.constant 0 : index
    %c0_656 = arith.constant 0 : index
    %912 = vector.load %arg7[%c0_655, %c0_656] : memref<128x128xf32, #tpu.memory_space<vmem>>, vector<128x128xf32>
    %c0_657 = arith.constant 0 : index
    %c0_658 = arith.constant 0 : index
    %913 = vector.load %arg8[%c0_657, %c0_658] : memref<128x128xf32, #tpu.memory_space<vmem>>, vector<128x128xf32>
    %cst_659 = arith.constant 0.000000e+00 : f32
    %914 = vector.broadcast %cst_659 : f32 to vector<1x128xf32>
    %915 = arith.subf %914, %906 : vector<1x128xf32>
    %cst_660 = arith.constant 9.99999974E-6 : f32
    %916 = vector.broadcast %cst_660 : f32 to vector<128x128xf32>
    %917 = arith.addf %913, %916 : vector<128x128xf32>
    %918 = math.log %917 : vector<128x128xf32>
    %919 = vector.broadcast %915 : vector<1x128xf32> to vector<128x128xf32>
    %920 = arith.mulf %919, %918 : vector<128x128xf32>
    %921 = math.exp %920 : vector<128x128xf32>
    %922 = arith.mulf %912, %921 : vector<128x128xf32>
    %923 = vector.broadcast %908 : vector<1x128xf32> to vector<128x128xf32>
    %924 = arith.addf %922, %923 : vector<128x128xf32>
    %925 = vector.broadcast %910 : vector<1x128xf32> to vector<128x128xf32>
    %926 = math.powf %924, %925 : vector<128x128xf32>
    %927 = vector.broadcast %911 : vector<1x128xf32> to vector<128x128xf32>
    %928 = arith.subf %926, %927 : vector<128x128xf32>
    %c0_661 = arith.constant 0 : index
    %c0_662 = arith.constant 0 : index
    %c0_663 = arith.constant 0 : index
    %929 = vector.load %arg6[%c0_661, %c0_662, %c0_663] : memref<1x128x128xf32, #tpu.memory_space<vmem>>, vector<1x128x128xf32>
    %930 = vector.shape_cast %929 : vector<1x128x128xf32> to vector<128x128xf32>
    %931 = vector.shape_cast %928 : vector<128x128xf32> to vector<1x128x128xf32>
    tpu.vector_store %arg6[%c0_661, %c0_662, %c0_663], %931 {strides = array<i32>} : memref<1x128x128xf32, #tpu.memory_space<vmem>>, vector<1x128x128xf32>,
    return
  }
  func.func @transform_0(%arg0: i32, %arg1: i32) -> (i32, i32, i32) {
    %c0_i32 = arith.constant 0 : i32
    %c0_i32_0 = arith.constant 0 : i32
    return %arg0, %c0_i32, %arg1 : i32, i32, i32
  }
  func.func @transform_1(%arg0: i32, %arg1: i32) -> (i32, i32) {
    %c0_i32 = arith.constant 0 : i32
    %c0_i32_0 = arith.constant 0 : i32
    %c0_i32_1 = arith.constant 0 : i32
    return %c0_i32, %c0_i32_0 : i32, i32
  }
  func.func @transform_2(%arg0: i32, %arg1: i32) -> (i32, i32) {
    %c0_i32 = arith.constant 0 : i32
    %c0_i32_0 = arith.constant 0 : i32
    %c0_i32_1 = arith.constant 0 : i32
    return %c0_i32, %c0_i32_0 : i32, i32
  }
  func.func @transform_3(%arg0: i32, %arg1: i32) -> (i32, i32) {
    %c0_i32 = arith.constant 0 : i32
    %c0_i32_0 = arith.constant 0 : i32
    %c0_i32_1 = arith.constant 0 : i32
    return %c0_i32, %c0_i32_0 : i32, i32
  }
  func.func @transform_4(%arg0: i32, %arg1: i32) -> (i32, i32, i32) {
    %c0_i32 = arith.constant 0 : i32
    %c0_i32_0 = arith.constant 0 : i32
    return %arg0, %arg1, %c0_i32 : i32, i32, i32
  }
}

</mosaic_0001>

<llo_original>
// kernel: tpu_custom_call.1
$region0: #{tpu_custom_call.1}
  #allocation0 [shape = 'u32[]', space=smem, size = 0x4, offset = 0x4, fixed_abs, tag = 'smem constant byte address 0x4 - core index']
  #allocation1 [shape = 'u32[144,128]{1,0:T(1,128)}', space=vmem, size = 0x12000, scoped, tag = 'internal scratch']
  #allocation2 [shape = 'f32[128,128]{1,0:T(8,128)}', space=vmem, size = 0x10000, scoped, tag = 'scratch operand']
  #allocation3 [shape = 'f32[128,128]{1,0:T(8,128)}', space=vmem, size = 0x10000, scoped, tag = 'scratch operand']
  #allocation4 [shape = 'f32[1,128]{1,0:T(1,128)}', space=vmem, size = 0x200, scoped, tag = 'scratch operand']
  %s0 = inlined_call_operand.hbm [shape: f32[6,128,256], index: 0, kind: input, shape index: {}]
  %s1 = inlined_call_operand.vmem [shape: f32[1,128], index: 1, kind: input, shape index: {}]
  %s2 = inlined_call_operand.vmem [shape: f32[1,128], index: 2, kind: input, shape index: {}]
  %s3 = inlined_call_operand.vmem [shape: f32[1,128], index: 3, kind: input, shape index: {}]
  %s4 = inlined_call_operand.hbm [shape: f32[6,256,128], index: 4, kind: output, shape index: {}]
  %s5 = sld [smem:[#allocation0]]
  $region57: #{tpu_custom_call.1} parent=0
    _
  %s7 = ssub.s32 1, %s5
  %s8 = scalar_select 0, %s7, %s5
  $region1: #{tpu_custom_call.1} parent=0
    #allocation5 [shape = 'u8[131072]{0}', space=vmem, size = 0x20000, scoped, tag = 'input window, operand 0']
    #allocation6 [shape = 's32[2]{0}', space=sflag, size = 0x8, scoped, tag = 'scoped memory for tpu_custom_call.1']
    #allocation7 [shape = 's32[2]{0}', space=sflag, size = 0x8, scoped, tag = 'scoped memory for tpu_custom_call.1']
    #allocation8 [shape = 'u8[131072]{0}', space=vmem, size = 0x20000, scoped, tag = 'output window, operand 0']
    %9 = vsyncpa [#allocation6], 0
    %s10 = scalar_lea.sflag [#allocation6], 1
    %11 = vsyncpa %s10, 0
    %12 = vsyncpa [#allocation7], 0
    %s13 = scalar_lea.sflag [#allocation7], 1
    %14 = vsyncpa %s13, 0
    loop: start=0, step=1, limit=14
    $region2: #{tpu_custom_call.1} parent=1 // loop_pre_header
      _
    $region3: #{tpu_custom_call.1} parent=1 // loop_header
      %s16 = sphi 0, %s20
      %p17 = scmp.ge.s32.totalorder %s16, 14
      %s23 = sphi 0, %s35
      %s24 = sphi 0, %s31
      %s25 = sphi 0, %s23
      %s26 = sphi 0, %s24
      %s27 = sphi 0, %s25
      %s28 = sphi 0, %s26
      %s40 = sphi 0, %s42
      %s43 = sphi 0, %s40
      %s44 = sphi 0, %s43
      %s60 = sphi 0, %s44
      %s64 = sphi 0, %s64
      %s66 = sphi 0, %s64
      %s67 = sphi 0, %s66
      %s81 = sphi 0, %s67
      %s85 = sphi 0, %s85
      %s87 = sphi 0, %s85
      %s88 = sphi 0, %s87
      %s102 = sphi 0, %s88
      %s106 = sphi 0, %s106
      %s108 = sphi 0, %s106
      %s109 = sphi 0, %s108
      %s123 = sphi 0, %s109
      %s131 = sphi 0, %s133
      %s134 = sphi 0, %s131
      %s135 = sphi 0, %s134
      %s151 = sphi 0, %s135
    $region4: #{tpu_custom_call.1} parent=1 // loop_header_branch
      %19 = sbr.rel (%p17) target = $region8
    $region5: #{tpu_custom_call.1} parent=1 // loop_body
      %s21 = ssub.s32 %s16, 1
      %s22 = ssub.s32 %s16, 2
      %s29 = sadd.s32 1, %s24
      %p30 = scmp.ge.s32.totalorder %s29, 2
      %s31 = scalar_select %p30, 0, %s29
      %s32 = sadd.s32 1, %s23
      %s33 = scalar_select %p30, %s32, %s23
      %p34 = scmp.ge.s32.totalorder %s33, 6
      %s35 = scalar_select %p34, 0, %s33
      %s36 = ssub.s32 %s23, %s35
      %s37 = ssub.s32 %s24, %s31
      %s38 = sor.u32 %s36, %s37
      %p39 = scmp.eq.s32.totalorder %s38, 0
      %s41 = sadd.s32 %s40, 1
      %s42 = scalar_select %p39, %s40, %s41
      %p45 = pneg %p39
      %p46 = scmp.eq.s32.totalorder %s16, 11
      %p47 = por %p45, %p46
      %p48 = scmp.ne.s32.totalorder %s40, %s43
      %p49 = scmp.eq.s32.totalorder %s16, 0
      %p50 = por %p48, %p49
      %p51 = scmp.ne.s32.totalorder %s40, %s43
      %p52 = scmp.eq.s32.totalorder %s21, 11
      %p53 = por %p51, %p52
      %p54 = scmp.ne.s32.totalorder %s43, %s44
      %p55 = scmp.eq.s32.totalorder %s21, 0
      %p56 = por %p54, %p55
      %p57 = scmp.ne.s32.totalorder %s43, %s44
      %p58 = scmp.eq.s32.totalorder %s22, 11
      %p59 = por %p57, %p58
      %p61 = scmp.ne.s32.totalorder %s44, %s60
      %p62 = scmp.eq.s32.totalorder %s22, 0
      %p63 = por %p61, %p62
      %s65 = sadd.s32 %s64, 1
      %p68 = scmp.eq.s32.totalorder %s16, 11
      %p69 = scmp.ne.s32.totalorder %s64, %s66
      %p70 = scmp.eq.s32.totalorder %s16, 0
      %p71 = por %p69, %p70
      %p72 = scmp.ne.s32.totalorder %s64, %s66
      %p73 = scmp.eq.s32.totalorder %s21, 11
      %p74 = por %p72, %p73
      %p75 = scmp.ne.s32.totalorder %s66, %s67
      %p76 = scmp.eq.s32.totalorder %s21, 0
      %p77 = por %p75, %p76
      %p78 = scmp.ne.s32.totalorder %s66, %s67
      %p79 = scmp.eq.s32.totalorder %s22, 11
      %p80 = por %p78, %p79
      %p82 = scmp.ne.s32.totalorder %s67, %s81
      %p83 = scmp.eq.s32.totalorder %s22, 0
      %p84 = por %p82, %p83
      %s86 = sadd.s32 %s85, 1
      %p89 = scmp.eq.s32.totalorder %s16, 11
      %p90 = scmp.ne.s32.totalorder %s85, %s87
      %p91 = scmp.eq.s32.totalorder %s16, 0
      %p92 = por %p90, %p91
      %p93 = scmp.ne.s32.totalorder %s85, %s87
      %p94 = scmp.eq.s32.totalorder %s21, 11
      %p95 = por %p93, %p94
      %p96 = scmp.ne.s32.totalorder %s87, %s88
      %p97 = scmp.eq.s32.totalorder %s21, 0
      %p98 = por %p96, %p97
      %p99 = scmp.ne.s32.totalorder %s87, %s88
      %p100 = scmp.eq.s32.totalorder %s22, 11
      %p101 = por %p99, %p100
      %p103 = scmp.ne.s32.totalorder %s88, %s102
      %p104 = scmp.eq.s32.totalorder %s22, 0
      %p105 = por %p103, %p104
      %s107 = sadd.s32 %s106, 1
      %p110 = scmp.eq.s32.totalorder %s16, 11
      %p111 = scmp.ne.s32.totalorder %s106, %s108
      %p112 = scmp.eq.s32.totalorder %s16, 0
      %p113 = por %p111, %p112
      %p114 = scmp.ne.s32.totalorder %s106, %s108
      %p115 = scmp.eq.s32.totalorder %s21, 11
      %p116 = por %p114, %p115
      %p117 = scmp.ne.s32.totalorder %s108, %s109
      %p118 = scmp.eq.s32.totalorder %s21, 0
      %p119 = por %p117, %p118
      %p120 = scmp.ne.s32.totalorder %s108, %s109
      %p121 = scmp.eq.s32.totalorder %s22, 11
      %p122 = por %p120, %p121
      %p124 = scmp.ne.s32.totalorder %s109, %s123
      %p125 = scmp.eq.s32.totalorder %s22, 0
      %p126 = por %p124, %p125
      %s127 = ssub.s32 %s23, %s35
      %s128 = ssub.s32 %s24, %s31
      %s129 = sor.u32 %s127, %s128
      %p130 = scmp.eq.s32.totalorder %s129, 0
      %s132 = sadd.s32 %s131, 1
      %s133 = scalar_select %p130, %s131, %s132
      %p136 = pneg %p130
      %p137 = scmp.eq.s32.totalorder %s16, 11
      %p138 = por %p136, %p137
      %p139 = scmp.ne.s32.totalorder %s131, %s134
      %p140 = scmp.eq.s32.totalorder %s16, 0
      %p141 = por %p139, %p140
      %p142 = scmp.ne.s32.totalorder %s131, %s134
      %p143 = scmp.eq.s32.totalorder %s21, 11
      %p144 = por %p142, %p143
      %p145 = scmp.ne.s32.totalorder %s134, %s135
      %p146 = scmp.eq.s32.totalorder %s21, 0
      %p147 = por %p145, %p146
      %p148 = scmp.ne.s32.totalorder %s134, %s135
      %p149 = scmp.eq.s32.totalorder %s22, 11
      %p150 = por %p148, %p149
      %p152 = scmp.ne.s32.totalorder %s135, %s151
      %p153 = scmp.eq.s32.totalorder %s22, 0
      %p154 = por %p152, %p153
      %p155 = scmp.le.s32.totalorder 1, %s16
      %p156 = scmp.lt.s32.totalorder %s16, 13
      %p157 = pnand %p155, %p156
      %p158 = pneg %p157
      // Predicated region
      $region9: #{tpu_custom_call.1} parent=5 // pred_check
        _
      $region10: #{tpu_custom_call.1} parent=5 // pred_check_branch
        %160 = sbr.rel (%p157) target = $region12
      $region11: #{tpu_custom_call.1} parent=5 // pred_region
        %s161 = ssub.s32 %s16, 1
        // Predicated region
        $region13: #{tpu_custom_call.1} parent=11 // pred_check
          %p162 = pneg %p77
        $region14: #{tpu_custom_call.1} parent=11 // pred_check_branch
          %164 = sbr.rel (%p162) target = $region16
        $region15: #{tpu_custom_call.1} parent=11 // pred_region
          _
        $region16: #{tpu_custom_call.1} parent=11 // pred_fallthru
          _
        // Predicated region
        $region17: #{tpu_custom_call.1} parent=11 // pred_check
          %p165 = pneg %p98
        $region18: #{tpu_custom_call.1} parent=11 // pred_check_branch
          %167 = sbr.rel (%p165) target = $region20
        $region19: #{tpu_custom_call.1} parent=11 // pred_region
          _
        $region20: #{tpu_custom_call.1} parent=11 // pred_fallthru
          _
        // Predicated region
        $region21: #{tpu_custom_call.1} parent=11 // pred_check
          %p168 = pneg %p119
        $region22: #{tpu_custom_call.1} parent=11 // pred_check_branch
          %170 = sbr.rel (%p168) target = $region24
        $region23: #{tpu_custom_call.1} parent=11 // pred_region
          _
        $region24: #{tpu_custom_call.1} parent=11 // pred_fallthru
          _
      $region12: #{tpu_custom_call.1} parent=5 // pred_fallthru
        _
      %p171 = scmp.lt.s32.totalorder %s16, 12
      // Predicated region
      $region25: #{tpu_custom_call.1} parent=5 // pred_check
        %p172 = pneg %p171
      $region26: #{tpu_custom_call.1} parent=5 // pred_check_branch
        %174 = sbr.rel (%p172) target = $region28
      $region27: #{tpu_custom_call.1} parent=5 // pred_region
        // Predicated region
        $region29: #{tpu_custom_call.1} parent=27 // pred_check
          %p175 = pneg %p50
        $region30: #{tpu_custom_call.1} parent=27 // pred_check_branch
          %177 = sbr.rel (%p175) target = $region32
        $region31: #{tpu_custom_call.1} parent=27 // pred_region
          %s178 = sand.u32 %s40, 1
          %s179 = scalar_lea.sflag [#allocation6], %s178
          %s180 = sand.u32 %s40, 1
          %s181 = smul.addr %s180, 128
          %s182 = scalar_lea.vmem [#allocation5], %s181
          %s184 = ssub.s32 2048, 2048
          %185 = vsyncadd %s179, %s184
          %s186 = smul.addr %s23, 32
          %s187 = sadd.s32 %s24, %s186
          %s188 = smul.addr %s187, 128
          %s189 = scalar_lea.hbm %s0, %s188
          %s190 = sshll.u32 %s182, 4
          %s191 = int_to_ptr.vmem [resolvable:$true] %s190
          %196 = dma.hbm_to_vmem [thread:$0]  %s189, 2048, %s191, %s179, 256, 128, 8
        $region32: #{tpu_custom_call.1} parent=27 // pred_fallthru
          _
      $region28: #{tpu_custom_call.1} parent=5 // pred_fallthru
        _
      %p197 = scmp.le.s32.totalorder 1, %s16
      %p198 = scmp.lt.s32.totalorder %s16, 13
      %p199 = pnand %p197, %p198
      %p200 = pneg %p199
      // Predicated region
      $region33: #{tpu_custom_call.1} parent=5 // pred_check
        _
      $region34: #{tpu_custom_call.1} parent=5 // pred_check_branch
        %202 = sbr.rel (%p199) target = $region36
      $region35: #{tpu_custom_call.1} parent=5 // pred_region
        %s203 = ssub.s32 %s16, 1
        %s204 = sand.u32 %s43, 1
        %s205 = scalar_lea.sflag [#allocation6], %s204
        %s206 = sand.u32 %s43, 1
        %s207 = smul.addr %s206, 128
        %s208 = scalar_lea.vmem [#allocation5], %s207
        // Predicated region
        $region37: #{tpu_custom_call.1} parent=35 // pred_check
          %p209 = pneg %p56
        $region38: #{tpu_custom_call.1} parent=35 // pred_check_branch
          %211 = sbr.rel (%p209) target = $region40
        $region39: #{tpu_custom_call.1} parent=35 // pred_region
          %212 = dma.done %s205, 2048
        $region40: #{tpu_custom_call.1} parent=35 // pred_fallthru
          _
        %s213 = sand.u32 %s43, 1
        %s214 = scalar_lea.sflag [#allocation6], %s213
        %s215 = sand.u32 %s43, 1
        %s216 = smul.addr %s215, 128
        %s217 = scalar_lea.vmem [#allocation5], %s216
        %p218 = pneg %p56
        %p219 = pneg %p53
        %p220 = pneg %p77
        %p221 = pneg %p74
        %p222 = pneg %p98
        %p223 = pneg %p95
        %p224 = pneg %p119
        %p225 = pneg %p116
        %p226 = pneg %p147
        %p227 = pneg %p144
        %s228 = sand.u32 %s134, 1
        %s229 = scalar_lea.sflag [#allocation7], %s228
        %s230 = sand.u32 %s134, 1
        %s231 = smul.addr %s230, 128
        %s232 = scalar_lea.vmem [#allocation8], %s231
        %s233 = smul.u32 16, %s26
        %v234 = vld [vmem:[%s208] sm:$0xff]
        %v235 = vld [vmem:[%s208 + $0x8] sm:$0xff]
        %v236 = vld [vmem:[%s208 + $0x10] sm:$0xff]
        %v237 = vld [vmem:[%s208 + $0x18] sm:$0xff]
        %v238 = vld [vmem:[%s208 + $0x20] sm:$0xff]
        %v239 = vld [vmem:[%s208 + $0x28] sm:$0xff]
        %v240 = vld [vmem:[%s208 + $0x30] sm:$0xff]
        %v241 = vld [vmem:[%s208 + $0x38] sm:$0xff]
        %v242 = vld [vmem:[%s208 + $0x40] sm:$0xff]
        %v243 = vld [vmem:[%s208 + $0x48] sm:$0xff]
        %v244 = vld [vmem:[%s208 + $0x50] sm:$0xff]
        %v245 = vld [vmem:[%s208 + $0x58] sm:$0xff]
        %v246 = vld [vmem:[%s208 + $0x60] sm:$0xff]
        %v247 = vld [vmem:[%s208 + $0x68] sm:$0xff]
        %v248 = vld [vmem:[%s208 + $0x70] sm:$0xff]
        %v249 = vld [vmem:[%s208 + $0x78] sm:$0xff]
        %250 = vxpose.xlu0.b32.start [1/16] %v234, 128
        %251 = vxpose.xlu0.b32.cont [2/16] %v235, 128
        %252 = vxpose.xlu0.b32.cont [3/16] %v236, 128
        %253 = vxpose.xlu0.b32.cont [4/16] %v237, 128
        %254 = vxpose.xlu0.b32.cont [5/16] %v238, 128
        %255 = vxpose.xlu0.b32.cont [6/16] %v239, 128
        %256 = vxpose.xlu0.b32.cont [7/16] %v240, 128
        %257 = vxpose.xlu0.b32.cont [8/16] %v241, 128
        %258 = vxpose.xlu0.b32.cont [9/16] %v242, 128
        %259 = vxpose.xlu0.b32.cont [10/16] %v243, 128
        %260 = vxpose.xlu0.b32.cont [11/16] %v244, 128
        %261 = vxpose.xlu0.b32.cont [12/16] %v245, 128
        %262 = vxpose.xlu0.b32.cont [13/16] %v246, 128
        %263 = vxpose.xlu0.b32.cont [14/16] %v247, 128
        %264 = vxpose.xlu0.b32.cont [15/16] %v248, 128
        %265 = vxpose.xlu0.b32.end [16/16] %v249, 128
        %v266 = vpop.trf.xlu0
        %v267 = vpop.trf.xlu0
        %v268 = vpop.trf.xlu0
        %v269 = vpop.trf.xlu0
        %v270 = vpop.trf.xlu0
        %v271 = vpop.trf.xlu0
        %v272 = vpop.trf.xlu0
        %v273 = vpop.trf.xlu0
        %v274 = vpop.trf.xlu0
        %v275 = vpop.trf.xlu0
        %v276 = vpop.trf.xlu0
        %v277 = vpop.trf.xlu0
        %v278 = vpop.trf.xlu0
        %v279 = vpop.trf.xlu0
        %v280 = vpop.trf.xlu0
        %v281 = vpop.trf.xlu0
        %282 = vst [vmem:[#allocation2] sm:$0xff] %v266
        %283 = vst [vmem:[#allocation2 + $0x8] sm:$0xff] %v267
        %284 = vst [vmem:[#allocation2 + $0x10] sm:$0xff] %v268
        %285 = vst [vmem:[#allocation2 + $0x18] sm:$0xff] %v269
        %286 = vst [vmem:[#allocation2 + $0x20] sm:$0xff] %v270
        %287 = vst [vmem:[#allocation2 + $0x28] sm:$0xff] %v271
        %288 = vst [vmem:[#allocation2 + $0x30] sm:$0xff] %v272
        %289 = vst [vmem:[#allocation2 + $0x38] sm:$0xff] %v273
        %290 = vst [vmem:[#allocation2 + $0x40] sm:$0xff] %v274
        %291 = vst [vmem:[#allocation2 + $0x48] sm:$0xff] %v275
        %292 = vst [vmem:[#allocation2 + $0x50] sm:$0xff] %v276
        %293 = vst [vmem:[#allocation2 + $0x58] sm:$0xff] %v277
        %294 = vst [vmem:[#allocation2 + $0x60] sm:$0xff] %v278
        %295 = vst [vmem:[#allocation2 + $0x68] sm:$0xff] %v279
        %296 = vst [vmem:[#allocation2 + $0x70] sm:$0xff] %v280
        %297 = vst [vmem:[#allocation2 + $0x78] sm:$0xff] %v281
        %p298 = scmp.eq.s32.totalorder %s26, 0
        // Predicated region
        $region41: #{tpu_custom_call.1} parent=35 // pred_check
          %p299 = pneg %p298
        $region42: #{tpu_custom_call.1} parent=35 // pred_check_branch
          %301 = sbr.rel (%p299) target = $region44
        $region43: #{tpu_custom_call.1} parent=35 // pred_region
          %v302 = vld [vmem:[#allocation2] sm:$0x1]
          %303 = vst [vmem:[#allocation4] sm:$0x1] %v302
        $region44: #{tpu_custom_call.1} parent=35 // pred_fallthru
          _
        %v304 = vld [vmem:[#allocation4] sm:$0x1]
        %v305 = vmul.f32 %v304, 0.9961014
        %v306 = vld [vmem:[#allocation2] sm:$0x1]
        %v307 = vmul.f32 %v306, 0.003898628
        %v308 = vadd.f32 %v305, %v307
        %309 = vst [vmem:[#allocation3] sm:$0x1] %v308
        %v310 = vmul.f32 %v308, 0.9961014
        %v311 = vld [vmem:[#allocation2 + $0x1] sm:$0x1]
        %v312 = vmul.f32 %v311, 0.003898628
        %v313 = vadd.f32 %v310, %v312
        %314 = vst [vmem:[#allocation3 + $0x1] sm:$0x1] %v313
        %v315 = vmul.f32 %v313, 0.9961014
        %v316 = vld [vmem:[#allocation2 + $0x2] sm:$0x1]
        %v317 = vmul.f32 %v316, 0.003898628
        %v318 = vadd.f32 %v315, %v317
        %319 = vst [vmem:[#allocation3 + $0x2] sm:$0x1] %v318
        %v320 = vmul.f32 %v318, 0.9961014
        %v321 = vld [vmem:[#allocation2 + $0x3] sm:$0x1]
        %v322 = vmul.f32 %v321, 0.003898628
        %v323 = vadd.f32 %v320, %v322
        %324 = vst [vmem:[#allocation3 + $0x3] sm:$0x1] %v323
        %v325 = vmul.f32 %v323, 0.9961014
        %v326 = vld [vmem:[#allocation2 + $0x4] sm:$0x1]
        %v327 = vmul.f32 %v326, 0.003898628
        %v328 = vadd.f32 %v325, %v327
        %329 = vst [vmem:[#allocation3 + $0x4] sm:$0x1] %v328
        %v330 = vmul.f32 %v328, 0.9961014
        %v331 = vld [vmem:[#allocation2 + $0x5] sm:$0x1]
        %v332 = vmul.f32 %v331, 0.003898628
        %v333 = vadd.f32 %v330, %v332
        %334 = vst [vmem:[#allocation3 + $0x5] sm:$0x1] %v333
        %v335 = vmul.f32 %v333, 0.9961014
        %v336 = vld [vmem:[#allocation2 + $0x6] sm:$0x1]
        %v337 = vmul.f32 %v336, 0.003898628
        %v338 = vadd.f32 %v335, %v337
        %339 = vst [vmem:[#allocation3 + $0x6] sm:$0x1] %v338
        %v340 = vmul.f32 %v338, 0.9961014
        %v341 = vld [vmem:[#allocation2 + $0x7] sm:$0x1]
        %v342 = vmul.f32 %v341, 0.003898628
        %v343 = vadd.f32 %v340, %v342
        %344 = vst [vmem:[#allocation3 + $0x7] sm:$0x1] %v343
        %v345 = vmul.f32 %v343, 0.9961014
        %v346 = vld [vmem:[#allocation2 + $0x8] sm:$0x1]
        %v347 = vmul.f32 %v346, 0.003898628
        %v348 = vadd.f32 %v345, %v347
        %349 = vst [vmem:[#allocation3 + $0x8] sm:$0x1] %v348
        %v350 = vmul.f32 %v348, 0.9961014
        %v351 = vld [vmem:[#allocation2 + $0x9] sm:$0x1]
        %v352 = vmul.f32 %v351, 0.003898628
        %v353 = vadd.f32 %v350, %v352
        %354 = vst [vmem:[#allocation3 + $0x9] sm:$0x1] %v353
        %v355 = vmul.f32 %v353, 0.9961014
        %v356 = vld [vmem:[#allocation2 + $0xa] sm:$0x1]
        %v357 = vmul.f32 %v356, 0.003898628
        %v358 = vadd.f32 %v355, %v357
        %359 = vst [vmem:[#allocation3 + $0xa] sm:$0x1] %v358
        %v360 = vmul.f32 %v358, 0.9961014
        %v361 = vld [vmem:[#allocation2 + $0xb] sm:$0x1]
        %v362 = vmul.f32 %v361, 0.003898628
        %v363 = vadd.f32 %v360, %v362
        %364 = vst [vmem:[#allocation3 + $0xb] sm:$0x1] %v363
        %v365 = vmul.f32 %v363, 0.9961014
        %v366 = vld [vmem:[#allocation2 + $0xc] sm:$0x1]
        %v367 = vmul.f32 %v366, 0.003898628
        %v368 = vadd.f32 %v365, %v367
        %369 = vst [vmem:[#allocation3 + $0xc] sm:$0x1] %v368
        %v370 = vmul.f32 %v368, 0.9961014
        %v371 = vld [vmem:[#allocation2 + $0xd] sm:$0x1]
        %v372 = vmul.f32 %v371, 0.003898628
        %v373 = vadd.f32 %v370, %v372
        %374 = vst [vmem:[#allocation3 + $0xd] sm:$0x1] %v373
        %v375 = vmul.f32 %v373, 0.9961014
        %v376 = vld [vmem:[#allocation2 + $0xe] sm:$0x1]
        %v377 = vmul.f32 %v376, 0.003898628
        %v378 = vadd.f32 %v375, %v377
        %379 = vst [vmem:[#allocation3 + $0xe] sm:$0x1] %v378
        %v380 = vmul.f32 %v378, 0.9961014
        %v381 = vld [vmem:[#allocation2 + $0xf] sm:$0x1]
        %v382 = vmul.f32 %v381, 0.003898628
        %v383 = vadd.f32 %v380, %v382
        %384 = vst [vmem:[#allocation3 + $0xf] sm:$0x1] %v383
        %v385 = vmul.f32 %v383, 0.9961014
        %v386 = vld [vmem:[#allocation2 + $0x10] sm:$0x1]
        %v387 = vmul.f32 %v386, 0.003898628
        %v388 = vadd.f32 %v385, %v387
        %389 = vst [vmem:[#allocation3 + $0x10] sm:$0x1] %v388
        %v390 = vmul.f32 %v388, 0.9961014
        %v391 = vld [vmem:[#allocation2 + $0x11] sm:$0x1]
        %v392 = vmul.f32 %v391, 0.003898628
        %v393 = vadd.f32 %v390, %v392
        %394 = vst [vmem:[#allocation3 + $0x11] sm:$0x1] %v393
        %v395 = vmul.f32 %v393, 0.9961014
        %v396 = vld [vmem:[#allocation2 + $0x12] sm:$0x1]
        %v397 = vmul.f32 %v396, 0.003898628
        %v398 = vadd.f32 %v395, %v397
        %399 = vst [vmem:[#allocation3 + $0x12] sm:$0x1] %v398
        %v400 = vmul.f32 %v398, 0.9961014
        %v401 = vld [vmem:[#allocation2 + $0x13] sm:$0x1]
        %v402 = vmul.f32 %v401, 0.003898628
        %v403 = vadd.f32 %v400, %v402
        %404 = vst [vmem:[#allocation3 + $0x13] sm:$0x1] %v403
        %v405 = vmul.f32 %v403, 0.9961014
        %v406 = vld [vmem:[#allocation2 + $0x14] sm:$0x1]
        %v407 = vmul.f32 %v406, 0.003898628
        %v408 = vadd.f32 %v405, %v407
        %409 = vst [vmem:[#allocation3 + $0x14] sm:$0x1] %v408
        %v410 = vmul.f32 %v408, 0.9961014
        %v411 = vld [vmem:[#allocation2 + $0x15] sm:$0x1]
        %v412 = vmul.f32 %v411, 0.003898628
        %v413 = vadd.f32 %v410, %v412
        %414 = vst [vmem:[#allocation3 + $0x15] sm:$0x1] %v413
        %v415 = vmul.f32 %v413, 0.9961014
        %v416 = vld [vmem:[#allocation2 + $0x16] sm:$0x1]
        %v417 = vmul.f32 %v416, 0.003898628
        %v418 = vadd.f32 %v415, %v417
        %419 = vst [vmem:[#allocation3 + $0x16] sm:$0x1] %v418
        %v420 = vmul.f32 %v418, 0.9961014
        %v421 = vld [vmem:[#allocation2 + $0x17] sm:$0x1]
        %v422 = vmul.f32 %v421, 0.003898628
        %v423 = vadd.f32 %v420, %v422
        %424 = vst [vmem:[#allocation3 + $0x17] sm:$0x1] %v423
        %v425 = vmul.f32 %v423, 0.9961014
        %v426 = vld [vmem:[#allocation2 + $0x18] sm:$0x1]
        %v427 = vmul.f32 %v426, 0.003898628
        %v428 = vadd.f32 %v425, %v427
        %429 = vst [vmem:[#allocation3 + $0x18] sm:$0x1] %v428
        %v430 = vmul.f32 %v428, 0.9961014
        %v431 = vld [vmem:[#allocation2 + $0x19] sm:$0x1]
        %v432 = vmul.f32 %v431, 0.003898628
        %v433 = vadd.f32 %v430, %v432
        %434 = vst [vmem:[#allocation3 + $0x19] sm:$0x1] %v433
        %v435 = vmul.f32 %v433, 0.9961014
        %v436 = vld [vmem:[#allocation2 + $0x1a] sm:$0x1]
        %v437 = vmul.f32 %v436, 0.003898628
        %v438 = vadd.f32 %v435, %v437
        %439 = vst [vmem:[#allocation3 + $0x1a] sm:$0x1] %v438
        %v440 = vmul.f32 %v438, 0.9961014
        %v441 = vld [vmem:[#allocation2 + $0x1b] sm:$0x1]
        %v442 = vmul.f32 %v441, 0.003898628
        %v443 = vadd.f32 %v440, %v442
        %444 = vst [vmem:[#allocation3 + $0x1b] sm:$0x1] %v443
        %v445 = vmul.f32 %v443, 0.9961014
        %v446 = vld [vmem:[#allocation2 + $0x1c] sm:$0x1]
        %v447 = vmul.f32 %v446, 0.003898628
        %v448 = vadd.f32 %v445, %v447
        %449 = vst [vmem:[#allocation3 + $0x1c] sm:$0x1] %v448
        %v450 = vmul.f32 %v448, 0.9961014
        %v451 = vld [vmem:[#allocation2 + $0x1d] sm:$0x1]
        %v452 = vmul.f32 %v451, 0.003898628
        %v453 = vadd.f32 %v450, %v452
        %454 = vst [vmem:[#allocation3 + $0x1d] sm:$0x1] %v453
        %v455 = vmul.f32 %v453, 0.9961014
        %v456 = vld [vmem:[#allocation2 + $0x1e] sm:$0x1]
        %v457 = vmul.f32 %v456, 0.003898628
        %v458 = vadd.f32 %v455, %v457
        %459 = vst [vmem:[#allocation3 + $0x1e] sm:$0x1] %v458
        %v460 = vmul.f32 %v458, 0.9961014
        %v461 = vld [vmem:[#allocation2 + $0x1f] sm:$0x1]
        %v462 = vmul.f32 %v461, 0.003898628
        %v463 = vadd.f32 %v460, %v462
        %464 = vst [vmem:[#allocation3 + $0x1f] sm:$0x1] %v463
        %v465 = vmul.f32 %v463, 0.9961014
        %v466 = vld [vmem:[#allocation2 + $0x20] sm:$0x1]
        %v467 = vmul.f32 %v466, 0.003898628
        %v468 = vadd.f32 %v465, %v467
        %469 = vst [vmem:[#allocation3 + $0x20] sm:$0x1] %v468
        %v470 = vmul.f32 %v468, 0.9961014
        %v471 = vld [vmem:[#allocation2 + $0x21] sm:$0x1]
        %v472 = vmul.f32 %v471, 0.003898628
        %v473 = vadd.f32 %v470, %v472
        %474 = vst [vmem:[#allocation3 + $0x21] sm:$0x1] %v473
        %v475 = vmul.f32 %v473, 0.9961014
        %v476 = vld [vmem:[#allocation2 + $0x22] sm:$0x1]
        %v477 = vmul.f32 %v476, 0.003898628
        %v478 = vadd.f32 %v475, %v477
        %479 = vst [vmem:[#allocation3 + $0x22] sm:$0x1] %v478
        %v480 = vmul.f32 %v478, 0.9961014
        %v481 = vld [vmem:[#allocation2 + $0x23] sm:$0x1]
        %v482 = vmul.f32 %v481, 0.003898628
        %v483 = vadd.f32 %v480, %v482
        %484 = vst [vmem:[#allocation3 + $0x23] sm:$0x1] %v483
        %v485 = vmul.f32 %v483, 0.9961014
        %v486 = vld [vmem:[#allocation2 + $0x24] sm:$0x1]
        %v487 = vmul.f32 %v486, 0.003898628
        %v488 = vadd.f32 %v485, %v487
        %489 = vst [vmem:[#allocation3 + $0x24] sm:$0x1] %v488
        %v490 = vmul.f32 %v488, 0.9961014
        %v491 = vld [vmem:[#allocation2 + $0x25] sm:$0x1]
        %v492 = vmul.f32 %v491, 0.003898628
        %v493 = vadd.f32 %v490, %v492
        %494 = vst [vmem:[#allocation3 + $0x25] sm:$0x1] %v493
        %v495 = vmul.f32 %v493, 0.9961014
        %v496 = vld [vmem:[#allocation2 + $0x26] sm:$0x1]
        %v497 = vmul.f32 %v496, 0.003898628
        %v498 = vadd.f32 %v495, %v497
        %499 = vst [vmem:[#allocation3 + $0x26] sm:$0x1] %v498
        %v500 = vmul.f32 %v498, 0.9961014
        %v501 = vld [vmem:[#allocation2 + $0x27] sm:$0x1]
        %v502 = vmul.f32 %v501, 0.003898628
        %v503 = vadd.f32 %v500, %v502
        %504 = vst [vmem:[#allocation3 + $0x27] sm:$0x1] %v503
        %v505 = vmul.f32 %v503, 0.9961014
        %v506 = vld [vmem:[#allocation2 + $0x28] sm:$0x1]
        %v507 = vmul.f32 %v506, 0.003898628
        %v508 = vadd.f32 %v505, %v507
        %509 = vst [vmem:[#allocation3 + $0x28] sm:$0x1] %v508
        %v510 = vmul.f32 %v508, 0.9961014
        %v511 = vld [vmem:[#allocation2 + $0x29] sm:$0x1]
        %v512 = vmul.f32 %v511, 0.003898628
        %v513 = vadd.f32 %v510, %v512
        %514 = vst [vmem:[#allocation3 + $0x29] sm:$0x1] %v513
        %v515 = vmul.f32 %v513, 0.9961014
        %v516 = vld [vmem:[#allocation2 + $0x2a] sm:$0x1]
        %v517 = vmul.f32 %v516, 0.003898628
        %v518 = vadd.f32 %v515, %v517
        %519 = vst [vmem:[#allocation3 + $0x2a] sm:$0x1] %v518
        %v520 = vmul.f32 %v518, 0.9961014
        %v521 = vld [vmem:[#allocation2 + $0x2b] sm:$0x1]
        %v522 = vmul.f32 %v521, 0.003898628
        %v523 = vadd.f32 %v520, %v522
        %524 = vst [vmem:[#allocation3 + $0x2b] sm:$0x1] %v523
        %v525 = vmul.f32 %v523, 0.9961014
        %v526 = vld [vmem:[#allocation2 + $0x2c] sm:$0x1]
        %v527 = vmul.f32 %v526, 0.003898628
        %v528 = vadd.f32 %v525, %v527
        %529 = vst [vmem:[#allocation3 + $0x2c] sm:$0x1] %v528
        %v530 = vmul.f32 %v528, 0.9961014
        %v531 = vld [vmem:[#allocation2 + $0x2d] sm:$0x1]
        %v532 = vmul.f32 %v531, 0.003898628
        %v533 = vadd.f32 %v530, %v532
        %534 = vst [vmem:[#allocation3 + $0x2d] sm:$0x1] %v533
        %v535 = vmul.f32 %v533, 0.9961014
        %v536 = vld [vmem:[#allocation2 + $0x2e] sm:$0x1]
        %v537 = vmul.f32 %v536, 0.003898628
        %v538 = vadd.f32 %v535, %v537
        %539 = vst [vmem:[#allocation3 + $0x2e] sm:$0x1] %v538
        %v540 = vmul.f32 %v538, 0.9961014
        %v541 = vld [vmem:[#allocation2 + $0x2f] sm:$0x1]
        %v542 = vmul.f32 %v541, 0.003898628
        %v543 = vadd.f32 %v540, %v542
        %544 = vst [vmem:[#allocation3 + $0x2f] sm:$0x1] %v543
        %v545 = vmul.f32 %v543, 0.9961014
        %v546 = vld [vmem:[#allocation2 + $0x30] sm:$0x1]
        %v547 = vmul.f32 %v546, 0.003898628
        %v548 = vadd.f32 %v545, %v547
        %549 = vst [vmem:[#allocation3 + $0x30] sm:$0x1] %v548
        %v550 = vmul.f32 %v548, 0.9961014
        %v551 = vld [vmem:[#allocation2 + $0x31] sm:$0x1]
        %v552 = vmul.f32 %v551, 0.003898628
        %v553 = vadd.f32 %v550, %v552
        %554 = vst [vmem:[#allocation3 + $0x31] sm:$0x1] %v553
        %v555 = vmul.f32 %v553, 0.9961014
        %v556 = vld [vmem:[#allocation2 + $0x32] sm:$0x1]
        %v557 = vmul.f32 %v556, 0.003898628
        %v558 = vadd.f32 %v555, %v557
        %559 = vst [vmem:[#allocation3 + $0x32] sm:$0x1] %v558
        %v560 = vmul.f32 %v558, 0.9961014
        %v561 = vld [vmem:[#allocation2 + $0x33] sm:$0x1]
        %v562 = vmul.f32 %v561, 0.003898628
        %v563 = vadd.f32 %v560, %v562
        %564 = vst [vmem:[#allocation3 + $0x33] sm:$0x1] %v563
        %v565 = vmul.f32 %v563, 0.9961014
        %v566 = vld [vmem:[#allocation2 + $0x34] sm:$0x1]
        %v567 = vmul.f32 %v566, 0.003898628
        %v568 = vadd.f32 %v565, %v567
        %569 = vst [vmem:[#allocation3 + $0x34] sm:$0x1] %v568
        %v570 = vmul.f32 %v568, 0.9961014
        %v571 = vld [vmem:[#allocation2 + $0x35] sm:$0x1]
        %v572 = vmul.f32 %v571, 0.003898628
        %v573 = vadd.f32 %v570, %v572
        %574 = vst [vmem:[#allocation3 + $0x35] sm:$0x1] %v573
        %v575 = vmul.f32 %v573, 0.9961014
        %v576 = vld [vmem:[#allocation2 + $0x36] sm:$0x1]
        %v577 = vmul.f32 %v576, 0.003898628
        %v578 = vadd.f32 %v575, %v577
        %579 = vst [vmem:[#allocation3 + $0x36] sm:$0x1] %v578
        %v580 = vmul.f32 %v578, 0.9961014
        %v581 = vld [vmem:[#allocation2 + $0x37] sm:$0x1]
        %v582 = vmul.f32 %v581, 0.003898628
        %v583 = vadd.f32 %v580, %v582
        %584 = vst [vmem:[#allocation3 + $0x37] sm:$0x1] %v583
        %v585 = vmul.f32 %v583, 0.9961014
        %v586 = vld [vmem:[#allocation2 + $0x38] sm:$0x1]
        %v587 = vmul.f32 %v586, 0.003898628
        %v588 = vadd.f32 %v585, %v587
        %589 = vst [vmem:[#allocation3 + $0x38] sm:$0x1] %v588
        %v590 = vmul.f32 %v588, 0.9961014
        %v591 = vld [vmem:[#allocation2 + $0x39] sm:$0x1]
        %v592 = vmul.f32 %v591, 0.003898628
        %v593 = vadd.f32 %v590, %v592
        %594 = vst [vmem:[#allocation3 + $0x39] sm:$0x1] %v593
        %v595 = vmul.f32 %v593, 0.9961014
        %v596 = vld [vmem:[#allocation2 + $0x3a] sm:$0x1]
        %v597 = vmul.f32 %v596, 0.003898628
        %v598 = vadd.f32 %v595, %v597
        %599 = vst [vmem:[#allocation3 + $0x3a] sm:$0x1] %v598
        %v600 = vmul.f32 %v598, 0.9961014
        %v601 = vld [vmem:[#allocation2 + $0x3b] sm:$0x1]
        %v602 = vmul.f32 %v601, 0.003898628
        %v603 = vadd.f32 %v600, %v602
        %604 = vst [vmem:[#allocation3 + $0x3b] sm:$0x1] %v603
        %v605 = vmul.f32 %v603, 0.9961014
        %v606 = vld [vmem:[#allocation2 + $0x3c] sm:$0x1]
        %v607 = vmul.f32 %v606, 0.003898628
        %v608 = vadd.f32 %v605, %v607
        %609 = vst [vmem:[#allocation3 + $0x3c] sm:$0x1] %v608
        %v610 = vmul.f32 %v608, 0.9961014
        %v611 = vld [vmem:[#allocation2 + $0x3d] sm:$0x1]
        %v612 = vmul.f32 %v611, 0.003898628
        %v613 = vadd.f32 %v610, %v612
        %614 = vst [vmem:[#allocation3 + $0x3d] sm:$0x1] %v613
        %v615 = vmul.f32 %v613, 0.9961014
        %v616 = vld [vmem:[#allocation2 + $0x3e] sm:$0x1]
        %v617 = vmul.f32 %v616, 0.003898628
        %v618 = vadd.f32 %v615, %v617
        %619 = vst [vmem:[#allocation3 + $0x3e] sm:$0x1] %v618
        %v620 = vmul.f32 %v618, 0.9961014
        %v621 = vld [vmem:[#allocation2 + $0x3f] sm:$0x1]
        %v622 = vmul.f32 %v621, 0.003898628
        %v623 = vadd.f32 %v620, %v622
        %624 = vst [vmem:[#allocation3 + $0x3f] sm:$0x1] %v623
        %v625 = vmul.f32 %v623, 0.9961014
        %v626 = vld [vmem:[#allocation2 + $0x40] sm:$0x1]
        %v627 = vmul.f32 %v626, 0.003898628
        %v628 = vadd.f32 %v625, %v627
        %629 = vst [vmem:[#allocation3 + $0x40] sm:$0x1] %v628
        %v630 = vmul.f32 %v628, 0.9961014
        %v631 = vld [vmem:[#allocation2 + $0x41] sm:$0x1]
        %v632 = vmul.f32 %v631, 0.003898628
        %v633 = vadd.f32 %v630, %v632
        %634 = vst [vmem:[#allocation3 + $0x41] sm:$0x1] %v633
        %v635 = vmul.f32 %v633, 0.9961014
        %v636 = vld [vmem:[#allocation2 + $0x42] sm:$0x1]
        %v637 = vmul.f32 %v636, 0.003898628
        %v638 = vadd.f32 %v635, %v637
        %639 = vst [vmem:[#allocation3 + $0x42] sm:$0x1] %v638
        %v640 = vmul.f32 %v638, 0.9961014
        %v641 = vld [vmem:[#allocation2 + $0x43] sm:$0x1]
        %v642 = vmul.f32 %v641, 0.003898628
        %v643 = vadd.f32 %v640, %v642
        %644 = vst [vmem:[#allocation3 + $0x43] sm:$0x1] %v643
        %v645 = vmul.f32 %v643, 0.9961014
        %v646 = vld [vmem:[#allocation2 + $0x44] sm:$0x1]
        %v647 = vmul.f32 %v646, 0.003898628
        %v648 = vadd.f32 %v645, %v647
        %649 = vst [vmem:[#allocation3 + $0x44] sm:$0x1] %v648
        %v650 = vmul.f32 %v648, 0.9961014
        %v651 = vld [vmem:[#allocation2 + $0x45] sm:$0x1]
        %v652 = vmul.f32 %v651, 0.003898628
        %v653 = vadd.f32 %v650, %v652
        %654 = vst [vmem:[#allocation3 + $0x45] sm:$0x1] %v653
        %v655 = vmul.f32 %v653, 0.9961014
        %v656 = vld [vmem:[#allocation2 + $0x46] sm:$0x1]
        %v657 = vmul.f32 %v656, 0.003898628
        %v658 = vadd.f32 %v655, %v657
        %659 = vst [vmem:[#allocation3 + $0x46] sm:$0x1] %v658
        %v660 = vmul.f32 %v658, 0.9961014
        %v661 = vld [vmem:[#allocation2 + $0x47] sm:$0x1]
        %v662 = vmul.f32 %v661, 0.003898628
        %v663 = vadd.f32 %v660, %v662
        %664 = vst [vmem:[#allocation3 + $0x47] sm:$0x1] %v663
        %v665 = vmul.f32 %v663, 0.9961014
        %v666 = vld [vmem:[#allocation2 + $0x48] sm:$0x1]
        %v667 = vmul.f32 %v666, 0.003898628
        %v668 = vadd.f32 %v665, %v667
        %669 = vst [vmem:[#allocation3 + $0x48] sm:$0x1] %v668
        %v670 = vmul.f32 %v668, 0.9961014
        %v671 = vld [vmem:[#allocation2 + $0x49] sm:$0x1]
        %v672 = vmul.f32 %v671, 0.003898628
        %v673 = vadd.f32 %v670, %v672
        %674 = vst [vmem:[#allocation3 + $0x49] sm:$0x1] %v673
        %v675 = vmul.f32 %v673, 0.9961014
        %v676 = vld [vmem:[#allocation2 + $0x4a] sm:$0x1]
        %v677 = vmul.f32 %v676, 0.003898628
        %v678 = vadd.f32 %v675, %v677
        %679 = vst [vmem:[#allocation3 + $0x4a] sm:$0x1] %v678
        %v680 = vmul.f32 %v678, 0.9961014
        %v681 = vld [vmem:[#allocation2 + $0x4b] sm:$0x1]
        %v682 = vmul.f32 %v681, 0.003898628
        %v683 = vadd.f32 %v680, %v682
        %684 = vst [vmem:[#allocation3 + $0x4b] sm:$0x1] %v683
        %v685 = vmul.f32 %v683, 0.9961014
        %v686 = vld [vmem:[#allocation2 + $0x4c] sm:$0x1]
        %v687 = vmul.f32 %v686, 0.003898628
        %v688 = vadd.f32 %v685, %v687
        %689 = vst [vmem:[#allocation3 + $0x4c] sm:$0x1] %v688
        %v690 = vmul.f32 %v688, 0.9961014
        %v691 = vld [vmem:[#allocation2 + $0x4d] sm:$0x1]
        %v692 = vmul.f32 %v691, 0.003898628
        %v693 = vadd.f32 %v690, %v692
        %694 = vst [vmem:[#allocation3 + $0x4d] sm:$0x1] %v693
        %v695 = vmul.f32 %v693, 0.9961014
        %v696 = vld [vmem:[#allocation2 + $0x4e] sm:$0x1]
        %v697 = vmul.f32 %v696, 0.003898628
        %v698 = vadd.f32 %v695, %v697
        %699 = vst [vmem:[#allocation3 + $0x4e] sm:$0x1] %v698
        %v700 = vmul.f32 %v698, 0.9961014
        %v701 = vld [vmem:[#allocation2 + $0x4f] sm:$0x1]
        %v702 = vmul.f32 %v701, 0.003898628
        %v703 = vadd.f32 %v700, %v702
        %704 = vst [vmem:[#allocation3 + $0x4f] sm:$0x1] %v703
        %v705 = vmul.f32 %v703, 0.9961014
        %v706 = vld [vmem:[#allocation2 + $0x50] sm:$0x1]
        %v707 = vmul.f32 %v706, 0.003898628
        %v708 = vadd.f32 %v705, %v707
        %709 = vst [vmem:[#allocation3 + $0x50] sm:$0x1] %v708
        %v710 = vmul.f32 %v708, 0.9961014
        %v711 = vld [vmem:[#allocation2 + $0x51] sm:$0x1]
        %v712 = vmul.f32 %v711, 0.003898628
        %v713 = vadd.f32 %v710, %v712
        %714 = vst [vmem:[#allocation3 + $0x51] sm:$0x1] %v713
        %v715 = vmul.f32 %v713, 0.9961014
        %v716 = vld [vmem:[#allocation2 + $0x52] sm:$0x1]
        %v717 = vmul.f32 %v716, 0.003898628
        %v718 = vadd.f32 %v715, %v717
        %719 = vst [vmem:[#allocation3 + $0x52] sm:$0x1] %v718
        %v720 = vmul.f32 %v718, 0.9961014
        %v721 = vld [vmem:[#allocation2 + $0x53] sm:$0x1]
        %v722 = vmul.f32 %v721, 0.003898628
        %v723 = vadd.f32 %v720, %v722
        %724 = vst [vmem:[#allocation3 + $0x53] sm:$0x1] %v723
        %v725 = vmul.f32 %v723, 0.9961014
        %v726 = vld [vmem:[#allocation2 + $0x54] sm:$0x1]
        %v727 = vmul.f32 %v726, 0.003898628
        %v728 = vadd.f32 %v725, %v727
        %729 = vst [vmem:[#allocation3 + $0x54] sm:$0x1] %v728
        %v730 = vmul.f32 %v728, 0.9961014
        %v731 = vld [vmem:[#allocation2 + $0x55] sm:$0x1]
        %v732 = vmul.f32 %v731, 0.003898628
        %v733 = vadd.f32 %v730, %v732
        %734 = vst [vmem:[#allocation3 + $0x55] sm:$0x1] %v733
        %v735 = vmul.f32 %v733, 0.9961014
        %v736 = vld [vmem:[#allocation2 + $0x56] sm:$0x1]
        %v737 = vmul.f32 %v736, 0.003898628
        %v738 = vadd.f32 %v735, %v737
        %739 = vst [vmem:[#allocation3 + $0x56] sm:$0x1] %v738
        %v740 = vmul.f32 %v738, 0.9961014
        %v741 = vld [vmem:[#allocation2 + $0x57] sm:$0x1]
        %v742 = vmul.f32 %v741, 0.003898628
        %v743 = vadd.f32 %v740, %v742
        %744 = vst [vmem:[#allocation3 + $0x57] sm:$0x1] %v743
        %v745 = vmul.f32 %v743, 0.9961014
        %v746 = vld [vmem:[#allocation2 + $0x58] sm:$0x1]
        %v747 = vmul.f32 %v746, 0.003898628
        %v748 = vadd.f32 %v745, %v747
        %749 = vst [vmem:[#allocation3 + $0x58] sm:$0x1] %v748
        %v750 = vmul.f32 %v748, 0.9961014
        %v751 = vld [vmem:[#allocation2 + $0x59] sm:$0x1]
        %v752 = vmul.f32 %v751, 0.003898628
        %v753 = vadd.f32 %v750, %v752
        %754 = vst [vmem:[#allocation3 + $0x59] sm:$0x1] %v753
        %v755 = vmul.f32 %v753, 0.9961014
        %v756 = vld [vmem:[#allocation2 + $0x5a] sm:$0x1]
        %v757 = vmul.f32 %v756, 0.003898628
        %v758 = vadd.f32 %v755, %v757
        %759 = vst [vmem:[#allocation3 + $0x5a] sm:$0x1] %v758
        %v760 = vmul.f32 %v758, 0.9961014
        %v761 = vld [vmem:[#allocation2 + $0x5b] sm:$0x1]
        %v762 = vmul.f32 %v761, 0.003898628
        %v763 = vadd.f32 %v760, %v762
        %764 = vst [vmem:[#allocation3 + $0x5b] sm:$0x1] %v763
        %v765 = vmul.f32 %v763, 0.9961014
        %v766 = vld [vmem:[#allocation2 + $0x5c] sm:$0x1]
        %v767 = vmul.f32 %v766, 0.003898628
        %v768 = vadd.f32 %v765, %v767
        %769 = vst [vmem:[#allocation3 + $0x5c] sm:$0x1] %v768
        %v770 = vmul.f32 %v768, 0.9961014
        %v771 = vld [vmem:[#allocation2 + $0x5d] sm:$0x1]
        %v772 = vmul.f32 %v771, 0.003898628
        %v773 = vadd.f32 %v770, %v772
        %774 = vst [vmem:[#allocation3 + $0x5d] sm:$0x1] %v773
        %v775 = vmul.f32 %v773, 0.9961014
        %v776 = vld [vmem:[#allocation2 + $0x5e] sm:$0x1]
        %v777 = vmul.f32 %v776, 0.003898628
        %v778 = vadd.f32 %v775, %v777
        %779 = vst [vmem:[#allocation3 + $0x5e] sm:$0x1] %v778
        %v780 = vmul.f32 %v778, 0.9961014
        %v781 = vld [vmem:[#allocation2 + $0x5f] sm:$0x1]
        %v782 = vmul.f32 %v781, 0.003898628
        %v783 = vadd.f32 %v780, %v782
        %784 = vst [vmem:[#allocation3 + $0x5f] sm:$0x1] %v783
        %v785 = vmul.f32 %v783, 0.9961014
        %v786 = vld [vmem:[#allocation2 + $0x60] sm:$0x1]
        %v787 = vmul.f32 %v786, 0.003898628
        %v788 = vadd.f32 %v785, %v787
        %789 = vst [vmem:[#allocation3 + $0x60] sm:$0x1] %v788
        %v790 = vmul.f32 %v788, 0.9961014
        %v791 = vld [vmem:[#allocation2 + $0x61] sm:$0x1]
        %v792 = vmul.f32 %v791, 0.003898628
        %v793 = vadd.f32 %v790, %v792
        %794 = vst [vmem:[#allocation3 + $0x61] sm:$0x1] %v793
        %v795 = vmul.f32 %v793, 0.9961014
        %v796 = vld [vmem:[#allocation2 + $0x62] sm:$0x1]
        %v797 = vmul.f32 %v796, 0.003898628
        %v798 = vadd.f32 %v795, %v797
        %799 = vst [vmem:[#allocation3 + $0x62] sm:$0x1] %v798
        %v800 = vmul.f32 %v798, 0.9961014
        %v801 = vld [vmem:[#allocation2 + $0x63] sm:$0x1]
        %v802 = vmul.f32 %v801, 0.003898628
        %v803 = vadd.f32 %v800, %v802
        %804 = vst [vmem:[#allocation3 + $0x63] sm:$0x1] %v803
        %v805 = vmul.f32 %v803, 0.9961014
        %v806 = vld [vmem:[#allocation2 + $0x64] sm:$0x1]
        %v807 = vmul.f32 %v806, 0.003898628
        %v808 = vadd.f32 %v805, %v807
        %809 = vst [vmem:[#allocation3 + $0x64] sm:$0x1] %v808
        %v810 = vmul.f32 %v808, 0.9961014
        %v811 = vld [vmem:[#allocation2 + $0x65] sm:$0x1]
        %v812 = vmul.f32 %v811, 0.003898628
        %v813 = vadd.f32 %v810, %v812
        %814 = vst [vmem:[#allocation3 + $0x65] sm:$0x1] %v813
        %v815 = vmul.f32 %v813, 0.9961014
        %v816 = vld [vmem:[#allocation2 + $0x66] sm:$0x1]
        %v817 = vmul.f32 %v816, 0.003898628
        %v818 = vadd.f32 %v815, %v817
        %819 = vst [vmem:[#allocation3 + $0x66] sm:$0x1] %v818
        %v820 = vmul.f32 %v818, 0.9961014
        %v821 = vld [vmem:[#allocation2 + $0x67] sm:$0x1]
        %v822 = vmul.f32 %v821, 0.003898628
        %v823 = vadd.f32 %v820, %v822
        %824 = vst [vmem:[#allocation3 + $0x67] sm:$0x1] %v823
        %v825 = vmul.f32 %v823, 0.9961014
        %v826 = vld [vmem:[#allocation2 + $0x68] sm:$0x1]
        %v827 = vmul.f32 %v826, 0.003898628
        %v828 = vadd.f32 %v825, %v827
        %829 = vst [vmem:[#allocation3 + $0x68] sm:$0x1] %v828
        %v830 = vmul.f32 %v828, 0.9961014
        %v831 = vld [vmem:[#allocation2 + $0x69] sm:$0x1]
        %v832 = vmul.f32 %v831, 0.003898628
        %v833 = vadd.f32 %v830, %v832
        %834 = vst [vmem:[#allocation3 + $0x69] sm:$0x1] %v833
        %v835 = vmul.f32 %v833, 0.9961014
        %v836 = vld [vmem:[#allocation2 + $0x6a] sm:$0x1]
        %v837 = vmul.f32 %v836, 0.003898628
        %v838 = vadd.f32 %v835, %v837
        %839 = vst [vmem:[#allocation3 + $0x6a] sm:$0x1] %v838
        %v840 = vmul.f32 %v838, 0.9961014
        %v841 = vld [vmem:[#allocation2 + $0x6b] sm:$0x1]
        %v842 = vmul.f32 %v841, 0.003898628
        %v843 = vadd.f32 %v840, %v842
        %844 = vst [vmem:[#allocation3 + $0x6b] sm:$0x1] %v843
        %v845 = vmul.f32 %v843, 0.9961014
        %v846 = vld [vmem:[#allocation2 + $0x6c] sm:$0x1]
        %v847 = vmul.f32 %v846, 0.003898628
        %v848 = vadd.f32 %v845, %v847
        %849 = vst [vmem:[#allocation3 + $0x6c] sm:$0x1] %v848
        %v850 = vmul.f32 %v848, 0.9961014
        %v851 = vld [vmem:[#allocation2 + $0x6d] sm:$0x1]
        %v852 = vmul.f32 %v851, 0.003898628
        %v853 = vadd.f32 %v850, %v852
        %854 = vst [vmem:[#allocation3 + $0x6d] sm:$0x1] %v853
        %v855 = vmul.f32 %v853, 0.9961014
        %v856 = vld [vmem:[#allocation2 + $0x6e] sm:$0x1]
        %v857 = vmul.f32 %v856, 0.003898628
        %v858 = vadd.f32 %v855, %v857
        %859 = vst [vmem:[#allocation3 + $0x6e] sm:$0x1] %v858
        %v860 = vmul.f32 %v858, 0.9961014
        %v861 = vld [vmem:[#allocation2 + $0x6f] sm:$0x1]
        %v862 = vmul.f32 %v861, 0.003898628
        %v863 = vadd.f32 %v860, %v862
        %864 = vst [vmem:[#allocation3 + $0x6f] sm:$0x1] %v863
        %v865 = vmul.f32 %v863, 0.9961014
        %v866 = vld [vmem:[#allocation2 + $0x70] sm:$0x1]
        %v867 = vmul.f32 %v866, 0.003898628
        %v868 = vadd.f32 %v865, %v867
        %869 = vst [vmem:[#allocation3 + $0x70] sm:$0x1] %v868
        %v870 = vmul.f32 %v868, 0.9961014
        %v871 = vld [vmem:[#allocation2 + $0x71] sm:$0x1]
        %v872 = vmul.f32 %v871, 0.003898628
        %v873 = vadd.f32 %v870, %v872
        %874 = vst [vmem:[#allocation3 + $0x71] sm:$0x1] %v873
        %v875 = vmul.f32 %v873, 0.9961014
        %v876 = vld [vmem:[#allocation2 + $0x72] sm:$0x1]
        %v877 = vmul.f32 %v876, 0.003898628
        %v878 = vadd.f32 %v875, %v877
        %879 = vst [vmem:[#allocation3 + $0x72] sm:$0x1] %v878
        %v880 = vmul.f32 %v878, 0.9961014
        %v881 = vld [vmem:[#allocation2 + $0x73] sm:$0x1]
        %v882 = vmul.f32 %v881, 0.003898628
        %v883 = vadd.f32 %v880, %v882
        %884 = vst [vmem:[#allocation3 + $0x73] sm:$0x1] %v883
        %v885 = vmul.f32 %v883, 0.9961014
        %v886 = vld [vmem:[#allocation2 + $0x74] sm:$0x1]
        %v887 = vmul.f32 %v886, 0.003898628
        %v888 = vadd.f32 %v885, %v887
        %889 = vst [vmem:[#allocation3 + $0x74] sm:$0x1] %v888
        %v890 = vmul.f32 %v888, 0.9961014
        %v891 = vld [vmem:[#allocation2 + $0x75] sm:$0x1]
        %v892 = vmul.f32 %v891, 0.003898628
        %v893 = vadd.f32 %v890, %v892
        %894 = vst [vmem:[#allocation3 + $0x75] sm:$0x1] %v893
        %v895 = vmul.f32 %v893, 0.9961014
        %v896 = vld [vmem:[#allocation2 + $0x76] sm:$0x1]
        %v897 = vmul.f32 %v896, 0.003898628
        %v898 = vadd.f32 %v895, %v897
        %899 = vst [vmem:[#allocation3 + $0x76] sm:$0x1] %v898
        %v900 = vmul.f32 %v898, 0.9961014
        %v901 = vld [vmem:[#allocation2 + $0x77] sm:$0x1]
        %v902 = vmul.f32 %v901, 0.003898628
        %v903 = vadd.f32 %v900, %v902
        %904 = vst [vmem:[#allocation3 + $0x77] sm:$0x1] %v903
        %v905 = vmul.f32 %v903, 0.9961014
        %v906 = vld [vmem:[#allocation2 + $0x78] sm:$0x1]
        %v907 = vmul.f32 %v906, 0.003898628
        %v908 = vadd.f32 %v905, %v907
        %909 = vst [vmem:[#allocation3 + $0x78] sm:$0x1] %v908
        %v910 = vmul.f32 %v908, 0.9961014
        %v911 = vld [vmem:[#allocation2 + $0x79] sm:$0x1]
        %v912 = vmul.f32 %v911, 0.003898628
        %v913 = vadd.f32 %v910, %v912
        %914 = vst [vmem:[#allocation3 + $0x79] sm:$0x1] %v913
        %v915 = vmul.f32 %v913, 0.9961014
        %v916 = vld [vmem:[#allocation2 + $0x7a] sm:$0x1]
        %v917 = vmul.f32 %v916, 0.003898628
        %v918 = vadd.f32 %v915, %v917
        %919 = vst [vmem:[#allocation3 + $0x7a] sm:$0x1] %v918
        %v920 = vmul.f32 %v918, 0.9961014
        %v921 = vld [vmem:[#allocation2 + $0x7b] sm:$0x1]
        %v922 = vmul.f32 %v921, 0.003898628
        %v923 = vadd.f32 %v920, %v922
        %924 = vst [vmem:[#allocation3 + $0x7b] sm:$0x1] %v923
        %v925 = vmul.f32 %v923, 0.9961014
        %v926 = vld [vmem:[#allocation2 + $0x7c] sm:$0x1]
        %v927 = vmul.f32 %v926, 0.003898628
        %v928 = vadd.f32 %v925, %v927
        %929 = vst [vmem:[#allocation3 + $0x7c] sm:$0x1] %v928
        %v930 = vmul.f32 %v928, 0.9961014
        %v931 = vld [vmem:[#allocation2 + $0x7d] sm:$0x1]
        %v932 = vmul.f32 %v931, 0.003898628
        %v933 = vadd.f32 %v930, %v932
        %934 = vst [vmem:[#allocation3 + $0x7d] sm:$0x1] %v933
        %v935 = vmul.f32 %v933, 0.9961014
        %v936 = vld [vmem:[#allocation2 + $0x7e] sm:$0x1]
        %v937 = vmul.f32 %v936, 0.003898628
        %v938 = vadd.f32 %v935, %v937
        %939 = vst [vmem:[#allocation3 + $0x7e] sm:$0x1] %v938
        %v940 = vmul.f32 %v938, 0.9961014
        %v941 = vld [vmem:[#allocation2 + $0x7f] sm:$0x1]
        %v942 = vmul.f32 %v941, 0.003898628
        %v943 = vadd.f32 %v940, %v942
        %944 = vst [vmem:[#allocation3 + $0x7f] sm:$0x1] %v943
        %945 = vst [vmem:[#allocation4] sm:$0x1] %v943
        %v946 = vld [vmem:[%s1] sm:$0x1]
        %v947 = vmul.f32 %v946, 1.442695
        %v948 = vpow.pop %v947
        %v949 = vld [vmem:[%s2] sm:$0x1]
        %v950 = vmul.f32 %v949, 1.442695
        %v951 = vpow.pop %v950
        %v952 = vld [vmem:[%s3] sm:$0x1]
        %v953 = vmul.f32 %v952, 1.442695
        %v954 = vpow.pop %v953
        %v955 = vpow.f32 %v951, %v954
        %v956 = vld [vmem:[#allocation2] sm:$0xff]
        %v957 = vld [vmem:[#allocation2 + $0x8] sm:$0xff]
        %v958 = vld [vmem:[#allocation2 + $0x10] sm:$0xff]
        %v959 = vld [vmem:[#allocation2 + $0x18] sm:$0xff]
        %v960 = vld [vmem:[#allocation2 + $0x20] sm:$0xff]
        %v961 = vld [vmem:[#allocation2 + $0x28] sm:$0xff]
        %v962 = vld [vmem:[#allocation2 + $0x30] sm:$0xff]
        %v963 = vld [vmem:[#allocation2 + $0x38] sm:$0xff]
        %v964 = vld [vmem:[#allocation2 + $0x40] sm:$0xff]
        %v965 = vld [vmem:[#allocation2 + $0x48] sm:$0xff]
        %v966 = vld [vmem:[#allocation2 + $0x50] sm:$0xff]
        %v967 = vld [vmem:[#allocation2 + $0x58] sm:$0xff]
        %v968 = vld [vmem:[#allocation2 + $0x60] sm:$0xff]
        %v969 = vld [vmem:[#allocation2 + $0x68] sm:$0xff]
        %v970 = vld [vmem:[#allocation2 + $0x70] sm:$0xff]
        %v971 = vld [vmem:[#allocation2 + $0x78] sm:$0xff]
        %v972 = vld [vmem:[#allocation3] sm:$0xff]
        %v973 = vld [vmem:[#allocation3 + $0x8] sm:$0xff]
        %v974 = vld [vmem:[#allocation3 + $0x10] sm:$0xff]
        %v975 = vld [vmem:[#allocation3 + $0x18] sm:$0xff]
        %v976 = vld [vmem:[#allocation3 + $0x20] sm:$0xff]
        %v977 = vld [vmem:[#allocation3 + $0x28] sm:$0xff]
        %v978 = vld [vmem:[#allocation3 + $0x30] sm:$0xff]
        %v979 = vld [vmem:[#allocation3 + $0x38] sm:$0xff]
        %v980 = vld [vmem:[#allocation3 + $0x40] sm:$0xff]
        %v981 = vld [vmem:[#allocation3 + $0x48] sm:$0xff]
        %v982 = vld [vmem:[#allocation3 + $0x50] sm:$0xff]
        %v983 = vld [vmem:[#allocation3 + $0x58] sm:$0xff]
        %v984 = vld [vmem:[#allocation3 + $0x60] sm:$0xff]
        %v985 = vld [vmem:[#allocation3 + $0x68] sm:$0xff]
        %v986 = vld [vmem:[#allocation3 + $0x70] sm:$0xff]
        %v987 = vld [vmem:[#allocation3 + $0x78] sm:$0xff]
        %v988 = vsub.f32 0.0, %v948
        %v989 = vadd.f32 %v972, 1e-05
        %v990 = vadd.f32 %v973, 1e-05
        %v991 = vadd.f32 %v974, 1e-05
        %v992 = vadd.f32 %v975, 1e-05
        %v993 = vadd.f32 %v976, 1e-05
        %v994 = vadd.f32 %v977, 1e-05
        %v995 = vadd.f32 %v978, 1e-05
        %v996 = vadd.f32 %v979, 1e-05
        %v997 = vadd.f32 %v980, 1e-05
        %v998 = vadd.f32 %v981, 1e-05
        %v999 = vadd.f32 %v982, 1e-05
        %v1000 = vadd.f32 %v983, 1e-05
        %v1001 = vadd.f32 %v984, 1e-05
        %v1002 = vadd.f32 %v985, 1e-05
        %v1003 = vadd.f32 %v986, 1e-05
        %v1004 = vadd.f32 %v987, 1e-05
        %v1005 = vlog2.pop %v989
        %v1006 = vmul.f32 %v1005, 0.6931472
        %v1007 = vlog2.pop %v990
        %v1008 = vmul.f32 %v1007, 0.6931472
        %v1009 = vlog2.pop %v991
        %v1010 = vmul.f32 %v1009, 0.6931472
        %v1011 = vlog2.pop %v992
        %v1012 = vmul.f32 %v1011, 0.6931472
        %v1013 = vlog2.pop %v993
        %v1014 = vmul.f32 %v1013, 0.6931472
        %v1015 = vlog2.pop %v994
        %v1016 = vmul.f32 %v1015, 0.6931472
        %v1017 = vlog2.pop %v995
        %v1018 = vmul.f32 %v1017, 0.6931472
        %v1019 = vlog2.pop %v996
        %v1020 = vmul.f32 %v1019, 0.6931472
        %v1021 = vlog2.pop %v997
        %v1022 = vmul.f32 %v1021, 0.6931472
        %v1023 = vlog2.pop %v998
        %v1024 = vmul.f32 %v1023, 0.6931472
        %v1025 = vlog2.pop %v999
        %v1026 = vmul.f32 %v1025, 0.6931472
        %v1027 = vlog2.pop %v1000
        %v1028 = vmul.f32 %v1027, 0.6931472
        %v1029 = vlog2.pop %v1001
        %v1030 = vmul.f32 %v1029, 0.6931472
        %v1031 = vlog2.pop %v1002
        %v1032 = vmul.f32 %v1031, 0.6931472
        %v1033 = vlog2.pop %v1003
        %v1034 = vmul.f32 %v1033, 0.6931472
        %v1035 = vlog2.pop %v1004
        %v1036 = vmul.f32 %v1035, 0.6931472
        %v1038 = vlaneseq
        %v1039 = vshrl.u32 %v1038, 7
        %v1040 = vsub.s32 0, %v1039
        %v1041 = vrot.slane %v988, %v1040
        %v1043 = vmul.f32 %v1041, %v1006
        %v1044 = vmul.f32 %v1041, %v1008
        %v1045 = vmul.f32 %v1041, %v1010
        %v1046 = vmul.f32 %v1041, %v1012
        %v1047 = vmul.f32 %v1041, %v1014
        %v1048 = vmul.f32 %v1041, %v1016
        %v1049 = vmul.f32 %v1041, %v1018
        %v1050 = vmul.f32 %v1041, %v1020
        %v1051 = vmul.f32 %v1041, %v1022
        %v1052 = vmul.f32 %v1041, %v1024
        %v1053 = vmul.f32 %v1041, %v1026
        %v1054 = vmul.f32 %v1041, %v1028
        %v1055 = vmul.f32 %v1041, %v1030
        %v1056 = vmul.f32 %v1041, %v1032
        %v1057 = vmul.f32 %v1041, %v1034
        %v1058 = vmul.f32 %v1041, %v1036
        %v1059 = vmul.f32 %v1043, 1.442695
        %v1060 = vpow.pop %v1059
        %v1061 = vmul.f32 %v1044, 1.442695
        %v1062 = vpow.pop %v1061
        %v1063 = vmul.f32 %v1045, 1.442695
        %v1064 = vpow.pop %v1063
        %v1065 = vmul.f32 %v1046, 1.442695
        %v1066 = vpow.pop %v1065
        %v1067 = vmul.f32 %v1047, 1.442695
        %v1068 = vpow.pop %v1067
        %v1069 = vmul.f32 %v1048, 1.442695
        %v1070 = vpow.pop %v1069
        %v1071 = vmul.f32 %v1049, 1.442695
        %v1072 = vpow.pop %v1071
        %v1073 = vmul.f32 %v1050, 1.442695
        %v1074 = vpow.pop %v1073
        %v1075 = vmul.f32 %v1051, 1.442695
        %v1076 = vpow.pop %v1075
        %v1077 = vmul.f32 %v1052, 1.442695
        %v1078 = vpow.pop %v1077
        %v1079 = vmul.f32 %v1053, 1.442695
        %v1080 = vpow.pop %v1079
        %v1081 = vmul.f32 %v1054, 1.442695
        %v1082 = vpow.pop %v1081
        %v1083 = vmul.f32 %v1055, 1.442695
        %v1084 = vpow.pop %v1083
        %v1085 = vmul.f32 %v1056, 1.442695
        %v1086 = vpow.pop %v1085
        %v1087 = vmul.f32 %v1057, 1.442695
        %v1088 = vpow.pop %v1087
        %v1089 = vmul.f32 %v1058, 1.442695
        %v1090 = vpow.pop %v1089
        %v1091 = vmul.f32 %v956, %v1060
        %v1092 = vmul.f32 %v957, %v1062
        %v1093 = vmul.f32 %v958, %v1064
        %v1094 = vmul.f32 %v959, %v1066
        %v1095 = vmul.f32 %v960, %v1068
        %v1096 = vmul.f32 %v961, %v1070
        %v1097 = vmul.f32 %v962, %v1072
        %v1098 = vmul.f32 %v963, %v1074
        %v1099 = vmul.f32 %v964, %v1076
        %v1100 = vmul.f32 %v965, %v1078
        %v1101 = vmul.f32 %v966, %v1080
        %v1102 = vmul.f32 %v967, %v1082
        %v1103 = vmul.f32 %v968, %v1084
        %v1104 = vmul.f32 %v969, %v1086
        %v1105 = vmul.f32 %v970, %v1088
        %v1106 = vmul.f32 %v971, %v1090
        %v1108 = vlaneseq
        %v1109 = vshrl.u32 %v1108, 7
        %v1110 = vsub.s32 0, %v1109
        %v1111 = vrot.slane %v951, %v1110
        %v1113 = vadd.f32 %v1091, %v1111
        %v1114 = vadd.f32 %v1092, %v1111
        %v1115 = vadd.f32 %v1093, %v1111
        %v1116 = vadd.f32 %v1094, %v1111
        %v1117 = vadd.f32 %v1095, %v1111
        %v1118 = vadd.f32 %v1096, %v1111
        %v1119 = vadd.f32 %v1097, %v1111
        %v1120 = vadd.f32 %v1098, %v1111
        %v1121 = vadd.f32 %v1099, %v1111
        %v1122 = vadd.f32 %v1100, %v1111
        %v1123 = vadd.f32 %v1101, %v1111
        %v1124 = vadd.f32 %v1102, %v1111
        %v1125 = vadd.f32 %v1103, %v1111
        %v1126 = vadd.f32 %v1104, %v1111
        %v1127 = vadd.f32 %v1105, %v1111
        %v1128 = vadd.f32 %v1106, %v1111
        %v1130 = vlaneseq
        %v1131 = vshrl.u32 %v1130, 7
        %v1132 = vsub.s32 0, %v1131
        %v1133 = vrot.slane %v954, %v1132
        %v1135 = vpow.f32 %v1113, %v1133
        %v1136 = vpow.f32 %v1114, %v1133
        %v1137 = vpow.f32 %v1115, %v1133
        %v1138 = vpow.f32 %v1116, %v1133
        %v1139 = vpow.f32 %v1117, %v1133
        %v1140 = vpow.f32 %v1118, %v1133
        %v1141 = vpow.f32 %v1119, %v1133
        %v1142 = vpow.f32 %v1120, %v1133
        %v1143 = vpow.f32 %v1121, %v1133
        %v1144 = vpow.f32 %v1122, %v1133
        %v1145 = vpow.f32 %v1123, %v1133
        %v1146 = vpow.f32 %v1124, %v1133
        %v1147 = vpow.f32 %v1125, %v1133
        %v1148 = vpow.f32 %v1126, %v1133
        %v1149 = vpow.f32 %v1127, %v1133
        %v1150 = vpow.f32 %v1128, %v1133
        %v1152 = vlaneseq
        %v1153 = vshrl.u32 %v1152, 7
        %v1154 = vsub.s32 0, %v1153
        %v1155 = vrot.slane %v955, %v1154
        %v1157 = vsub.f32 %v1135, %v1155
        %v1158 = vsub.f32 %v1136, %v1155
        %v1159 = vsub.f32 %v1137, %v1155
        %v1160 = vsub.f32 %v1138, %v1155
        %v1161 = vsub.f32 %v1139, %v1155
        %v1162 = vsub.f32 %v1140, %v1155
        %v1163 = vsub.f32 %v1141, %v1155
        %v1164 = vsub.f32 %v1142, %v1155
        %v1165 = vsub.f32 %v1143, %v1155
        %v1166 = vsub.f32 %v1144, %v1155
        %v1167 = vsub.f32 %v1145, %v1155
        %v1168 = vsub.f32 %v1146, %v1155
        %v1169 = vsub.f32 %v1147, %v1155
        %v1170 = vsub.f32 %v1148, %v1155
        %v1171 = vsub.f32 %v1149, %v1155
        %v1172 = vsub.f32 %v1150, %v1155
        %1173 = vst [vmem:[%s232] sm:$0xff] %v1157
        %1174 = vst [vmem:[%s232 + $0x8] sm:$0xff] %v1158
        %1175 = vst [vmem:[%s232 + $0x10] sm:$0xff] %v1159
        %1176 = vst [vmem:[%s232 + $0x18] sm:$0xff] %v1160
        %1177 = vst [vmem:[%s232 + $0x20] sm:$0xff] %v1161
        %1178 = vst [vmem:[%s232 + $0x28] sm:$0xff] %v1162
        %1179 = vst [vmem:[%s232 + $0x30] sm:$0xff] %v1163
        %1180 = vst [vmem:[%s232 + $0x38] sm:$0xff] %v1164
        %1181 = vst [vmem:[%s232 + $0x40] sm:$0xff] %v1165
        %1182 = vst [vmem:[%s232 + $0x48] sm:$0xff] %v1166
        %1183 = vst [vmem:[%s232 + $0x50] sm:$0xff] %v1167
        %1184 = vst [vmem:[%s232 + $0x58] sm:$0xff] %v1168
        %1185 = vst [vmem:[%s232 + $0x60] sm:$0xff] %v1169
        %1186 = vst [vmem:[%s232 + $0x68] sm:$0xff] %v1170
        %1187 = vst [vmem:[%s232 + $0x70] sm:$0xff] %v1171
        %1188 = vst [vmem:[%s232 + $0x78] sm:$0xff] %v1172
        %s1189 = sand.u32 %s134, 1
        %s1190 = scalar_lea.sflag [#allocation7], %s1189
        %s1191 = sand.u32 %s134, 1
        %s1192 = smul.addr %s1191, 128
        %s1193 = scalar_lea.vmem [#allocation8], %s1192
        // Predicated region
        $region45: #{tpu_custom_call.1} parent=35 // pred_check
          %p1194 = pneg %p144
        $region46: #{tpu_custom_call.1} parent=35 // pred_check_branch
          %1196 = sbr.rel (%p1194) target = $region48
        $region47: #{tpu_custom_call.1} parent=35 // pred_region
          %s1197 = smul.u32 16, %s26
          %s1199 = ssub.s32 2048, 2048
          %1200 = vsyncadd %s1190, %s1199
          %s1201 = smul.addr %s25, 32
          %s1202 = sadd.s32 %s1197, %s1201
          %s1203 = smul.addr %s1202, 128
          %s1204 = scalar_lea.hbm %s4, %s1203
          %s1205 = sshll.u32 %s1193, 4
          %s1206 = int_to_ptr.vmem [resolvable:$true] %s1205
          %1211 = dma.vmem_to_hbm [thread:$0]  %s1206, 2048, %s1204, %s1190, 128, 128, 8
        $region48: #{tpu_custom_call.1} parent=35 // pred_fallthru
          _
      $region36: #{tpu_custom_call.1} parent=5 // pred_fallthru
        _
      %p1212 = scmp.le.s32.totalorder 2, %s16
      // Predicated region
      $region49: #{tpu_custom_call.1} parent=5 // pred_check
        %p1213 = pneg %p1212
      $region50: #{tpu_custom_call.1} parent=5 // pred_check_branch
        %1215 = sbr.rel (%p1213) target = $region52
      $region51: #{tpu_custom_call.1} parent=5 // pred_region
        %s1216 = ssub.s32 %s16, 2
        // Predicated region
        $region53: #{tpu_custom_call.1} parent=51 // pred_check
          %p1217 = pneg %p150
        $region54: #{tpu_custom_call.1} parent=51 // pred_check_branch
          %1219 = sbr.rel (%p1217) target = $region56
        $region55: #{tpu_custom_call.1} parent=51 // pred_region
          %s1220 = sand.u32 %s135, 1
          %s1221 = scalar_lea.sflag [#allocation7], %s1220
          %s1222 = sand.u32 %s135, 1
          %s1223 = smul.addr %s1222, 128
          %s1224 = scalar_lea.vmem [#allocation8], %s1223
          %1225 = dma.done %s1221, 2048
        $region56: #{tpu_custom_call.1} parent=51 // pred_fallthru
          _
      $region52: #{tpu_custom_call.1} parent=5 // pred_fallthru
        _
    $region6: #{tpu_custom_call.1} parent=1 // loop_footer
      %s20 = sadd.s32 1, %s16
    $region7: #{tpu_custom_call.1} parent=1 // loop_footer_branch
      %15 = sbr.rel target = $region3
    $region8: #{tpu_custom_call.1} parent=1 // loop_exit
      _
    %1226 = vsyncpa [#allocation6], 1
    %s1227 = scalar_lea.sflag [#allocation6], 1
    %1228 = vsyncpa %s1227, 1
    %1229 = vsyncpa [#allocation7], 1
    %s1230 = scalar_lea.sflag [#allocation7], 1
    %1231 = vsyncpa %s1230, 1

</llo_original>
